<compile_context>
chip_gen: v7x
topology: tpu7x:2x2x1
jax: 0.10.0
libtpu: 0.0.40
codegen_flags: <defaults>
</compile_context>

<pallas_src>
import functools

import jax
import jax.numpy as jnp
import numpy as np
from jax.experimental import pallas as pl
from jax.experimental.pallas import tpu as pltpu

EPS = 1e-5
LANE = 128


def _round_up(x, m):
    return (x + m - 1) // m * m


def _pick_tn(cp):
    for t in (512, 384, 256, 128):
        if cp % t == 0:
            return t
    return cp


def _vmem_limit_bytes(working_set_bytes):
    try:
        cap = int(pltpu.get_tpu_info().vmem_capacity_bytes)
    except Exception:
        cap = 64 * 1024 * 1024  # conservative default (v7x per-TC physical VMEM)
    want = int(working_set_bytes) + (4 << 20)
    return int(min(max(want, 32 << 20), int(cap * 0.9)))


def _phase_split(x_nhwc, kh, kw, sh, sw, ph, pw):
    """x (N,H,W,C) -> phase-split, spatially flattened input (S, N, Lq, C) plus
    per-tap (phase, flat-offset) pairs.  S = sh*sw.  For stride 1 this is just
    a pad + reshape (~1x input bytes); it never inflates data kh*kw-fold."""
    n, h, w, c = x_nhwc.shape
    xp = jnp.pad(x_nhwc, ((0, 0), (ph, ph), (pw, pw), (0, 0)))
    hp, wp = h + 2 * ph, w + 2 * pw
    ho = (hp - kh) // sh + 1
    wo = (wp - kw) // sw + 1
    hq = -(-hp // sh) + (1 if kw > 1 else 0)   # +1 row absorbs flat-window overrun
    wq = -(-wp // sw)
    phases = []
    for a in range(sh):
        for b in range(sw):
            p = xp[:, a::sh, b::sw, :]
            p = jnp.pad(p, ((0, 0), (0, hq - p.shape[1]),
                            (0, wq - p.shape[2]), (0, 0)))
            phases.append(p)
    xq = jnp.stack(phases, axis=0).reshape(sh * sw, n, hq * wq, c)
    taps = tuple(((i % sh) * sw + (j % sw), (i // sh) * wq + (j // sw))
                 for i in range(kh) for j in range(kw))
    return xq, taps, ho, wo, wq


def _conv_stats_kernel(x_ref, w_ref, mask_ref, y_ref, sum_ref, ssq_ref, *,
                       taps, l_out, depthwise):
    """Pass 1: conv (shifted matmuls / per-channel FMAs) + partial BN stats."""
    acc = None
    for k, (q, off) in enumerate(taps):
        xs = x_ref[q, pl.ds(off, l_out), :]
        if depthwise:
            t = xs.astype(jnp.float32) * w_ref[k:k + 1, :]          # VPU path
        else:
            t = jnp.dot(xs, w_ref[k], preferred_element_type=jnp.float32)  # MXU
        acc = t if acc is None else acc + t
    acc = acc * mask_ref[...]          # zero flat-layout junk columns (wo >= Wo)
    sum_ref[...] = jnp.sum(acc, axis=0, keepdims=True)
    ssq_ref[...] = jnp.sum(acc * acc, axis=0, keepdims=True)
    y_ref[...] = acc.astype(y_ref.dtype)


def _bn_prelu_kernel(y_ref, scale_ref, bias_ref, alpha_ref, o_ref):
    """Pass 2: y*scale + bias -> PReLU, bf16 in / bf16 out, f32 math."""
    z = y_ref[...].astype(jnp.float32) * scale_ref[...] + bias_ref[...]
    o_ref[...] = jnp.where(z > 0, z, alpha_ref[...] * z).astype(o_ref.dtype)


def _conv_bn_prelu(x, weight, gamma, beta, alpha, stride, padding, depthwise):
    """groups==1 dense conv (MXU) or depth-multiplier-1 depthwise conv (VPU),
    fused with training-mode BatchNorm + PReLU.  x: (N, C_in, H, W) NCHW."""
    n, c_in, h, w = x.shape
    c_out, _, kh, kw = weight.shape
    sh, sw = stride
    ph, pw = padding
    n_taps = kh * kw

    # TODO(synk): production graphs should stay NHWC end-to-end so this
    # transpose (and the final NCHW one) fold into neighbouring layers.
    x_nhwc = jnp.transpose(x, (0, 2, 3, 1)).astype(jnp.bfloat16)
    xq, taps, ho, wo, wq = _phase_split(x_nhwc, kh, kw, sh, sw, ph, pw)
    s_ph, _, lq, _ = xq.shape
    l_out = ho * wq

    if depthwise:
        cp = c_out                                    # channels stay on lanes
        tn = _pick_tn(cp) if cp % LANE == 0 else cp
        w_t = jnp.transpose(weight.reshape(c_out, n_taps), (1, 0)).astype(jnp.float32)
        x_last = tn                                   # x channel block == out block
        x_index = lambda b, j: (0, b, 0, j)
        w_spec = pl.BlockSpec((n_taps, tn), lambda b, j: (0, j))
        w_block_bytes = n_taps * tn * 4
    else:
        cp = _round_up(c_out, LANE)                   # lane-dense MXU N dim / stores
        tn = _pick_tn(cp)
        w_t = jnp.transpose(weight, (2, 3, 1, 0)).reshape(n_taps, c_in, c_out)
        w_t = jnp.pad(w_t, ((0, 0), (0, 0), (0, cp - c_out))).astype(jnp.bfloat16)
        x_last = c_in
        x_index = lambda b, j: (0, b, 0, 0)
        w_spec = pl.BlockSpec((n_taps, c_in, tn), lambda b, j: (0, 0, j))
        w_block_bytes = n_taps * c_in * tn * 2

    n_ct = cp // tn

    # Mask that zeroes the junk columns of the flat spatial layout.
    col_valid = (np.arange(l_out) % wq) < wo
    mask = jnp.asarray(col_valid.astype(np.float32)).reshape(l_out, 1)

    kernel1 = functools.partial(_conv_stats_kernel, taps=taps, l_out=l_out,
                                depthwise=depthwise)
    ws1 = (2 * (s_ph * lq * x_last * 2 + w_block_bytes + l_out * tn * 2
                + l_out * 4 + 2 * tn * 4) + l_out * tn * 4)

    y, sums, sumsqs = pl.pallas_call(
        kernel1,
        out_shape=(jax.ShapeDtypeStruct((n, l_out, cp), jnp.bfloat16),
                   jax.ShapeDtypeStruct((n, 1, cp), jnp.float32),
                   jax.ShapeDtypeStruct((n, 1, cp), jnp.float32)),
        grid_spec=pltpu.PrefetchScalarGridSpec(
            num_scalar_prefetch=0,
            grid=(n, n_ct),
            in_specs=[
                pl.BlockSpec((s_ph, None, lq, x_last), x_index),
                w_spec,
                pl.BlockSpec((l_out, 1), lambda b, j: (0, 0)),
            ],
            out_specs=(
                pl.BlockSpec((None, l_out, tn), lambda b, j: (b, 0, j)),
                pl.BlockSpec((None, 1, tn), lambda b, j: (b, 0, j)),
                pl.BlockSpec((None, 1, tn), lambda b, j: (b, 0, j)),
            ),
        ),
        compiler_params=pltpu.CompilerParams(
            dimension_semantics=("parallel", "parallel"),
            vmem_limit_bytes=_vmem_limit_bytes(ws1),
        ),
    )(xq, w_t, mask)

    # Fold exact batch stats into a single (scale, bias) pair (tiny XLA ops).
    cnt = float(n * ho * wo)
    ch_sum = jnp.sum(sums, axis=(0, 1))
    ch_ssq = jnp.sum(sumsqs, axis=(0, 1))
    mean = ch_sum / cnt
    # TODO(synk): single-pass E[y^2]-E[y]^2 in f32; use a compensated / two-pass
    # scheme if BN-stat precision matters at very large N*H*W.
    var = jnp.maximum(ch_ssq / cnt - mean * mean, 0.0)
    gamma_p = jnp.pad(gamma.astype(jnp.float32), (0, cp - c_out))
    beta_p = jnp.pad(beta.astype(jnp.float32), (0, cp - c_out))
    alpha_p = jnp.pad(alpha.astype(jnp.float32), (0, cp - c_out))
    scale_v = gamma_p * jax.lax.rsqrt(var + EPS)
    scale = scale_v.reshape(1, cp)
    bias = (beta_p - mean * scale_v).reshape(1, cp)
    alpha2 = alpha_p.reshape(1, cp)

    ws2 = 2 * (2 * l_out * tn * 2 + 3 * tn * 4)
    out = pl.pallas_call(
        _bn_prelu_kernel,
        out_shape=jax.ShapeDtypeStruct((n, l_out, cp), jnp.bfloat16),
        grid_spec=pltpu.PrefetchScalarGridSpec(
            num_scalar_prefetch=0,
            grid=(n, n_ct),
            in_specs=[
                pl.BlockSpec((None, l_out, tn), lambda b, j: (b, 0, j)),
                pl.BlockSpec((1, tn), lambda b, j: (0, j)),
                pl.BlockSpec((1, tn), lambda b, j: (0, j)),
                pl.BlockSpec((1, tn), lambda b, j: (0, j)),
            ],
            out_specs=pl.BlockSpec((None, l_out, tn), lambda b, j: (b, 0, j)),
        ),
        compiler_params=pltpu.CompilerParams(
            dimension_semantics=("parallel", "parallel"),
            vmem_limit_bytes=_vmem_limit_bytes(ws2),
        ),
    )(y, scale, bias, alpha2)

    out = out.reshape(n, ho, wq, cp)[:, :, :wo, :c_out]
    # NCHW + f32 to match the PyTorch module; production would keep bf16 NHWC.
    return jnp.transpose(out, (0, 3, 1, 2)).astype(jnp.float32)


def conv_block_forward(x, weight, gamma, beta, alpha,
                       stride=(1, 1), padding=(0, 0), groups=1):
    """ConvBlock forward.  x: (N, C_in, H, W) NCHW; returns (N, C_out, Ho, Wo)."""
    n, c_in, h, w = x.shape
    c_out = weight.shape[0]
    if groups == 1:
        return _conv_bn_prelu(x, weight, gamma, beta, alpha, stride, padding,
                              depthwise=False)
    if groups == c_in and c_out == c_in:
        return _conv_bn_prelu(x, weight, gamma, beta, alpha, stride, padding,
                              depthwise=True)
    # TODO(synk): rare 1 < groups < C_in case — a grid axis over groups would be
    # better than this per-group loop; mobilefacenet only uses groups in {1, C_in}.
    cig, cog = c_in // groups, c_out // groups
    outs = []
    for g in range(groups):
        outs.append(_conv_bn_prelu(
            x[:, g * cig:(g + 1) * cig], weight[g * cog:(g + 1) * cog],
            gamma[g * cog:(g + 1) * cog], beta[g * cog:(g + 1) * cog],
            alpha[g * cog:(g + 1) * cog], stride, padding, depthwise=False))
    return jnp.concatenate(outs, axis=1)


def _reference(x, weight, gamma, beta, alpha, stride, padding, groups):
    """Pure-JAX reference (f32 conv + training-mode BN + PReLU)."""
    y = jax.lax.conv_general_dilated(
        x, weight, window_strides=stride,
        padding=[(padding[0], padding[0]), (padding[1], padding[1])],
        dimension_numbers=("NCHW", "OIHW", "NCHW"),
        feature_group_count=groups)
    mean = jnp.mean(y, axis=(0, 2, 3), keepdims=True)
    var = jnp.mean((y - mean) ** 2, axis=(0, 2, 3), keepdims=True)
    y = (y - mean) * jax.lax.rsqrt(var + EPS)
    y = y * gamma.reshape(1, -1, 1, 1) + beta.reshape(1, -1, 1, 1)
    a = alpha.reshape(1, -1, 1, 1)
    return jnp.where(y > 0, y, a * y)


def _run_case(name, key, n, c_in, c_out, hw, ksize, stride, padding, groups):
    kx, kw_, kg, kb = jax.random.split(key, 4)
    x = jax.random.normal(kx, (n, c_in, hw, hw), dtype=jnp.float32)
    weight = 0.1 * jax.random.normal(
        kw_, (c_out, c_in // groups, ksize[0], ksize[1]), dtype=jnp.float32)
    gamma = 1.0 + 0.1 * jax.random.normal(kg, (c_out,), dtype=jnp.float32)  # BN weight
    beta = 0.1 * jax.random.normal(kb, (c_out,), dtype=jnp.float32)          # BN bias
    alpha = jnp.full((c_out,), 0.25, dtype=jnp.float32)                      # PReLU init

    out = conv_block_forward(x, weight, gamma, beta, alpha,
                             stride=stride, padding=padding, groups=groups)
    out = jax.block_until_ready(out)
    ref = _reference(x, weight, gamma, beta, alpha, stride, padding, groups)
    # bf16 MXU/VPU operands with f32 accumulation -> bf16-level tolerance.
    np.testing.assert_allclose(np.asarray(out), np.asarray(ref),
                               atol=5e-2, rtol=5e-2, err_msg=name)


if __name__ == "__main__":
    key = jax.random.PRNGKey(0)
    keys = jax.random.split(key, 5)
    # (name, key, N, C_in, C_out, H=W, kernel, stride, padding, groups)
    _run_case("dense_3x3_s1", keys[0], 2, 4, 8, 16, (3, 3), (1, 1), (1, 1), 1)
    _run_case("dense_3x3_s2", keys[1], 2, 4, 8, 16, (3, 3), (2, 2), (1, 1), 1)
    _run_case("pointwise_1x1", keys[2], 2, 32, 64, 8, (1, 1), (1, 1), (0, 0), 1)
    _run_case("depthwise_3x3_s1", keys[3], 2, 16, 16, 8, (3, 3), (1, 1), (1, 1), 16)
    _run_case("depthwise_3x3_s2", keys[4], 2, 16, 16, 8, (3, 3), (2, 2), (1, 1), 16)
    print("KERNEL_OK")
</pallas_src>

<mosaic_0001>
module attributes {stable_mosaic.version = 11 : i64} {
  func.func @_conv_stats_kernel(%arg0: i32, %arg1: i32, %arg2: memref<1x1x342x4xbf16, #tpu.memory_space<vmem>>, %arg3: memref<9x4x128xbf16, #tpu.memory_space<vmem>>, %arg4: memref<288x1xf32, #tpu.memory_space<vmem>>, %arg5: memref<1x288x128xbf16, #tpu.memory_space<vmem>>, %arg6: memref<1x1x128xf32, #tpu.memory_space<vmem>>, %arg7: memref<1x1x128xf32, #tpu.memory_space<vmem>>) attributes {dimension_semantics = [#tpu.dimension_semantics<parallel>, #tpu.dimension_semantics<parallel>], iteration_bounds = array<i64: 2, 1>, scalar_prefetch = 0 : i64, scratch_operands = 0 : i64, tpu.core_type = #tpu.core_type<tc>, window_params = [{transform_indices = @transform_0, window_bounds = array<i64: 1, 1, 342, 4>}, {transform_indices = @transform_1, window_bounds = array<i64: 9, 4, 128>}, {pipeline_mode = #tpu.pipeline_mode<synchronous>, transform_indices = @transform_2, window_bounds = array<i64: 288, 1>}, {transform_indices = @transform_3, window_bounds = array<i64: 1, 288, 128>}, {transform_indices = @transform_4, window_bounds = array<i64: 1, 1, 128>}, {transform_indices = @transform_5, window_bounds = array<i64: 1, 1, 128>}]} {
    %c0 = arith.constant 0 : index
    %c0_0 = arith.constant 0 : index
    %c0_1 = arith.constant 0 : index
    %c0_2 = arith.constant 0 : index
    %0 = vector.load %arg2[%c0, %c0_0, %c0_1, %c0_2] : memref<1x1x342x4xbf16, #tpu.memory_space<vmem>>, vector<1x1x288x4xbf16>
    %1 = vector.shape_cast %0 : vector<1x1x288x4xbf16> to vector<288x4xbf16>
    %c0_3 = arith.constant 0 : index
    %c0_4 = arith.constant 0 : index
    %c0_5 = arith.constant 0 : index
    %2 = vector.load %arg3[%c0_3, %c0_4, %c0_5] : memref<9x4x128xbf16, #tpu.memory_space<vmem>>, vector<1x4x128xbf16>
    %3 = vector.shape_cast %2 : vector<1x4x128xbf16> to vector<4x128xbf16>
    %cst = arith.constant dense<0.000000e+00> : vector<288x128xf32>
    %4 = tpu.matmul %1, %3, %cst {dimension_numbers = #tpu.dot_dimension_numbers<[1], [0], [0], [1], [0, 0, 1, 1], [], []>} : vector<288x4xbf16>, vector<4x128xbf16>, vector<288x128xf32> -> vector<288x128xf32>
    %c0_6 = arith.constant 0 : index
    %c0_7 = arith.constant 0 : index
    %c1 = arith.constant 1 : index
    %c0_8 = arith.constant 0 : index
    %5 = vector.load %arg2[%c0_6, %c0_7, %c1, %c0_8] : memref<1x1x342x4xbf16, #tpu.memory_space<vmem>>, vector<1x1x288x4xbf16>
    %6 = vector.shape_cast %5 : vector<1x1x288x4xbf16> to vector<288x4xbf16>
    %c1_9 = arith.constant 1 : index
    %c0_10 = arith.constant 0 : index
    %c0_11 = arith.constant 0 : index
    %7 = vector.load %arg3[%c1_9, %c0_10, %c0_11] : memref<9x4x128xbf16, #tpu.memory_space<vmem>>, vector<1x4x128xbf16>
    %8 = vector.shape_cast %7 : vector<1x4x128xbf16> to vector<4x128xbf16>
    %cst_12 = arith.constant dense<0.000000e+00> : vector<288x128xf32>
    %9 = tpu.matmul %6, %8, %cst_12 {dimension_numbers = #tpu.dot_dimension_numbers<[1], [0], [0], [1], [0, 0, 1, 1], [], []>} : vector<288x4xbf16>, vector<4x128xbf16>, vector<288x128xf32> -> vector<288x128xf32>
    %10 = arith.addf %4, %9 : vector<288x128xf32>
    %c0_13 = arith.constant 0 : index
    %c0_14 = arith.constant 0 : index
    %c2 = arith.constant 2 : index
    %c0_15 = arith.constant 0 : index
    %11 = vector.load %arg2[%c0_13, %c0_14, %c2, %c0_15] : memref<1x1x342x4xbf16, #tpu.memory_space<vmem>>, vector<1x1x288x4xbf16>
    %12 = vector.shape_cast %11 : vector<1x1x288x4xbf16> to vector<288x4xbf16>
    %c2_16 = arith.constant 2 : index
    %c0_17 = arith.constant 0 : index
    %c0_18 = arith.constant 0 : index
    %13 = vector.load %arg3[%c2_16, %c0_17, %c0_18] : memref<9x4x128xbf16, #tpu.memory_space<vmem>>, vector<1x4x128xbf16>
    %14 = vector.shape_cast %13 : vector<1x4x128xbf16> to vector<4x128xbf16>
    %cst_19 = arith.constant dense<0.000000e+00> : vector<288x128xf32>
    %15 = tpu.matmul %12, %14, %cst_19 {dimension_numbers = #tpu.dot_dimension_numbers<[1], [0], [0], [1], [0, 0, 1, 1], [], []>} : vector<288x4xbf16>, vector<4x128xbf16>, vector<288x128xf32> -> vector<288x128xf32>
    %16 = arith.addf %10, %15 : vector<288x128xf32>
    %c0_20 = arith.constant 0 : index
    %c0_21 = arith.constant 0 : index
    %c18 = arith.constant 18 : index
    %c0_22 = arith.constant 0 : index
    %17 = vector.load %arg2[%c0_20, %c0_21, %c18, %c0_22] : memref<1x1x342x4xbf16, #tpu.memory_space<vmem>>, vector<1x1x288x4xbf16>
    %18 = vector.shape_cast %17 : vector<1x1x288x4xbf16> to vector<288x4xbf16>
    %c3 = arith.constant 3 : index
    %c0_23 = arith.constant 0 : index
    %c0_24 = arith.constant 0 : index
    %19 = vector.load %arg3[%c3, %c0_23, %c0_24] : memref<9x4x128xbf16, #tpu.memory_space<vmem>>, vector<1x4x128xbf16>
    %20 = vector.shape_cast %19 : vector<1x4x128xbf16> to vector<4x128xbf16>
    %cst_25 = arith.constant dense<0.000000e+00> : vector<288x128xf32>
    %21 = tpu.matmul %18, %20, %cst_25 {dimension_numbers = #tpu.dot_dimension_numbers<[1], [0], [0], [1], [0, 0, 1, 1], [], []>} : vector<288x4xbf16>, vector<4x128xbf16>, vector<288x128xf32> -> vector<288x128xf32>
    %22 = arith.addf %16, %21 : vector<288x128xf32>
    %c0_26 = arith.constant 0 : index
    %c0_27 = arith.constant 0 : index
    %c19 = arith.constant 19 : index
    %c0_28 = arith.constant 0 : index
    %23 = vector.load %arg2[%c0_26, %c0_27, %c19, %c0_28] : memref<1x1x342x4xbf16, #tpu.memory_space<vmem>>, vector<1x1x288x4xbf16>
    %24 = vector.shape_cast %23 : vector<1x1x288x4xbf16> to vector<288x4xbf16>
    %c4 = arith.constant 4 : index
    %c0_29 = arith.constant 0 : index
    %c0_30 = arith.constant 0 : index
    %25 = vector.load %arg3[%c4, %c0_29, %c0_30] : memref<9x4x128xbf16, #tpu.memory_space<vmem>>, vector<1x4x128xbf16>
    %26 = vector.shape_cast %25 : vector<1x4x128xbf16> to vector<4x128xbf16>
    %cst_31 = arith.constant dense<0.000000e+00> : vector<288x128xf32>
    %27 = tpu.matmul %24, %26, %cst_31 {dimension_numbers = #tpu.dot_dimension_numbers<[1], [0], [0], [1], [0, 0, 1, 1], [], []>} : vector<288x4xbf16>, vector<4x128xbf16>, vector<288x128xf32> -> vector<288x128xf32>
    %28 = arith.addf %22, %27 : vector<288x128xf32>
    %c0_32 = arith.constant 0 : index
    %c0_33 = arith.constant 0 : index
    %c20 = arith.constant 20 : index
    %c0_34 = arith.constant 0 : index
    %29 = vector.load %arg2[%c0_32, %c0_33, %c20, %c0_34] : memref<1x1x342x4xbf16, #tpu.memory_space<vmem>>, vector<1x1x288x4xbf16>
    %30 = vector.shape_cast %29 : vector<1x1x288x4xbf16> to vector<288x4xbf16>
    %c5 = arith.constant 5 : index
    %c0_35 = arith.constant 0 : index
    %c0_36 = arith.constant 0 : index
    %31 = vector.load %arg3[%c5, %c0_35, %c0_36] : memref<9x4x128xbf16, #tpu.memory_space<vmem>>, vector<1x4x128xbf16>
    %32 = vector.shape_cast %31 : vector<1x4x128xbf16> to vector<4x128xbf16>
    %cst_37 = arith.constant dense<0.000000e+00> : vector<288x128xf32>
    %33 = tpu.matmul %30, %32, %cst_37 {dimension_numbers = #tpu.dot_dimension_numbers<[1], [0], [0], [1], [0, 0, 1, 1], [], []>} : vector<288x4xbf16>, vector<4x128xbf16>, vector<288x128xf32> -> vector<288x128xf32>
    %34 = arith.addf %28, %33 : vector<288x128xf32>
    %c0_38 = arith.constant 0 : index
    %c0_39 = arith.constant 0 : index
    %c36 = arith.constant 36 : index
    %c0_40 = arith.constant 0 : index
    %35 = vector.load %arg2[%c0_38, %c0_39, %c36, %c0_40] : memref<1x1x342x4xbf16, #tpu.memory_space<vmem>>, vector<1x1x288x4xbf16>
    %36 = vector.shape_cast %35 : vector<1x1x288x4xbf16> to vector<288x4xbf16>
    %c6 = arith.constant 6 : index
    %c0_41 = arith.constant 0 : index
    %c0_42 = arith.constant 0 : index
    %37 = vector.load %arg3[%c6, %c0_41, %c0_42] : memref<9x4x128xbf16, #tpu.memory_space<vmem>>, vector<1x4x128xbf16>
    %38 = vector.shape_cast %37 : vector<1x4x128xbf16> to vector<4x128xbf16>
    %cst_43 = arith.constant dense<0.000000e+00> : vector<288x128xf32>
    %39 = tpu.matmul %36, %38, %cst_43 {dimension_numbers = #tpu.dot_dimension_numbers<[1], [0], [0], [1], [0, 0, 1, 1], [], []>} : vector<288x4xbf16>, vector<4x128xbf16>, vector<288x128xf32> -> vector<288x128xf32>
    %40 = arith.addf %34, %39 : vector<288x128xf32>
    %c0_44 = arith.constant 0 : index
    %c0_45 = arith.constant 0 : index
    %c37 = arith.constant 37 : index
    %c0_46 = arith.constant 0 : index
    %41 = vector.load %arg2[%c0_44, %c0_45, %c37, %c0_46] : memref<1x1x342x4xbf16, #tpu.memory_space<vmem>>, vector<1x1x288x4xbf16>
    %42 = vector.shape_cast %41 : vector<1x1x288x4xbf16> to vector<288x4xbf16>
    %c7 = arith.constant 7 : index
    %c0_47 = arith.constant 0 : index
    %c0_48 = arith.constant 0 : index
    %43 = vector.load %arg3[%c7, %c0_47, %c0_48] : memref<9x4x128xbf16, #tpu.memory_space<vmem>>, vector<1x4x128xbf16>
    %44 = vector.shape_cast %43 : vector<1x4x128xbf16> to vector<4x128xbf16>
    %cst_49 = arith.constant dense<0.000000e+00> : vector<288x128xf32>
    %45 = tpu.matmul %42, %44, %cst_49 {dimension_numbers = #tpu.dot_dimension_numbers<[1], [0], [0], [1], [0, 0, 1, 1], [], []>} : vector<288x4xbf16>, vector<4x128xbf16>, vector<288x128xf32> -> vector<288x128xf32>
    %46 = arith.addf %40, %45 : vector<288x128xf32>
    %c0_50 = arith.constant 0 : index
    %c0_51 = arith.constant 0 : index
    %c38 = arith.constant 38 : index
    %c0_52 = arith.constant 0 : index
    %47 = vector.load %arg2[%c0_50, %c0_51, %c38, %c0_52] : memref<1x1x342x4xbf16, #tpu.memory_space<vmem>>, vector<1x1x288x4xbf16>
    %48 = vector.shape_cast %47 : vector<1x1x288x4xbf16> to vector<288x4xbf16>
    %c8 = arith.constant 8 : index
    %c0_53 = arith.constant 0 : index
    %c0_54 = arith.constant 0 : index
    %49 = vector.load %arg3[%c8, %c0_53, %c0_54] : memref<9x4x128xbf16, #tpu.memory_space<vmem>>, vector<1x4x128xbf16>
    %50 = vector.shape_cast %49 : vector<1x4x128xbf16> to vector<4x128xbf16>
    %cst_55 = arith.constant dense<0.000000e+00> : vector<288x128xf32>
    %51 = tpu.matmul %48, %50, %cst_55 {dimension_numbers = #tpu.dot_dimension_numbers<[1], [0], [0], [1], [0, 0, 1, 1], [], []>} : vector<288x4xbf16>, vector<4x128xbf16>, vector<288x128xf32> -> vector<288x128xf32>
    %52 = arith.addf %46, %51 : vector<288x128xf32>
    %c0_56 = arith.constant 0 : index
    %c0_57 = arith.constant 0 : index
    %53 = vector.load %arg4[%c0_56, %c0_57] : memref<288x1xf32, #tpu.memory_space<vmem>>, vector<288x1xf32>
    %54 = vector.broadcast %53 : vector<288x1xf32> to vector<288x128xf32>
    %55 = arith.mulf %52, %54 : vector<288x128xf32>
    %cst_58 = arith.constant dense<0.000000e+00> : vector<128xf32>
    %56 = vector.multi_reduction <add>, %55, %cst_58 [0] : vector<288x128xf32> to vector<128xf32>
    %57 = vector.shape_cast %56 : vector<128xf32> to vector<1x128xf32>
    %c0_59 = arith.constant 0 : index
    %c0_60 = arith.constant 0 : index
    %c0_61 = arith.constant 0 : index
    %58 = vector.load %arg6[%c0_59, %c0_60, %c0_61] : memref<1x1x128xf32, #tpu.memory_space<vmem>>, vector<1x1x128xf32>
    %59 = vector.shape_cast %58 : vector<1x1x128xf32> to vector<1x128xf32>
    %60 = vector.shape_cast %57 : vector<1x128xf32> to vector<1x1x128xf32>
    tpu.vector_store %arg6[%c0_59, %c0_60, %c0_61], %60 {strides = array<i32>} : memref<1x1x128xf32, #tpu.memory_space<vmem>>, vector<1x1x128xf32>,
    %61 = arith.mulf %55, %55 : vector<288x128xf32>
    %cst_62 = arith.constant dense<0.000000e+00> : vector<128xf32>
    %62 = vector.multi_reduction <add>, %61, %cst_62 [0] : vector<288x128xf32> to vector<128xf32>
    %63 = vector.shape_cast %62 : vector<128xf32> to vector<1x128xf32>
    %c0_63 = arith.constant 0 : index
    %c0_64 = arith.constant 0 : index
    %c0_65 = arith.constant 0 : index
    %64 = vector.load %arg7[%c0_63, %c0_64, %c0_65] : memref<1x1x128xf32, #tpu.memory_space<vmem>>, vector<1x1x128xf32>
    %65 = vector.shape_cast %64 : vector<1x1x128xf32> to vector<1x128xf32>
    %66 = vector.shape_cast %63 : vector<1x128xf32> to vector<1x1x128xf32>
    tpu.vector_store %arg7[%c0_63, %c0_64, %c0_65], %66 {strides = array<i32>} : memref<1x1x128xf32, #tpu.memory_space<vmem>>, vector<1x1x128xf32>,
    %67 = arith.truncf %55 : vector<288x128xf32> to vector<288x128xbf16>
    %c0_66 = arith.constant 0 : index
    %c0_67 = arith.constant 0 : index
    %c0_68 = arith.constant 0 : index
    %68 = vector.load %arg5[%c0_66, %c0_67, %c0_68] : memref<1x288x128xbf16, #tpu.memory_space<vmem>>, vector<1x288x128xbf16>
    %69 = vector.shape_cast %68 : vector<1x288x128xbf16> to vector<288x128xbf16>
    %70 = vector.shape_cast %67 : vector<288x128xbf16> to vector<1x288x128xbf16>
    tpu.vector_store %arg5[%c0_66, %c0_67, %c0_68], %70 {strides = array<i32>} : memref<1x288x128xbf16, #tpu.memory_space<vmem>>, vector<1x288x128xbf16>,
    return
  }
  func.func @transform_0(%arg0: i32, %arg1: i32) -> (i32, i32, i32, i32) {
    %c0_i32 = arith.constant 0 : i32
    %c0_i32_0 = arith.constant 0 : i32
    %c0_i32_1 = arith.constant 0 : i32
    %c0_i32_2 = arith.constant 0 : i32
    return %c0_i32, %arg0, %c0_i32_0, %c0_i32_1 : i32, i32, i32, i32
  }
  func.func @transform_1(%arg0: i32, %arg1: i32) -> (i32, i32, i32) {
    %c0_i32 = arith.constant 0 : i32
    %c0_i32_0 = arith.constant 0 : i32
    %c0_i32_1 = arith.constant 0 : i32
    return %c0_i32, %c0_i32_0, %arg1 : i32, i32, i32
  }
  func.func @transform_2(%arg0: i32, %arg1: i32) -> (i32, i32) {
    %c0_i32 = arith.constant 0 : i32
    %c0_i32_0 = arith.constant 0 : i32
    %c0_i32_1 = arith.constant 0 : i32
    return %c0_i32, %c0_i32_0 : i32, i32
  }
  func.func @transform_3(%arg0: i32, %arg1: i32) -> (i32, i32, i32) {
    %c0_i32 = arith.constant 0 : i32
    %c0_i32_0 = arith.constant 0 : i32
    return %arg0, %c0_i32, %arg1 : i32, i32, i32
  }
  func.func @transform_4(%arg0: i32, %arg1: i32) -> (i32, i32, i32) {
    %c0_i32 = arith.constant 0 : i32
    %c0_i32_0 = arith.constant 0 : i32
    return %arg0, %c0_i32, %arg1 : i32, i32, i32
  }
  func.func @transform_5(%arg0: i32, %arg1: i32) -> (i32, i32, i32) {
    %c0_i32 = arith.constant 0 : i32
    %c0_i32_0 = arith.constant 0 : i32
    return %arg0, %c0_i32, %arg1 : i32, i32, i32
  }
}

</mosaic_0001>

<llo_original>
// kernel: tpu_custom_call.1
$region0: #{tpu_custom_call.1}
  #allocation0 [shape = 'u32[]', space=smem, size = 0x4, offset = 0x4, fixed_abs, tag = 'smem constant byte address 0x4 - core index']
  #allocation1 [shape = 'u32[144,128]{1,0:T(1,128)}', space=vmem, size = 0x12000, scoped, tag = 'internal scratch']
  %s0 = inlined_call_operand.vmem [shape: bf16[1,2,342,4], index: 0, kind: input, shape index: {}]
  %s1 = inlined_call_operand.vmem [shape: bf16[9,4,128], index: 1, kind: input, shape index: {}]
  %s2 = inlined_call_operand.vmem [shape: f32[288,1], index: 2, kind: input, shape index: {}]
  %s3 = inlined_call_operand.hbm [shape: bf16[2,288,128], index: 3, kind: output, shape index: {0}]
  %s4 = inlined_call_operand.hbm [shape: f32[2,1,128], index: 4, kind: output, shape index: {1}]
  %s5 = inlined_call_operand.hbm [shape: f32[2,1,128], index: 5, kind: output, shape index: {2}]
  %6 = xla_tuple %s3, %s4, %s5
  %s7 = sld [smem:[#allocation0]]
  $region61: #{tpu_custom_call.1} parent=0
    _
  %s9 = ssub.s32 1, %s7
  %s10 = scalar_select 0, %s9, %s7
  $region1: #{tpu_custom_call.1} parent=0
    #allocation2 [shape = 'u8[147456]{0}', space=vmem, size = 0x24000, scoped, tag = 'output window, operand 0']
    #allocation3 [shape = 's32[2]{0}', space=sflag, size = 0x8, scoped, tag = 'scoped memory for tpu_custom_call.1']
    #allocation4 [shape = 'u8[1024]{0}', space=vmem, size = 0x400, scoped, tag = 'output window, operand 1']
    #allocation5 [shape = 's32[2]{0}', space=sflag, size = 0x8, scoped, tag = 'scoped memory for tpu_custom_call.1']
    #allocation6 [shape = 'u8[1024]{0}', space=vmem, size = 0x400, scoped, tag = 'output window, operand 2']
    %11 = vsyncpa [#allocation3], 0
    %s12 = scalar_lea.sflag [#allocation3], 1
    %13 = vsyncpa %s12, 0
    %14 = vsyncpa [#allocation5], 0
    %s15 = scalar_lea.sflag [#allocation5], 1
    %16 = vsyncpa %s15, 0
    loop: start=0, step=1, limit=4
    $region2: #{tpu_custom_call.1} parent=1 // loop_pre_header
      _
    $region3: #{tpu_custom_call.1} parent=1 // loop_header
      %s18 = sphi 0, %s22
      %p19 = scmp.ge.s32.totalorder %s18, 4
      %s25 = sphi 0, %s37
      %s26 = sphi 0, %s33
      %s27 = sphi 0, %s25
      %s28 = sphi 0, %s26
      %s29 = sphi 0, %s27
      %s30 = sphi 0, %s28
      %s40 = sphi 0, %s42
      %s43 = sphi 0, %s40
      %s44 = sphi 0, %s43
      %s60 = sphi 0, %s44
      %s66 = sphi 0, %s68
      %s69 = sphi 0, %s66
      %s70 = sphi 0, %s69
      %s86 = sphi 0, %s70
      %s90 = sphi 0, %s90
      %s92 = sphi 0, %s90
      %s93 = sphi 0, %s92
      %s107 = sphi 0, %s93
      %s115 = sphi 0, %s117
      %s118 = sphi 0, %s115
      %s119 = sphi 0, %s118
      %s135 = sphi 0, %s119
      %s143 = sphi 0, %s145
      %s146 = sphi 0, %s143
      %s147 = sphi 0, %s146
      %s163 = sphi 0, %s147
      %s171 = sphi 0, %s173
      %s174 = sphi 0, %s171
      %s175 = sphi 0, %s174
      %s191 = sphi 0, %s175
    $region4: #{tpu_custom_call.1} parent=1 // loop_header_branch
      %21 = sbr.rel (%p19) target = $region8
    $region5: #{tpu_custom_call.1} parent=1 // loop_body
      %s23 = ssub.s32 %s18, 1
      %s24 = ssub.s32 %s18, 2
      %s31 = sadd.s32 1, %s26
      %p32 = scmp.ge.s32.totalorder %s31, 1
      %s33 = scalar_select %p32, 0, %s31
      %s34 = sadd.s32 1, %s25
      %s35 = scalar_select %p32, %s34, %s25
      %p36 = scmp.ge.s32.totalorder %s35, 2
      %s37 = scalar_select %p36, 0, %s35
      %s38 = ssub.s32 %s25, %s37
      %p39 = scmp.eq.s32.totalorder %s38, 0
      %s41 = sadd.s32 %s40, 1
      %s42 = scalar_select %p39, %s40, %s41
      %p45 = pneg %p39
      %p46 = scmp.eq.s32.totalorder %s18, 1
      %p47 = por %p45, %p46
      %p48 = scmp.ne.s32.totalorder %s40, %s43
      %p49 = scmp.eq.s32.totalorder %s18, 0
      %p50 = por %p48, %p49
      %p51 = scmp.ne.s32.totalorder %s40, %s43
      %p52 = scmp.eq.s32.totalorder %s23, 1
      %p53 = por %p51, %p52
      %p54 = scmp.ne.s32.totalorder %s43, %s44
      %p55 = scmp.eq.s32.totalorder %s23, 0
      %p56 = por %p54, %p55
      %p57 = scmp.ne.s32.totalorder %s43, %s44
      %p58 = scmp.eq.s32.totalorder %s24, 1
      %p59 = por %p57, %p58
      %p61 = scmp.ne.s32.totalorder %s44, %s60
      %p62 = scmp.eq.s32.totalorder %s24, 0
      %p63 = por %p61, %p62
      %s64 = ssub.s32 %s26, %s33
      %p65 = scmp.eq.s32.totalorder %s64, 0
      %s67 = sadd.s32 %s66, 1
      %s68 = scalar_select %p65, %s66, %s67
      %p71 = pneg %p65
      %p72 = scmp.eq.s32.totalorder %s18, 1
      %p73 = por %p71, %p72
      %p74 = scmp.ne.s32.totalorder %s66, %s69
      %p75 = scmp.eq.s32.totalorder %s18, 0
      %p76 = por %p74, %p75
      %p77 = scmp.ne.s32.totalorder %s66, %s69
      %p78 = scmp.eq.s32.totalorder %s23, 1
      %p79 = por %p77, %p78
      %p80 = scmp.ne.s32.totalorder %s69, %s70
      %p81 = scmp.eq.s32.totalorder %s23, 0
      %p82 = por %p80, %p81
      %p83 = scmp.ne.s32.totalorder %s69, %s70
      %p84 = scmp.eq.s32.totalorder %s24, 1
      %p85 = por %p83, %p84
      %p87 = scmp.ne.s32.totalorder %s70, %s86
      %p88 = scmp.eq.s32.totalorder %s24, 0
      %p89 = por %p87, %p88
      %s91 = sadd.s32 %s90, 1
      %p94 = scmp.eq.s32.totalorder %s18, 1
      %p95 = scmp.ne.s32.totalorder %s90, %s92
      %p96 = scmp.eq.s32.totalorder %s18, 0
      %p97 = por %p95, %p96
      %p98 = scmp.ne.s32.totalorder %s90, %s92
      %p99 = scmp.eq.s32.totalorder %s23, 1
      %p100 = por %p98, %p99
      %p101 = scmp.ne.s32.totalorder %s92, %s93
      %p102 = scmp.eq.s32.totalorder %s23, 0
      %p103 = por %p101, %p102
      %p104 = scmp.ne.s32.totalorder %s92, %s93
      %p105 = scmp.eq.s32.totalorder %s24, 1
      %p106 = por %p104, %p105
      %p108 = scmp.ne.s32.totalorder %s93, %s107
      %p109 = scmp.eq.s32.totalorder %s24, 0
      %p110 = por %p108, %p109
      %s111 = ssub.s32 %s25, %s37
      %s112 = ssub.s32 %s26, %s33
      %s113 = sor.u32 %s111, %s112
      %p114 = scmp.eq.s32.totalorder %s113, 0
      %s116 = sadd.s32 %s115, 1
      %s117 = scalar_select %p114, %s115, %s116
      %p120 = pneg %p114
      %p121 = scmp.eq.s32.totalorder %s18, 1
      %p122 = por %p120, %p121
      %p123 = scmp.ne.s32.totalorder %s115, %s118
      %p124 = scmp.eq.s32.totalorder %s18, 0
      %p125 = por %p123, %p124
      %p126 = scmp.ne.s32.totalorder %s115, %s118
      %p127 = scmp.eq.s32.totalorder %s23, 1
      %p128 = por %p126, %p127
      %p129 = scmp.ne.s32.totalorder %s118, %s119
      %p130 = scmp.eq.s32.totalorder %s23, 0
      %p131 = por %p129, %p130
      %p132 = scmp.ne.s32.totalorder %s118, %s119
      %p133 = scmp.eq.s32.totalorder %s24, 1
      %p134 = por %p132, %p133
      %p136 = scmp.ne.s32.totalorder %s119, %s135
      %p137 = scmp.eq.s32.totalorder %s24, 0
      %p138 = por %p136, %p137
      %s139 = ssub.s32 %s25, %s37
      %s140 = ssub.s32 %s26, %s33
      %s141 = sor.u32 %s139, %s140
      %p142 = scmp.eq.s32.totalorder %s141, 0
      %s144 = sadd.s32 %s143, 1
      %s145 = scalar_select %p142, %s143, %s144
      %p148 = pneg %p142
      %p149 = scmp.eq.s32.totalorder %s18, 1
      %p150 = por %p148, %p149
      %p151 = scmp.ne.s32.totalorder %s143, %s146
      %p152 = scmp.eq.s32.totalorder %s18, 0
      %p153 = por %p151, %p152
      %p154 = scmp.ne.s32.totalorder %s143, %s146
      %p155 = scmp.eq.s32.totalorder %s23, 1
      %p156 = por %p154, %p155
      %p157 = scmp.ne.s32.totalorder %s146, %s147
      %p158 = scmp.eq.s32.totalorder %s23, 0
      %p159 = por %p157, %p158
      %p160 = scmp.ne.s32.totalorder %s146, %s147
      %p161 = scmp.eq.s32.totalorder %s24, 1
      %p162 = por %p160, %p161
      %p164 = scmp.ne.s32.totalorder %s147, %s163
      %p165 = scmp.eq.s32.totalorder %s24, 0
      %p166 = por %p164, %p165
      %s167 = ssub.s32 %s25, %s37
      %s168 = ssub.s32 %s26, %s33
      %s169 = sor.u32 %s167, %s168
      %p170 = scmp.eq.s32.totalorder %s169, 0
      %s172 = sadd.s32 %s171, 1
      %s173 = scalar_select %p170, %s171, %s172
      %p176 = pneg %p170
      %p177 = scmp.eq.s32.totalorder %s18, 1
      %p178 = por %p176, %p177
      %p179 = scmp.ne.s32.totalorder %s171, %s174
      %p180 = scmp.eq.s32.totalorder %s18, 0
      %p181 = por %p179, %p180
      %p182 = scmp.ne.s32.totalorder %s171, %s174
      %p183 = scmp.eq.s32.totalorder %s23, 1
      %p184 = por %p182, %p183
      %p185 = scmp.ne.s32.totalorder %s174, %s175
      %p186 = scmp.eq.s32.totalorder %s23, 0
      %p187 = por %p185, %p186
      %p188 = scmp.ne.s32.totalorder %s174, %s175
      %p189 = scmp.eq.s32.totalorder %s24, 1
      %p190 = por %p188, %p189
      %p192 = scmp.ne.s32.totalorder %s175, %s191
      %p193 = scmp.eq.s32.totalorder %s24, 0
      %p194 = por %p192, %p193
      %p195 = scmp.le.s32.totalorder 1, %s18
      %p196 = scmp.lt.s32.totalorder %s18, 3
      %p197 = pnand %p195, %p196
      %p198 = pneg %p197
      // Predicated region
      $region9: #{tpu_custom_call.1} parent=5 // pred_check
        _
      $region10: #{tpu_custom_call.1} parent=5 // pred_check_branch
        %200 = sbr.rel (%p197) target = $region12
      $region11: #{tpu_custom_call.1} parent=5 // pred_region
        %s201 = ssub.s32 %s18, 1
        // Predicated region
        $region13: #{tpu_custom_call.1} parent=11 // pred_check
          %p202 = pneg %p82
        $region14: #{tpu_custom_call.1} parent=11 // pred_check_branch
          %204 = sbr.rel (%p202) target = $region16
        $region15: #{tpu_custom_call.1} parent=11 // pred_region
          %p205 = scmp.lt.s32.totalorder %s28, 0
          %s206 = scalar_select %p205, %s28, 0
          %s207 = smul.addr %s206, 2
          %s208 = scalar_lea.vmem %s1, %s207
        $region16: #{tpu_custom_call.1} parent=11 // pred_fallthru
          _
        // Predicated region
        $region17: #{tpu_custom_call.1} parent=11 // pred_check
          %p209 = pneg %p103
        $region18: #{tpu_custom_call.1} parent=11 // pred_check_branch
          %211 = sbr.rel (%p209) target = $region20
        $region19: #{tpu_custom_call.1} parent=11 // pred_region
          _
        $region20: #{tpu_custom_call.1} parent=11 // pred_fallthru
          _
      $region12: #{tpu_custom_call.1} parent=5 // pred_fallthru
        _
      %p212 = scmp.lt.s32.totalorder %s18, 2
      // Predicated region
      $region21: #{tpu_custom_call.1} parent=5 // pred_check
        %p213 = pneg %p212
      $region22: #{tpu_custom_call.1} parent=5 // pred_check_branch
        %215 = sbr.rel (%p213) target = $region24
      $region23: #{tpu_custom_call.1} parent=5 // pred_region
        // Predicated region
        $region25: #{tpu_custom_call.1} parent=23 // pred_check
          %p216 = pneg %p50
        $region26: #{tpu_custom_call.1} parent=23 // pred_check_branch
          %218 = sbr.rel (%p216) target = $region28
        $region27: #{tpu_custom_call.1} parent=23 // pred_region
          %p219 = scmp.lt.s32.totalorder %s25, 1
          %s220 = scalar_select %p219, %s25, 1
          %s221 = smul.addr %s220, 43
          %s222 = smul.addr %s221, 4
          %s223 = scalar_lea.vmem %s0, %s222
        $region28: #{tpu_custom_call.1} parent=23 // pred_fallthru
          _
      $region24: #{tpu_custom_call.1} parent=5 // pred_fallthru
        _
      %p224 = scmp.le.s32.totalorder 1, %s18
      %p225 = scmp.lt.s32.totalorder %s18, 3
      %p226 = pnand %p224, %p225
      %p227 = pneg %p226
      // Predicated region
      $region29: #{tpu_custom_call.1} parent=5 // pred_check
        _
      $region30: #{tpu_custom_call.1} parent=5 // pred_check_branch
        %229 = sbr.rel (%p226) target = $region32
      $region31: #{tpu_custom_call.1} parent=5 // pred_region
        %s230 = ssub.s32 %s18, 1
        %p231 = scmp.lt.s32.totalorder %s27, 1
        %s232 = scalar_select %p231, %s27, 1
        %s233 = smul.addr %s232, 43
        %s234 = smul.addr %s233, 4
        %s235 = scalar_lea.vmem %s0, %s234
        %p236 = pneg %p56
        %p237 = pneg %p53
        %p238 = scmp.lt.s32.totalorder %s28, 0
        %s239 = scalar_select %p238, %s28, 0
        %s240 = smul.addr %s239, 2
        %s241 = scalar_lea.vmem %s1, %s240
        %p242 = pneg %p82
        %p243 = pneg %p79
        %p244 = pneg %p103
        %p245 = pneg %p100
        %p246 = pneg %p131
        %p247 = pneg %p128
        %s248 = sand.u32 %s118, 1
        %s249 = scalar_lea.sflag [#allocation3], %s248
        %s250 = sand.u32 %s118, 1
        %s251 = smul.addr %s250, 144
        %s252 = scalar_lea.vmem [#allocation2], %s251
        %p253 = pneg %p159
        %p254 = pneg %p156
        %s255 = sand.u32 %s23, 1
        %s256 = scalar_lea.sflag [#allocation5], %s255
        %s257 = sand.u32 %s146, 1
        %s258 = scalar_lea.vmem [#allocation4], %s257
        %p259 = pneg %p187
        %p260 = pneg %p184
        %s261 = sand.u32 %s23, 1
        %s262 = scalar_lea.sflag [#allocation5], %s261
        %s263 = sand.u32 %s174, 1
        %s264 = scalar_lea.vmem [#allocation6], %s263
        %p265 = scmp.lt.s32.totalorder %s27, 1
        %s266 = scalar_select %p265, %s27, 1
        %s267 = smul.addr %s266, 43
        %s268 = smul.addr %s267, 4
        %s269 = scalar_lea.vmem %s0, %s268
        %p270 = scmp.lt.s32.totalorder %s28, 0
        %s271 = scalar_select %p270, %s28, 0
        %s272 = smul.addr %s271, 2
        %s273 = scalar_lea.vmem %s1, %s272
        %v275 = vld [vmem:[%s269] sm:$0xf]
        %v276 = vld [vmem:[%s269 + $0x4] sm:$0xf]
        %v277 = vld [vmem:[%s269 + $0x8] sm:$0xf]
        %v278 = vld [vmem:[%s269 + $0xc] sm:$0xf]
        %v279 = vld [vmem:[%s269 + $0x10] sm:$0xf]
        %v280 = vld [vmem:[%s269 + $0x14] sm:$0xf]
        %v281 = vld [vmem:[%s269 + $0x18] sm:$0xf]
        %v282 = vld [vmem:[%s269 + $0x1c] sm:$0xf]
        %v283 = vld [vmem:[%s269 + $0x20] sm:$0xf]
        %v284 = vld [vmem:[%s269 + $0x24] sm:$0xf]
        %v285 = vld [vmem:[%s269 + $0x28] sm:$0xf]
        %v286 = vld [vmem:[%s269 + $0x2c] sm:$0xf]
        %v287 = vld [vmem:[%s269 + $0x30] sm:$0xf]
        %v288 = vld [vmem:[%s269 + $0x34] sm:$0xf]
        %v289 = vld [vmem:[%s269 + $0x38] sm:$0xf]
        %v290 = vld [vmem:[%s269 + $0x3c] sm:$0xf]
        %v291 = vld [vmem:[%s269 + $0x40] sm:$0xf]
        %v292 = vld [vmem:[%s269 + $0x44] sm:$0xf]
        %v293 = vld [vmem:[%s269 + $0x48] sm:$0xf]
        %v294 = vld [vmem:[%s269 + $0x4c] sm:$0xf]
        %v295 = vld [vmem:[%s269 + $0x50] sm:$0xf]
        %v296 = vld [vmem:[%s269 + $0x54] sm:$0xf]
        %v297 = vld [vmem:[%s269 + $0x58] sm:$0xf]
        %v298 = vld [vmem:[%s269 + $0x5c] sm:$0xf]
        %v299 = vld [vmem:[%s269 + $0x60] sm:$0xf]
        %v300 = vld [vmem:[%s269 + $0x64] sm:$0xf]
        %v301 = vld [vmem:[%s269 + $0x68] sm:$0xf]
        %v302 = vld [vmem:[%s269 + $0x6c] sm:$0xf]
        %v303 = vld [vmem:[%s269 + $0x70] sm:$0xf]
        %v304 = vld [vmem:[%s269 + $0x74] sm:$0xf]
        %v305 = vld [vmem:[%s269 + $0x78] sm:$0xf]
        %v306 = vld [vmem:[%s269 + $0x7c] sm:$0xf]
        %v307 = vld [vmem:[%s269 + $0x80] sm:$0xf]
        %v308 = vld [vmem:[%s269 + $0x84] sm:$0xf]
        %v309 = vld [vmem:[%s269 + $0x88] sm:$0xf]
        %v310 = vld [vmem:[%s269 + $0x8c] sm:$0xf]
        %v311 = vld [vmem:[%s273] sm:$0x3]
        %v312 = vld [vmem:[%s269 + $0x90] sm:$0x1]
        %s313 = scalar_lea.vmem %s273, 2
        %v314 = vld [vmem:[%s313] sm:$0x3]
        %v352 = vunpack.c.l.b16 %v275
        %v353 = vunpack.c.l.b16 %v276
        %v354 = vunpack.c.l.b16 %v277
        %v355 = vunpack.c.l.b16 %v278
        %v356 = vunpack.c.l.b16 %v279
        %v357 = vunpack.c.l.b16 %v280
        %v358 = vunpack.c.l.b16 %v281
        %v359 = vunpack.c.l.b16 %v282
        %v360 = vunpack.c.l.b16 %v283
        %v361 = vunpack.c.l.b16 %v284
        %v362 = vunpack.c.l.b16 %v285
        %v363 = vunpack.c.l.b16 %v286
        %v364 = vunpack.c.l.b16 %v287
        %v365 = vunpack.c.l.b16 %v288
        %v366 = vunpack.c.l.b16 %v289
        %v367 = vunpack.c.l.b16 %v290
        %v368 = vunpack.c.l.b16 %v291
        %v369 = vunpack.c.l.b16 %v292
        %v370 = vunpack.c.l.b16 %v293
        %v371 = vunpack.c.l.b16 %v294
        %v372 = vunpack.c.l.b16 %v295
        %v373 = vunpack.c.l.b16 %v296
        %v374 = vunpack.c.l.b16 %v297
        %v375 = vunpack.c.l.b16 %v298
        %v376 = vunpack.c.l.b16 %v299
        %v377 = vunpack.c.l.b16 %v300
        %v378 = vunpack.c.l.b16 %v301
        %v379 = vunpack.c.l.b16 %v302
        %v380 = vunpack.c.l.b16 %v303
        %v381 = vunpack.c.l.b16 %v304
        %v382 = vunpack.c.l.b16 %v305
        %v383 = vunpack.c.l.b16 %v306
        %v384 = vunpack.c.l.b16 %v307
        %v385 = vunpack.c.l.b16 %v308
        %v386 = vunpack.c.l.b16 %v309
        %v387 = vunpack.c.l.b16 %v310
        %v388 = vunpack.c.l.b16 %v312
        %v389 = vpack.c.b16 %v353, %v352
        %v390 = vpack.c.b16 %v355, %v354
        %v391 = vpack.c.b16 %v357, %v356
        %v392 = vpack.c.b16 %v359, %v358
        %v393 = vpack.c.b16 %v361, %v360
        %v394 = vpack.c.b16 %v363, %v362
        %v395 = vpack.c.b16 %v365, %v364
        %v396 = vpack.c.b16 %v367, %v366
        %v397 = vpack.c.b16 %v369, %v368
        %v398 = vpack.c.b16 %v371, %v370
        %v399 = vpack.c.b16 %v373, %v372
        %v400 = vpack.c.b16 %v375, %v374
        %v401 = vpack.c.b16 %v377, %v376
        %v402 = vpack.c.b16 %v379, %v378
        %v403 = vpack.c.b16 %v381, %v380
        %v404 = vpack.c.b16 %v383, %v382
        %v405 = vpack.c.b16 %v385, %v384
        %v406 = vpack.c.b16 %v387, %v386
        %v407 = vpack.c.b16 %v388, %v388
        %vm408 = vsmask.f32 7424
        %v410 = vshrl.u32 %v389, 16
        %v412 = vshll.u32 %v389, 16
        %v414 = vrot.slane %v412, 1
        %v415 = vor.u32 %v410, %v414
        %v417 = vshll.u32 %v390, 16
        %v419 = vrot.slane %v417, 1
        %v420 = vsel %vm408, %v415, %v419
        %v421 = vshrl.u32 %v390, 16
        %v423 = vor.u32 %v421, %v419
        %v425 = vshll.u32 %v391, 16
        %v427 = vrot.slane %v425, 1
        %v428 = vsel %vm408, %v423, %v427
        %v429 = vshrl.u32 %v391, 16
        %v431 = vor.u32 %v429, %v427
        %v433 = vshll.u32 %v392, 16
        %v435 = vrot.slane %v433, 1
        %v436 = vsel %vm408, %v431, %v435
        %v437 = vshrl.u32 %v392, 16
        %v439 = vor.u32 %v437, %v435
        %v441 = vshll.u32 %v393, 16
        %v443 = vrot.slane %v441, 1
        %v444 = vsel %vm408, %v439, %v443
        %v445 = vshrl.u32 %v393, 16
        %v447 = vor.u32 %v445, %v443
        %v449 = vshll.u32 %v394, 16
        %v451 = vrot.slane %v449, 1
        %v452 = vsel %vm408, %v447, %v451
        %v453 = vshrl.u32 %v394, 16
        %v455 = vor.u32 %v453, %v451
        %v457 = vshll.u32 %v395, 16
        %v459 = vrot.slane %v457, 1
        %v460 = vsel %vm408, %v455, %v459
        %v461 = vshrl.u32 %v395, 16
        %v463 = vor.u32 %v461, %v459
        %v465 = vshll.u32 %v396, 16
        %v467 = vrot.slane %v465, 1
        %v468 = vsel %vm408, %v463, %v467
        %v469 = vshrl.u32 %v396, 16
        %v471 = vor.u32 %v469, %v467
        %v473 = vshll.u32 %v397, 16
        %v475 = vrot.slane %v473, 1
        %v476 = vsel %vm408, %v471, %v475
        %v477 = vshrl.u32 %v397, 16
        %v479 = vor.u32 %v477, %v475
        %v481 = vshll.u32 %v398, 16
        %v483 = vrot.slane %v481, 1
        %v484 = vsel %vm408, %v479, %v483
        %v485 = vshrl.u32 %v398, 16
        %v487 = vor.u32 %v485, %v483
        %v489 = vshll.u32 %v399, 16
        %v491 = vrot.slane %v489, 1
        %v492 = vsel %vm408, %v487, %v491
        %v493 = vshrl.u32 %v399, 16
        %v495 = vor.u32 %v493, %v491
        %v497 = vshll.u32 %v400, 16
        %v499 = vrot.slane %v497, 1
        %v500 = vsel %vm408, %v495, %v499
        %v501 = vshrl.u32 %v400, 16
        %v503 = vor.u32 %v501, %v499
        %v505 = vshll.u32 %v401, 16
        %v507 = vrot.slane %v505, 1
        %v508 = vsel %vm408, %v503, %v507
        %v509 = vshrl.u32 %v401, 16
        %v511 = vor.u32 %v509, %v507
        %v513 = vshll.u32 %v402, 16
        %v515 = vrot.slane %v513, 1
        %v516 = vsel %vm408, %v511, %v515
        %v517 = vshrl.u32 %v402, 16
        %v519 = vor.u32 %v517, %v515
        %v521 = vshll.u32 %v403, 16
        %v523 = vrot.slane %v521, 1
        %v524 = vsel %vm408, %v519, %v523
        %v525 = vshrl.u32 %v403, 16
        %v527 = vor.u32 %v525, %v523
        %v529 = vshll.u32 %v404, 16
        %v531 = vrot.slane %v529, 1
        %v532 = vsel %vm408, %v527, %v531
        %v533 = vshrl.u32 %v404, 16
        %v535 = vor.u32 %v533, %v531
        %v537 = vshll.u32 %v405, 16
        %v539 = vrot.slane %v537, 1
        %v540 = vsel %vm408, %v535, %v539
        %v541 = vshrl.u32 %v405, 16
        %v543 = vor.u32 %v541, %v539
        %v545 = vshll.u32 %v406, 16
        %v547 = vrot.slane %v545, 1
        %v548 = vsel %vm408, %v543, %v547
        %v549 = vshrl.u32 %v406, 16
        %v551 = vor.u32 %v549, %v547
        %v553 = vshll.u32 %v407, 16
        %v555 = vrot.slane %v553, 1
        %v556 = vsel %vm408, %v551, %v555
        %vm557 = vcmask 31744
        %v559 = vsel %vm557, %v420, 0
        %v562 = vsel %vm557, %v428, 0
        %v565 = vsel %vm557, %v436, 0
        %v568 = vsel %vm557, %v444, 0
        %v571 = vsel %vm557, %v452, 0
        %v574 = vsel %vm557, %v460, 0
        %v577 = vsel %vm557, %v468, 0
        %v580 = vsel %vm557, %v476, 0
        %v583 = vsel %vm557, %v484, 0
        %v586 = vsel %vm557, %v492, 0
        %v589 = vsel %vm557, %v500, 0
        %v592 = vsel %vm557, %v508, 0
        %v595 = vsel %vm557, %v516, 0
        %v598 = vsel %vm557, %v524, 0
        %v601 = vsel %vm557, %v532, 0
        %v604 = vsel %vm557, %v540, 0
        %v607 = vsel %vm557, %v548, 0
        %v610 = vsel %vm557, %v556, 0
        %vm612 = vcmask 1041408
        %v614 = vsel %vm612, %v314, 0
        %616 = vmatprep.subr.bf16.mxu0 0
        %617 = vmatpush1.bf16.msra.mxu0 %v614
        %618 = vmatprep.subr.bf16.mxu0 0
        %619 = vmatpush1.bf16.msra.mxu0 0
        %620 = vmatprep.subr.bf16.mxu0 0
        %621 = vmatpush1.bf16.msra.mxu0 0
        %622 = vmatprep.subr.bf16.mxu0 0
        %623 = vmatpush1.bf16.msra.mxu0 0
        %624 = vmatprep.subr.bf16.mxu0 0
        %625 = vmatpush1.bf16.msra.mxu0 0
        %626 = vmatprep.subr.bf16.mxu0 0
        %627 = vmatpush1.bf16.msra.mxu0 0
        %628 = vmatprep.subr.bf16.mxu0 0
        %629 = vmatpush1.bf16.msra.mxu0 0
        %630 = vmatprep.subr.bf16.mxu0 0
        %631 = vmatpush1.bf16.msra.mxu0 0
        %632 = vmatprep.subr.bf16.mxu0 0
        %633 = vmatpush1.bf16.msra.mxu0 0
        %634 = vmatprep.subr.bf16.mxu0 0
        %635 = vmatpush1.bf16.msra.mxu0 0
        %636 = vmatprep.subr.bf16.mxu0 0
        %637 = vmatpush1.bf16.msra.mxu0 0
        %638 = vmatprep.subr.bf16.mxu0 0
        %639 = vmatpush1.bf16.msra.mxu0 0
        %640 = vmatprep.subr.bf16.mxu0 0
        %641 = vmatpush1.bf16.msra.mxu0 0
        %642 = vmatprep.subr.bf16.mxu0 0
        %643 = vmatpush1.bf16.msra.mxu0 0
        %644 = vmatprep.subr.bf16.mxu0 0
        %645 = vmatpush1.bf16.msra.mxu0 0
        %646 = vmatprep.subr.bf16.mxu0 0
        %647 = vmatpush1.bf16.msra.mxu0 0
        %648 = vmatprep.mubr.bf16.mxu0 0
        %649 = vmatmul.mubr.bf16.gmra.mrb[0].mxu0 %v559
        %v650 = vpop.f32.mrb[0].mxu0
        %v651 = vadd.f32 0.0, %v650
        %v652 = vpop.f32.mrb[0].mxu0
        %v653 = vpop.f32.mrb[0].mxu0
        %v654 = vadd.f32 0.0, %v653
        %v655 = vpop.f32.mrb[0].mxu0
        %656 = vmatprep.mubr.bf16.mxu0 0
        %657 = vmatmul.mubr.bf16.gmra.mrb[0].mxu0 %v562
        %v658 = vpop.f32.mrb[0].mxu0
        %v659 = vadd.f32 0.0, %v658
        %v660 = vpop.f32.mrb[0].mxu0
        %v661 = vpop.f32.mrb[0].mxu0
        %v662 = vadd.f32 0.0, %v661
        %v663 = vpop.f32.mrb[0].mxu0
        %664 = vmatprep.mubr.bf16.mxu0 0
        %665 = vmatmul.mubr.bf16.gmra.mrb[0].mxu0 %v565
        %v666 = vpop.f32.mrb[0].mxu0
        %v667 = vadd.f32 0.0, %v666
        %v668 = vpop.f32.mrb[0].mxu0
        %v669 = vpop.f32.mrb[0].mxu0
        %v670 = vadd.f32 0.0, %v669
        %v671 = vpop.f32.mrb[0].mxu0
        %672 = vmatprep.mubr.bf16.mxu0 0
        %673 = vmatmul.mubr.bf16.gmra.mrb[0].mxu0 %v568
        %v674 = vpop.f32.mrb[0].mxu0
        %v675 = vadd.f32 0.0, %v674
        %v676 = vpop.f32.mrb[0].mxu0
        %v677 = vpop.f32.mrb[0].mxu0
        %v678 = vadd.f32 0.0, %v677
        %v679 = vpop.f32.mrb[0].mxu0
        %680 = vmatprep.mubr.bf16.mxu0 0
        %681 = vmatmul.mubr.bf16.gmra.mrb[0].mxu0 %v571
        %v682 = vpop.f32.mrb[0].mxu0
        %v683 = vadd.f32 0.0, %v682
        %v684 = vpop.f32.mrb[0].mxu0
        %v685 = vpop.f32.mrb[0].mxu0
        %v686 = vadd.f32 0.0, %v685
        %v687 = vpop.f32.mrb[0].mxu0
        %688 = vmatprep.mubr.bf16.mxu0 0
        %689 = vmatmul.mubr.bf16.gmra.mrb[0].mxu0 %v574
        %v690 = vpop.f32.mrb[0].mxu0
        %v691 = vadd.f32 0.0, %v690
        %v692 = vpop.f32.mrb[0].mxu0
        %v693 = vpop.f32.mrb[0].mxu0
        %v694 = vadd.f32 0.0, %v693
        %v695 = vpop.f32.mrb[0].mxu0
        %696 = vmatprep.mubr.bf16.mxu0 0
        %697 = vmatmul.mubr.bf16.gmra.mrb[0].mxu0 %v577
        %v698 = vpop.f32.mrb[0].mxu0
        %v699 = vadd.f32 0.0, %v698
        %v700 = vpop.f32.mrb[0].mxu0
        %v701 = vpop.f32.mrb[0].mxu0
        %v702 = vadd.f32 0.0, %v701
        %v703 = vpop.f32.mrb[0].mxu0
        %704 = vmatprep.mubr.bf16.mxu0 0
        %705 = vmatmul.mubr.bf16.gmra.mrb[0].mxu0 %v580
        %v706 = vpop.f32.mrb[0].mxu0
        %v707 = vadd.f32 0.0, %v706
        %v708 = vpop.f32.mrb[0].mxu0
        %v709 = vpop.f32.mrb[0].mxu0
        %v710 = vadd.f32 0.0, %v709
        %v711 = vpop.f32.mrb[0].mxu0
        %712 = vmatprep.mubr.bf16.mxu0 0
        %713 = vmatmul.mubr.bf16.gmra.mrb[0].mxu0 %v583
        %v714 = vpop.f32.mrb[0].mxu0
        %v715 = vadd.f32 0.0, %v714
        %v716 = vpop.f32.mrb[0].mxu0
        %v717 = vpop.f32.mrb[0].mxu0
        %v718 = vadd.f32 0.0, %v717
        %v719 = vpop.f32.mrb[0].mxu0
        %720 = vmatprep.mubr.bf16.mxu0 0
        %721 = vmatmul.mubr.bf16.gmra.mrb[0].mxu0 %v586
        %v722 = vpop.f32.mrb[0].mxu0
        %v723 = vadd.f32 0.0, %v722
        %v724 = vpop.f32.mrb[0].mxu0
        %v725 = vpop.f32.mrb[0].mxu0
        %v726 = vadd.f32 0.0, %v725
        %v727 = vpop.f32.mrb[0].mxu0
        %728 = vmatprep.mubr.bf16.mxu0 0
        %729 = vmatmul.mubr.bf16.gmra.mrb[0].mxu0 %v589
        %v730 = vpop.f32.mrb[0].mxu0
        %v731 = vadd.f32 0.0, %v730
        %v732 = vpop.f32.mrb[0].mxu0
        %v733 = vpop.f32.mrb[0].mxu0
        %v734 = vadd.f32 0.0, %v733
        %v735 = vpop.f32.mrb[0].mxu0
        %736 = vmatprep.mubr.bf16.mxu0 0
        %737 = vmatmul.mubr.bf16.gmra.mrb[0].mxu0 %v592
        %v738 = vpop.f32.mrb[0].mxu0
        %v739 = vadd.f32 0.0, %v738
        %v740 = vpop.f32.mrb[0].mxu0
        %v741 = vpop.f32.mrb[0].mxu0
        %v742 = vadd.f32 0.0, %v741
        %v743 = vpop.f32.mrb[0].mxu0
        %744 = vmatprep.mubr.bf16.mxu0 0
        %745 = vmatmul.mubr.bf16.gmra.mrb[0].mxu0 %v595
        %v746 = vpop.f32.mrb[0].mxu0
        %v747 = vadd.f32 0.0, %v746
        %v748 = vpop.f32.mrb[0].mxu0
        %v749 = vpop.f32.mrb[0].mxu0
        %v750 = vadd.f32 0.0, %v749
        %v751 = vpop.f32.mrb[0].mxu0
        %752 = vmatprep.mubr.bf16.mxu0 0
        %753 = vmatmul.mubr.bf16.gmra.mrb[0].mxu0 %v598
        %v754 = vpop.f32.mrb[0].mxu0
        %v755 = vadd.f32 0.0, %v754
        %v756 = vpop.f32.mrb[0].mxu0
        %v757 = vpop.f32.mrb[0].mxu0
        %v758 = vadd.f32 0.0, %v757
        %v759 = vpop.f32.mrb[0].mxu0
        %760 = vmatprep.mubr.bf16.mxu0 0
        %761 = vmatmul.mubr.bf16.gmra.mrb[0].mxu0 %v601
        %v762 = vpop.f32.mrb[0].mxu0
        %v763 = vadd.f32 0.0, %v762
        %v764 = vpop.f32.mrb[0].mxu0
        %v765 = vpop.f32.mrb[0].mxu0
        %v766 = vadd.f32 0.0, %v765
        %v767 = vpop.f32.mrb[0].mxu0
        %768 = vmatprep.mubr.bf16.mxu0 0
        %769 = vmatmul.mubr.bf16.gmra.mrb[0].mxu0 %v604
        %v770 = vpop.f32.mrb[0].mxu0
        %v771 = vadd.f32 0.0, %v770
        %v772 = vpop.f32.mrb[0].mxu0
        %v773 = vpop.f32.mrb[0].mxu0
        %v774 = vadd.f32 0.0, %v773
        %v775 = vpop.f32.mrb[0].mxu0
        %776 = vmatprep.mubr.bf16.mxu0 0
        %777 = vmatmul.mubr.bf16.gmra.mrb[0].mxu0 %v607
        %v778 = vpop.f32.mrb[0].mxu0
        %v779 = vadd.f32 0.0, %v778
        %v780 = vpop.f32.mrb[0].mxu0
        %v781 = vpop.f32.mrb[0].mxu0
        %v782 = vadd.f32 0.0, %v781
        %v783 = vpop.f32.mrb[0].mxu0
        %784 = vmatprep.mubr.bf16.mxu0 0
        %785 = vmatmul.mubr.bf16.gmra.mrb[0].mxu0 %v610
        %v786 = vpop.f32.mrb[0].mxu0
        %v787 = vadd.f32 0.0, %v786
        %v788 = vpop.f32.mrb[0].mxu0
        %v789 = vpop.f32.mrb[0].mxu0
        %v790 = vadd.f32 0.0, %v789
        %v791 = vpop.f32.mrb[0].mxu0
        %792 = vdwg.mxu0
        %v793 = vsel %vm557, %v389, 0
        %v795 = vsel %vm557, %v390, 0
        %v797 = vsel %vm557, %v391, 0
        %v799 = vsel %vm557, %v392, 0
        %v801 = vsel %vm557, %v393, 0
        %v803 = vsel %vm557, %v394, 0
        %v805 = vsel %vm557, %v395, 0
        %v807 = vsel %vm557, %v396, 0
        %v809 = vsel %vm557, %v397, 0
        %v811 = vsel %vm557, %v398, 0
        %v813 = vsel %vm557, %v399, 0
        %v815 = vsel %vm557, %v400, 0
        %v817 = vsel %vm557, %v401, 0
        %v819 = vsel %vm557, %v402, 0
        %v821 = vsel %vm557, %v403, 0
        %v823 = vsel %vm557, %v404, 0
        %v825 = vsel %vm557, %v405, 0
        %v827 = vsel %vm557, %v406, 0
        %v830 = vsel %vm612, %v311, 0
        %832 = vmatprep.subr.bf16.mxu0 0
        %833 = vmatpush1.bf16.msra.mxu0 %v830
        %834 = vmatprep.subr.bf16.mxu0 0
        %835 = vmatpush1.bf16.msra.mxu0 0
        %836 = vmatprep.subr.bf16.mxu0 0
        %837 = vmatpush1.bf16.msra.mxu0 0
        %838 = vmatprep.subr.bf16.mxu0 0
        %839 = vmatpush1.bf16.msra.mxu0 0
        %840 = vmatprep.subr.bf16.mxu0 0
        %841 = vmatpush1.bf16.msra.mxu0 0
        %842 = vmatprep.subr.bf16.mxu0 0
        %843 = vmatpush1.bf16.msra.mxu0 0
        %844 = vmatprep.subr.bf16.mxu0 0
        %845 = vmatpush1.bf16.msra.mxu0 0
        %846 = vmatprep.subr.bf16.mxu0 0
        %847 = vmatpush1.bf16.msra.mxu0 0
        %848 = vmatprep.subr.bf16.mxu0 0
        %849 = vmatpush1.bf16.msra.mxu0 0
        %850 = vmatprep.subr.bf16.mxu0 0
        %851 = vmatpush1.bf16.msra.mxu0 0
        %852 = vmatprep.subr.bf16.mxu0 0
        %853 = vmatpush1.bf16.msra.mxu0 0
        %854 = vmatprep.subr.bf16.mxu0 0
        %855 = vmatpush1.bf16.msra.mxu0 0
        %856 = vmatprep.subr.bf16.mxu0 0
        %857 = vmatpush1.bf16.msra.mxu0 0
        %858 = vmatprep.subr.bf16.mxu0 0
        %859 = vmatpush1.bf16.msra.mxu0 0
        %860 = vmatprep.subr.bf16.mxu0 0
        %861 = vmatpush1.bf16.msra.mxu0 0
        %862 = vmatprep.subr.bf16.mxu0 0
        %863 = vmatpush1.bf16.msra.mxu0 0
        %864 = vmatprep.mubr.bf16.mxu0 0
        %865 = vmatmul.mubr.bf16.gmra.mrb[0].mxu0 %v793
        %v866 = vpop.f32.mrb[0].mxu0
        %v867 = vadd.f32 %v651, %v866
        %v868 = vpop.f32.mrb[0].mxu0
        %v869 = vpop.f32.mrb[0].mxu0
        %v870 = vadd.f32 %v654, %v869
        %v871 = vpop.f32.mrb[0].mxu0
        %872 = vmatprep.mubr.bf16.mxu0 0
        %873 = vmatmul.mubr.bf16.gmra.mrb[0].mxu0 %v795
        %v874 = vpop.f32.mrb[0].mxu0
        %v875 = vadd.f32 %v659, %v874
        %v876 = vpop.f32.mrb[0].mxu0
        %v877 = vpop.f32.mrb[0].mxu0
        %v878 = vadd.f32 %v662, %v877
        %v879 = vpop.f32.mrb[0].mxu0
        %880 = vmatprep.mubr.bf16.mxu0 0
        %881 = vmatmul.mubr.bf16.gmra.mrb[0].mxu0 %v797
        %v882 = vpop.f32.mrb[0].mxu0
        %v883 = vadd.f32 %v667, %v882
        %v884 = vpop.f32.mrb[0].mxu0
        %v885 = vpop.f32.mrb[0].mxu0
        %v886 = vadd.f32 %v670, %v885
        %v887 = vpop.f32.mrb[0].mxu0
        %888 = vmatprep.mubr.bf16.mxu0 0
        %889 = vmatmul.mubr.bf16.gmra.mrb[0].mxu0 %v799
        %v890 = vpop.f32.mrb[0].mxu0
        %v891 = vadd.f32 %v675, %v890
        %v892 = vpop.f32.mrb[0].mxu0
        %v893 = vpop.f32.mrb[0].mxu0
        %v894 = vadd.f32 %v678, %v893
        %v895 = vpop.f32.mrb[0].mxu0
        %896 = vmatprep.mubr.bf16.mxu0 0
        %897 = vmatmul.mubr.bf16.gmra.mrb[0].mxu0 %v801
        %v898 = vpop.f32.mrb[0].mxu0
        %v899 = vadd.f32 %v683, %v898
        %v900 = vpop.f32.mrb[0].mxu0
        %v901 = vpop.f32.mrb[0].mxu0
        %v902 = vadd.f32 %v686, %v901
        %v903 = vpop.f32.mrb[0].mxu0
        %904 = vmatprep.mubr.bf16.mxu0 0
        %905 = vmatmul.mubr.bf16.gmra.mrb[0].mxu0 %v803
        %v906 = vpop.f32.mrb[0].mxu0
        %v907 = vadd.f32 %v691, %v906
        %v908 = vpop.f32.mrb[0].mxu0
        %v909 = vpop.f32.mrb[0].mxu0
        %v910 = vadd.f32 %v694, %v909
        %v911 = vpop.f32.mrb[0].mxu0
        %912 = vmatprep.mubr.bf16.mxu0 0
        %913 = vmatmul.mubr.bf16.gmra.mrb[0].mxu0 %v805
        %v914 = vpop.f32.mrb[0].mxu0
        %v915 = vadd.f32 %v699, %v914
        %v916 = vpop.f32.mrb[0].mxu0
        %v917 = vpop.f32.mrb[0].mxu0
        %v918 = vadd.f32 %v702, %v917
        %v919 = vpop.f32.mrb[0].mxu0
        %920 = vmatprep.mubr.bf16.mxu0 0
        %921 = vmatmul.mubr.bf16.gmra.mrb[0].mxu0 %v807
        %v922 = vpop.f32.mrb[0].mxu0
        %v923 = vadd.f32 %v707, %v922
        %v924 = vpop.f32.mrb[0].mxu0
        %v925 = vpop.f32.mrb[0].mxu0
        %v926 = vadd.f32 %v710, %v925
        %v927 = vpop.f32.mrb[0].mxu0
        %928 = vmatprep.mubr.bf16.mxu0 0
        %929 = vmatmul.mubr.bf16.gmra.mrb[0].mxu0 %v809
        %v930 = vpop.f32.mrb[0].mxu0
        %v931 = vadd.f32 %v715, %v930
        %v932 = vpop.f32.mrb[0].mxu0
        %v933 = vpop.f32.mrb[0].mxu0
        %v934 = vadd.f32 %v718, %v933
        %v935 = vpop.f32.mrb[0].mxu0
        %936 = vmatprep.mubr.bf16.mxu0 0
        %937 = vmatmul.mubr.bf16.gmra.mrb[0].mxu0 %v811
        %v938 = vpop.f32.mrb[0].mxu0
        %v939 = vadd.f32 %v723, %v938
        %v940 = vpop.f32.mrb[0].mxu0
        %v941 = vpop.f32.mrb[0].mxu0
        %v942 = vadd.f32 %v726, %v941
        %v943 = vpop.f32.mrb[0].mxu0
        %944 = vmatprep.mubr.bf16.mxu0 0
        %945 = vmatmul.mubr.bf16.gmra.mrb[0].mxu0 %v813
        %v946 = vpop.f32.mrb[0].mxu0
        %v947 = vadd.f32 %v731, %v946
        %v948 = vpop.f32.mrb[0].mxu0
        %v949 = vpop.f32.mrb[0].mxu0
        %v950 = vadd.f32 %v734, %v949
        %v951 = vpop.f32.mrb[0].mxu0
        %952 = vmatprep.mubr.bf16.mxu0 0
        %953 = vmatmul.mubr.bf16.gmra.mrb[0].mxu0 %v815
        %v954 = vpop.f32.mrb[0].mxu0
        %v955 = vadd.f32 %v739, %v954
        %v956 = vpop.f32.mrb[0].mxu0
        %v957 = vpop.f32.mrb[0].mxu0
        %v958 = vadd.f32 %v742, %v957
        %v959 = vpop.f32.mrb[0].mxu0
        %960 = vmatprep.mubr.bf16.mxu0 0
        %961 = vmatmul.mubr.bf16.gmra.mrb[0].mxu0 %v817
        %v962 = vpop.f32.mrb[0].mxu0
        %v963 = vadd.f32 %v747, %v962
        %v964 = vpop.f32.mrb[0].mxu0
        %v965 = vpop.f32.mrb[0].mxu0
        %v966 = vadd.f32 %v750, %v965
        %v967 = vpop.f32.mrb[0].mxu0
        %968 = vmatprep.mubr.bf16.mxu0 0
        %969 = vmatmul.mubr.bf16.gmra.mrb[0].mxu0 %v819
        %v970 = vpop.f32.mrb[0].mxu0
        %v971 = vadd.f32 %v755, %v970
        %v972 = vpop.f32.mrb[0].mxu0
        %v973 = vpop.f32.mrb[0].mxu0
        %v974 = vadd.f32 %v758, %v973
        %v975 = vpop.f32.mrb[0].mxu0
        %976 = vmatprep.mubr.bf16.mxu0 0
        %977 = vmatmul.mubr.bf16.gmra.mrb[0].mxu0 %v821
        %v978 = vpop.f32.mrb[0].mxu0
        %v979 = vadd.f32 %v763, %v978
        %v980 = vpop.f32.mrb[0].mxu0
        %v981 = vpop.f32.mrb[0].mxu0
        %v982 = vadd.f32 %v766, %v981
        %v983 = vpop.f32.mrb[0].mxu0
        %984 = vmatprep.mubr.bf16.mxu0 0
        %985 = vmatmul.mubr.bf16.gmra.mrb[0].mxu0 %v823
        %v986 = vpop.f32.mrb[0].mxu0
        %v987 = vadd.f32 %v771, %v986
        %v988 = vpop.f32.mrb[0].mxu0
        %v989 = vpop.f32.mrb[0].mxu0
        %v990 = vadd.f32 %v774, %v989
        %v991 = vpop.f32.mrb[0].mxu0
        %992 = vmatprep.mubr.bf16.mxu0 0
        %993 = vmatmul.mubr.bf16.gmra.mrb[0].mxu0 %v825
        %v994 = vpop.f32.mrb[0].mxu0
        %v995 = vadd.f32 %v779, %v994
        %v996 = vpop.f32.mrb[0].mxu0
        %v997 = vpop.f32.mrb[0].mxu0
        %v998 = vadd.f32 %v782, %v997
        %v999 = vpop.f32.mrb[0].mxu0
        %1000 = vmatprep.mubr.bf16.mxu0 0
        %1001 = vmatmul.mubr.bf16.gmra.mrb[0].mxu0 %v827
        %v1002 = vpop.f32.mrb[0].mxu0
        %v1003 = vadd.f32 %v787, %v1002
        %v1004 = vpop.f32.mrb[0].mxu0
        %v1005 = vpop.f32.mrb[0].mxu0
        %v1006 = vadd.f32 %v790, %v1005
        %v1007 = vpop.f32.mrb[0].mxu0
        %1008 = vdwg.mxu0
        %v1009 = vld [vmem:[%s269] sm:$0xe]
        %s1010 = scalar_lea.vmem %s273, 4
        %v1011 = vld [vmem:[%s1010] sm:$0x3]
        %v1013 = vunpack.c.l.b16 %v1009
        %v1014 = vpack.c.b16 %v353, %v1013
        %vm1015 = vcmask 1046528
        %v1016 = vrot.slane %v1014, 1
        %v1017 = vrot.slane %v390, 1
        %v1018 = vsel %vm1015, %v1016, %v1017
        %v1019 = vrot.slane %v391, 1
        %v1020 = vsel %vm1015, %v1017, %v1019
        %v1021 = vrot.slane %v392, 1
        %v1022 = vsel %vm1015, %v1019, %v1021
        %v1023 = vrot.slane %v393, 1
        %v1024 = vsel %vm1015, %v1021, %v1023
        %v1025 = vrot.slane %v394, 1
        %v1026 = vsel %vm1015, %v1023, %v1025
        %v1027 = vrot.slane %v395, 1
        %v1028 = vsel %vm1015, %v1025, %v1027
        %v1029 = vrot.slane %v396, 1
        %v1030 = vsel %vm1015, %v1027, %v1029
        %v1031 = vrot.slane %v397, 1
        %v1032 = vsel %vm1015, %v1029, %v1031
        %v1033 = vrot.slane %v398, 1
        %v1034 = vsel %vm1015, %v1031, %v1033
        %v1035 = vrot.slane %v399, 1
        %v1036 = vsel %vm1015, %v1033, %v1035
        %v1037 = vrot.slane %v400, 1
        %v1038 = vsel %vm1015, %v1035, %v1037
        %v1039 = vrot.slane %v401, 1
        %v1040 = vsel %vm1015, %v1037, %v1039
        %v1041 = vrot.slane %v402, 1
        %v1042 = vsel %vm1015, %v1039, %v1041
        %v1043 = vrot.slane %v403, 1
        %v1044 = vsel %vm1015, %v1041, %v1043
        %v1045 = vrot.slane %v404, 1
        %v1046 = vsel %vm1015, %v1043, %v1045
        %v1047 = vrot.slane %v405, 1
        %v1048 = vsel %vm1015, %v1045, %v1047
        %v1049 = vrot.slane %v406, 1
        %v1050 = vsel %vm1015, %v1047, %v1049
        %v1051 = vrot.slane %v407, 1
        %v1052 = vsel %vm1015, %v1049, %v1051
        %v1054 = vsel %vm557, %v1018, 0
        %v1057 = vsel %vm557, %v1020, 0
        %v1060 = vsel %vm557, %v1022, 0
        %v1063 = vsel %vm557, %v1024, 0
        %v1066 = vsel %vm557, %v1026, 0
        %v1069 = vsel %vm557, %v1028, 0
        %v1072 = vsel %vm557, %v1030, 0
        %v1075 = vsel %vm557, %v1032, 0
        %v1078 = vsel %vm557, %v1034, 0
        %v1081 = vsel %vm557, %v1036, 0
        %v1084 = vsel %vm557, %v1038, 0
        %v1087 = vsel %vm557, %v1040, 0
        %v1090 = vsel %vm557, %v1042, 0
        %v1093 = vsel %vm557, %v1044, 0
        %v1096 = vsel %vm557, %v1046, 0
        %v1099 = vsel %vm557, %v1048, 0
        %v1102 = vsel %vm557, %v1050, 0
        %v1105 = vsel %vm557, %v1052, 0
        %v1108 = vsel %vm612, %v1011, 0
        %1110 = vmatprep.subr.bf16.mxu0 0
        %1111 = vmatpush1.bf16.msra.mxu0 %v1108
        %1112 = vmatprep.subr.bf16.mxu0 0
        %1113 = vmatpush1.bf16.msra.mxu0 0
        %1114 = vmatprep.subr.bf16.mxu0 0
        %1115 = vmatpush1.bf16.msra.mxu0 0
        %1116 = vmatprep.subr.bf16.mxu0 0
        %1117 = vmatpush1.bf16.msra.mxu0 0
        %1118 = vmatprep.subr.bf16.mxu0 0
        %1119 = vmatpush1.bf16.msra.mxu0 0
        %1120 = vmatprep.subr.bf16.mxu0 0
        %1121 = vmatpush1.bf16.msra.mxu0 0
        %1122 = vmatprep.subr.bf16.mxu0 0
        %1123 = vmatpush1.bf16.msra.mxu0 0
        %1124 = vmatprep.subr.bf16.mxu0 0
        %1125 = vmatpush1.bf16.msra.mxu0 0
        %1126 = vmatprep.subr.bf16.mxu0 0
        %1127 = vmatpush1.bf16.msra.mxu0 0
        %1128 = vmatprep.subr.bf16.mxu0 0
        %1129 = vmatpush1.bf16.msra.mxu0 0
        %1130 = vmatprep.subr.bf16.mxu0 0
        %1131 = vmatpush1.bf16.msra.mxu0 0
        %1132 = vmatprep.subr.bf16.mxu0 0
        %1133 = vmatpush1.bf16.msra.mxu0 0
        %1134 = vmatprep.subr.bf16.mxu0 0
        %1135 = vmatpush1.bf16.msra.mxu0 0
        %1136 = vmatprep.subr.bf16.mxu0 0
        %1137 = vmatpush1.bf16.msra.mxu0 0
        %1138 = vmatprep.subr.bf16.mxu0 0
        %1139 = vmatpush1.bf16.msra.mxu0 0
        %1140 = vmatprep.subr.bf16.mxu0 0
        %1141 = vmatpush1.bf16.msra.mxu0 0
        %1142 = vmatprep.mubr.bf16.mxu0 0
        %1143 = vmatmul.mubr.bf16.gmra.mrb[0].mxu0 %v1054
        %v1144 = vpop.f32.mrb[0].mxu0
        %v1145 = vadd.f32 0.0, %v1144
        %v1146 = vpop.f32.mrb[0].mxu0
        %v1147 = vpop.f32.mrb[0].mxu0
        %v1148 = vadd.f32 0.0, %v1147
        %v1149 = vpop.f32.mrb[0].mxu0
        %1150 = vmatprep.mubr.bf16.mxu0 0
        %1151 = vmatmul.mubr.bf16.gmra.mrb[0].mxu0 %v1057
        %v1152 = vpop.f32.mrb[0].mxu0
        %v1153 = vadd.f32 0.0, %v1152
        %v1154 = vpop.f32.mrb[0].mxu0
        %v1155 = vpop.f32.mrb[0].mxu0
        %v1156 = vadd.f32 0.0, %v1155
        %v1157 = vpop.f32.mrb[0].mxu0
        %1158 = vmatprep.mubr.bf16.mxu0 0
        %1159 = vmatmul.mubr.bf16.gmra.mrb[0].mxu0 %v1060
        %v1160 = vpop.f32.mrb[0].mxu0
        %v1161 = vadd.f32 0.0, %v1160
        %v1162 = vpop.f32.mrb[0].mxu0
        %v1163 = vpop.f32.mrb[0].mxu0
        %v1164 = vadd.f32 0.0, %v1163
        %v1165 = vpop.f32.mrb[0].mxu0
        %1166 = vmatprep.mubr.bf16.mxu0 0
        %1167 = vmatmul.mubr.bf16.gmra.mrb[0].mxu0 %v1063
        %v1168 = vpop.f32.mrb[0].mxu0
        %v1169 = vadd.f32 0.0, %v1168
        %v1170 = vpop.f32.mrb[0].mxu0
        %v1171 = vpop.f32.mrb[0].mxu0
        %v1172 = vadd.f32 0.0, %v1171
        %v1173 = vpop.f32.mrb[0].mxu0
        %1174 = vmatprep.mubr.bf16.mxu0 0
        %1175 = vmatmul.mubr.bf16.gmra.mrb[0].mxu0 %v1066
        %v1176 = vpop.f32.mrb[0].mxu0
        %v1177 = vadd.f32 0.0, %v1176
        %v1178 = vpop.f32.mrb[0].mxu0
        %v1179 = vpop.f32.mrb[0].mxu0
        %v1180 = vadd.f32 0.0, %v1179
        %v1181 = vpop.f32.mrb[0].mxu0
        %1182 = vmatprep.mubr.bf16.mxu0 0
        %1183 = vmatmul.mubr.bf16.gmra.mrb[0].mxu0 %v1069
        %v1184 = vpop.f32.mrb[0].mxu0
        %v1185 = vadd.f32 0.0, %v1184
        %v1186 = vpop.f32.mrb[0].mxu0
        %v1187 = vpop.f32.mrb[0].mxu0
        %v1188 = vadd.f32 0.0, %v1187
        %v1189 = vpop.f32.mrb[0].mxu0
        %1190 = vmatprep.mubr.bf16.mxu0 0
        %1191 = vmatmul.mubr.bf16.gmra.mrb[0].mxu0 %v1072
        %v1192 = vpop.f32.mrb[0].mxu0
        %v1193 = vadd.f32 0.0, %v1192
        %v1194 = vpop.f32.mrb[0].mxu0
        %v1195 = vpop.f32.mrb[0].mxu0
        %v1196 = vadd.f32 0.0, %v1195
        %v1197 = vpop.f32.mrb[0].mxu0
        %1198 = vmatprep.mubr.bf16.mxu0 0
        %1199 = vmatmul.mubr.bf16.gmra.mrb[0].mxu0 %v1075
        %v1200 = vpop.f32.mrb[0].mxu0
        %v1201 = vadd.f32 0.0, %v1200
        %v1202 = vpop.f32.mrb[0].mxu0
        %v1203 = vpop.f32.mrb[0].mxu0
        %v1204 = vadd.f32 0.0, %v1203
        %v1205 = vpop.f32.mrb[0].mxu0
        %1206 = vmatprep.mubr.bf16.mxu0 0
        %1207 = vmatmul.mubr.bf16.gmra.mrb[0].mxu0 %v1078
        %v1208 = vpop.f32.mrb[0].mxu0
        %v1209 = vadd.f32 0.0, %v1208
        %v1210 = vpop.f32.mrb[0].mxu0
        %v1211 = vpop.f32.mrb[0].mxu0
        %v1212 = vadd.f32 0.0, %v1211
        %v1213 = vpop.f32.mrb[0].mxu0
        %1214 = vmatprep.mubr.bf16.mxu0 0
        %1215 = vmatmul.mubr.bf16.gmra.mrb[0].mxu0 %v1081
        %v1216 = vpop.f32.mrb[0].mxu0
        %v1217 = vadd.f32 0.0, %v1216
        %v1218 = vpop.f32.mrb[0].mxu0
        %v1219 = vpop.f32.mrb[0].mxu0
        %v1220 = vadd.f32 0.0, %v1219
        %v1221 = vpop.f32.mrb[0].mxu0
        %1222 = vmatprep.mubr.bf16.mxu0 0
        %1223 = vmatmul.mubr.bf16.gmra.mrb[0].mxu0 %v1084
        %v1224 = vpop.f32.mrb[0].mxu0
        %v1225 = vadd.f32 0.0, %v1224
        %v1226 = vpop.f32.mrb[0].mxu0
        %v1227 = vpop.f32.mrb[0].mxu0
        %v1228 = vadd.f32 0.0, %v1227
        %v1229 = vpop.f32.mrb[0].mxu0
        %1230 = vmatprep.mubr.bf16.mxu0 0
        %1231 = vmatmul.mubr.bf16.gmra.mrb[0].mxu0 %v1087
        %v1232 = vpop.f32.mrb[0].mxu0
        %v1233 = vadd.f32 0.0, %v1232
        %v1234 = vpop.f32.mrb[0].mxu0
        %v1235 = vpop.f32.mrb[0].mxu0
        %v1236 = vadd.f32 0.0, %v1235
        %v1237 = vpop.f32.mrb[0].mxu0
        %1238 = vmatprep.mubr.bf16.mxu0 0
        %1239 = vmatmul.mubr.bf16.gmra.mrb[0].mxu0 %v1090
        %v1240 = vpop.f32.mrb[0].mxu0
        %v1241 = vadd.f32 0.0, %v1240
        %v1242 = vpop.f32.mrb[0].mxu0
        %v1243 = vpop.f32.mrb[0].mxu0
        %v1244 = vadd.f32 0.0, %v1243
        %v1245 = vpop.f32.mrb[0].mxu0
        %1246 = vmatprep.mubr.bf16.mxu0 0
        %1247 = vmatmul.mubr.bf16.gmra.mrb[0].mxu0 %v1093
        %v1248 = vpop.f32.mrb[0].mxu0
        %v1249 = vadd.f32 0.0, %v1248
        %v1250 = vpop.f32.mrb[0].mxu0
        %v1251 = vpop.f32.mrb[0].mxu0
        %v1252 = vadd.f32 0.0, %v1251
        %v1253 = vpop.f32.mrb[0].mxu0
        %1254 = vmatprep.mubr.bf16.mxu0 0
        %1255 = vmatmul.mubr.bf16.gmra.mrb[0].mxu0 %v1096
        %v1256 = vpop.f32.mrb[0].mxu0
        %v1257 = vadd.f32 0.0, %v1256
        %v1258 = vpop.f32.mrb[0].mxu0
        %v1259 = vpop.f32.mrb[0].mxu0
        %v1260 = vadd.f32 0.0, %v1259
        %v1261 = vpop.f32.mrb[0].mxu0
        %1262 = vmatprep.mubr.bf16.mxu0 0
        %1263 = vmatmul.mubr.bf16.gmra.mrb[0].mxu0 %v1099
        %v1264 = vpop.f32.mrb[0].mxu0
        %v1265 = vadd.f32 0.0, %v1264
        %v1266 = vpop.f32.mrb[0].mxu0
        %v1267 = vpop.f32.mrb[0].mxu0
        %v1268 = vadd.f32 0.0, %v1267
        %v1269 = vpop.f32.mrb[0].mxu0
        %1270 = vmatprep.mubr.bf16.mxu0 0
        %1271 = vmatmul.mubr.bf16.gmra.mrb[0].mxu0 %v1102
        %v1272 = vpop.f32.mrb[0].mxu0
        %v1273 = vadd.f32 0.0, %v1272
        %v1274 = vpop.f32.mrb[0].mxu0
        %v1275 = vpop.f32.mrb[0].mxu0
        %v1276 = vadd.f32 0.0, %v1275
        %v1277 = vpop.f32.mrb[0].mxu0
        %1278 = vmatprep.mubr.bf16.mxu0 0
        %1279 = vmatmul.mubr.bf16.gmra.mrb[0].mxu0 %v1105
        %v1280 = vpop.f32.mrb[0].mxu0
        %v1281 = vadd.f32 0.0, %v1280
        %v1282 = vpop.f32.mrb[0].mxu0
        %v1283 = vpop.f32.mrb[0].mxu0
        %v1284 = vadd.f32 0.0, %v1283
        %v1285 = vpop.f32.mrb[0].mxu0
        %1286 = vdwg.mxu0
        %v1287 = vadd.f32 %v867, %v1145
        %v1288 = vadd.f32 %v870, %v1148
        %v1289 = vadd.f32 %v875, %v1153
        %v1290 = vadd.f32 %v878, %v1156
        %v1291 = vadd.f32 %v883, %v1161
        %v1292 = vadd.f32 %v886, %v1164
        %v1293 = vadd.f32 %v891, %v1169
        %v1294 = vadd.f32 %v894, %v1172
        %v1295 = vadd.f32 %v899, %v1177
        %v1296 = vadd.f32 %v902, %v1180
        %v1297 = vadd.f32 %v907, %v1185
        %v1298 = vadd.f32 %v910, %v1188
        %v1299 = vadd.f32 %v915, %v1193
        %v1300 = vadd.f32 %v918, %v1196
        %v1301 = vadd.f32 %v923, %v1201
        %v1302 = vadd.f32 %v926, %v1204
        %v1303 = vadd.f32 %v931, %v1209
        %v1304 = vadd.f32 %v934, %v1212
        %v1305 = vadd.f32 %v939, %v1217
        %v1306 = vadd.f32 %v942, %v1220
        %v1307 = vadd.f32 %v947, %v1225
        %v1308 = vadd.f32 %v950, %v1228
        %v1309 = vadd.f32 %v955, %v1233
        %v1310 = vadd.f32 %v958, %v1236
        %v1311 = vadd.f32 %v963, %v1241
        %v1312 = vadd.f32 %v966, %v1244
        %v1313 = vadd.f32 %v971, %v1249
        %v1314 = vadd.f32 %v974, %v1252
        %v1315 = vadd.f32 %v979, %v1257
        %v1316 = vadd.f32 %v982, %v1260
        %v1317 = vadd.f32 %v987, %v1265
        %v1318 = vadd.f32 %v990, %v1268
        %v1319 = vadd.f32 %v995, %v1273
        %v1320 = vadd.f32 %v998, %v1276
        %v1321 = vadd.f32 %v1003, %v1281
        %v1322 = vadd.f32 %v1006, %v1284
        %v1323 = vld [vmem:[%s269 + $0x8] sm:$0xe]
        %v1324 = vld [vmem:[%s269 + $0xc] sm:$0xf]
        %v1325 = vld [vmem:[%s269 + $0x10] sm:$0xf]
        %v1326 = vld [vmem:[%s269 + $0x14] sm:$0xf]
        %v1327 = vld [vmem:[%s269 + $0x18] sm:$0xf]
        %v1328 = vld [vmem:[%s269 + $0x1c] sm:$0xf]
        %v1329 = vld [vmem:[%s269 + $0x20] sm:$0xf]
        %v1330 = vld [vmem:[%s269 + $0x24] sm:$0xf]
        %v1331 = vld [vmem:[%s269 + $0x28] sm:$0xf]
        %v1332 = vld [vmem:[%s269 + $0x2c] sm:$0xf]
        %v1333 = vld [vmem:[%s269 + $0x30] sm:$0xf]
        %v1334 = vld [vmem:[%s269 + $0x34] sm:$0xf]
        %v1335 = vld [vmem:[%s269 + $0x38] sm:$0xf]
        %v1336 = vld [vmem:[%s269 + $0x3c] sm:$0xf]
        %v1337 = vld [vmem:[%s269 + $0x40] sm:$0xf]
        %v1338 = vld [vmem:[%s269 + $0x44] sm:$0xf]
        %v1339 = vld [vmem:[%s269 + $0x48] sm:$0xf]
        %v1340 = vld [vmem:[%s269 + $0x4c] sm:$0xf]
        %v1341 = vld [vmem:[%s269 + $0x50] sm:$0xf]
        %v1342 = vld [vmem:[%s269 + $0x54] sm:$0xf]
        %v1343 = vld [vmem:[%s269 + $0x58] sm:$0xf]
        %v1344 = vld [vmem:[%s269 + $0x5c] sm:$0xf]
        %v1345 = vld [vmem:[%s269 + $0x60] sm:$0xf]
        %v1346 = vld [vmem:[%s269 + $0x64] sm:$0xf]
        %v1347 = vld [vmem:[%s269 + $0x68] sm:$0xf]
        %v1348 = vld [vmem:[%s269 + $0x6c] sm:$0xf]
        %v1349 = vld [vmem:[%s269 + $0x70] sm:$0xf]
        %v1350 = vld [vmem:[%s269 + $0x74] sm:$0xf]
        %v1351 = vld [vmem:[%s269 + $0x78] sm:$0xf]
        %v1352 = vld [vmem:[%s269 + $0x7c] sm:$0xf]
        %v1353 = vld [vmem:[%s269 + $0x80] sm:$0xf]
        %v1354 = vld [vmem:[%s269 + $0x84] sm:$0xf]
        %v1355 = vld [vmem:[%s269 + $0x88] sm:$0xf]
        %v1356 = vld [vmem:[%s269 + $0x8c] sm:$0xf]
        %v1357 = vld [vmem:[%s269 + $0x90] sm:$0xf]
        %v1358 = vld [vmem:[%s269 + $0x94] sm:$0xf]
        %v1359 = vld [vmem:[%s269 + $0x98] sm:$0x1]
        %s1360 = scalar_lea.vmem %s273, 6
        %v1361 = vld [vmem:[%s1360] sm:$0x3]
        %v1399 = vunpack.c.l.b16 %v1323
        %v1400 = vunpack.c.l.b16 %v1324
        %v1401 = vunpack.c.l.b16 %v1325
        %v1402 = vunpack.c.l.b16 %v1326
        %v1403 = vunpack.c.l.b16 %v1327
        %v1404 = vunpack.c.l.b16 %v1328
        %v1405 = vunpack.c.l.b16 %v1329
        %v1406 = vunpack.c.l.b16 %v1330
        %v1407 = vunpack.c.l.b16 %v1331
        %v1408 = vunpack.c.l.b16 %v1332
        %v1409 = vunpack.c.l.b16 %v1333
        %v1410 = vunpack.c.l.b16 %v1334
        %v1411 = vunpack.c.l.b16 %v1335
        %v1412 = vunpack.c.l.b16 %v1336
        %v1413 = vunpack.c.l.b16 %v1337
        %v1414 = vunpack.c.l.b16 %v1338
        %v1415 = vunpack.c.l.b16 %v1339
        %v1416 = vunpack.c.l.b16 %v1340
        %v1417 = vunpack.c.l.b16 %v1341
        %v1418 = vunpack.c.l.b16 %v1342
        %v1419 = vunpack.c.l.b16 %v1343
        %v1420 = vunpack.c.l.b16 %v1344
        %v1421 = vunpack.c.l.b16 %v1345
        %v1422 = vunpack.c.l.b16 %v1346
        %v1423 = vunpack.c.l.b16 %v1347
        %v1424 = vunpack.c.l.b16 %v1348
        %v1425 = vunpack.c.l.b16 %v1349
        %v1426 = vunpack.c.l.b16 %v1350
        %v1427 = vunpack.c.l.b16 %v1351
        %v1428 = vunpack.c.l.b16 %v1352
        %v1429 = vunpack.c.l.b16 %v1353
        %v1430 = vunpack.c.l.b16 %v1354
        %v1431 = vunpack.c.l.b16 %v1355
        %v1432 = vunpack.c.l.b16 %v1356
        %v1433 = vunpack.c.l.b16 %v1357
        %v1434 = vunpack.c.l.b16 %v1358
        %v1435 = vunpack.c.l.b16 %v1359
        %v1436 = vpack.c.b16 %v1400, %v1399
        %v1437 = vpack.c.b16 %v1402, %v1401
        %v1438 = vpack.c.b16 %v1404, %v1403
        %v1439 = vpack.c.b16 %v1406, %v1405
        %v1440 = vpack.c.b16 %v1408, %v1407
        %v1441 = vpack.c.b16 %v1410, %v1409
        %v1442 = vpack.c.b16 %v1412, %v1411
        %v1443 = vpack.c.b16 %v1414, %v1413
        %v1444 = vpack.c.b16 %v1416, %v1415
        %v1445 = vpack.c.b16 %v1418, %v1417
        %v1446 = vpack.c.b16 %v1420, %v1419
        %v1447 = vpack.c.b16 %v1422, %v1421
        %v1448 = vpack.c.b16 %v1424, %v1423
        %v1449 = vpack.c.b16 %v1426, %v1425
        %v1450 = vpack.c.b16 %v1428, %v1427
        %v1451 = vpack.c.b16 %v1430, %v1429
        %v1452 = vpack.c.b16 %v1432, %v1431
        %v1453 = vpack.c.b16 %v1434, %v1433
        %v1454 = vpack.c.b16 %v1435, %v1435
        %v1455 = vrot.slane %v1436, 1
        %v1456 = vrot.slane %v1437, 1
        %v1457 = vsel %vm1015, %v1455, %v1456
        %v1458 = vrot.slane %v1438, 1
        %v1459 = vsel %vm1015, %v1456, %v1458
        %v1460 = vrot.slane %v1439, 1
        %v1461 = vsel %vm1015, %v1458, %v1460
        %v1462 = vrot.slane %v1440, 1
        %v1463 = vsel %vm1015, %v1460, %v1462
        %v1464 = vrot.slane %v1441, 1
        %v1465 = vsel %vm1015, %v1462, %v1464
        %v1466 = vrot.slane %v1442, 1
        %v1467 = vsel %vm1015, %v1464, %v1466
        %v1468 = vrot.slane %v1443, 1
        %v1469 = vsel %vm1015, %v1466, %v1468
        %v1470 = vrot.slane %v1444, 1
        %v1471 = vsel %vm1015, %v1468, %v1470
        %v1472 = vrot.slane %v1445, 1
        %v1473 = vsel %vm1015, %v1470, %v1472
        %v1474 = vrot.slane %v1446, 1
        %v1475 = vsel %vm1015, %v1472, %v1474
        %v1476 = vrot.slane %v1447, 1
        %v1477 = vsel %vm1015, %v1474, %v1476
        %v1478 = vrot.slane %v1448, 1
        %v1479 = vsel %vm1015, %v1476, %v1478
        %v1480 = vrot.slane %v1449, 1
        %v1481 = vsel %vm1015, %v1478, %v1480
        %v1482 = vrot.slane %v1450, 1
        %v1483 = vsel %vm1015, %v1480, %v1482
        %v1484 = vrot.slane %v1451, 1
        %v1485 = vsel %vm1015, %v1482, %v1484
        %v1486 = vrot.slane %v1452, 1
        %v1487 = vsel %vm1015, %v1484, %v1486
        %v1488 = vrot.slane %v1453, 1
        %v1489 = vsel %vm1015, %v1486, %v1488
        %v1490 = vrot.slane %v1454, 1
        %v1491 = vsel %vm1015, %v1488, %v1490
        %v1493 = vsel %vm557, %v1457, 0
        %v1496 = vsel %vm557, %v1459, 0
        %v1499 = vsel %vm557, %v1461, 0
        %v1502 = vsel %vm557, %v1463, 0
        %v1505 = vsel %vm557, %v1465, 0
        %v1508 = vsel %vm557, %v1467, 0
        %v1511 = vsel %vm557, %v1469, 0
        %v1514 = vsel %vm557, %v1471, 0
        %v1517 = vsel %vm557, %v1473, 0
        %v1520 = vsel %vm557, %v1475, 0
        %v1523 = vsel %vm557, %v1477, 0
        %v1526 = vsel %vm557, %v1479, 0
        %v1529 = vsel %vm557, %v1481, 0
        %v1532 = vsel %vm557, %v1483, 0
        %v1535 = vsel %vm557, %v1485, 0
        %v1538 = vsel %vm557, %v1487, 0
        %v1541 = vsel %vm557, %v1489, 0
        %v1544 = vsel %vm557, %v1491, 0
        %v1547 = vsel %vm612, %v1361, 0
        %1549 = vmatprep.subr.bf16.mxu0 0
        %1550 = vmatpush1.bf16.msra.mxu0 %v1547
        %1551 = vmatprep.subr.bf16.mxu0 0
        %1552 = vmatpush1.bf16.msra.mxu0 0
        %1553 = vmatprep.subr.bf16.mxu0 0
        %1554 = vmatpush1.bf16.msra.mxu0 0
        %1555 = vmatprep.subr.bf16.mxu0 0
        %1556 = vmatpush1.bf16.msra.mxu0 0
        %1557 = vmatprep.subr.bf16.mxu0 0
        %1558 = vmatpush1.bf16.msra.mxu0 0
        %1559 = vmatprep.subr.bf16.mxu0 0
        %1560 = vmatpush1.bf16.msra.mxu0 0
        %1561 = vmatprep.subr.bf16.mxu0 0
        %1562 = vmatpush1.bf16.msra.mxu0 0
        %1563 = vmatprep.subr.bf16.mxu0 0
        %1564 = vmatpush1.bf16.msra.mxu0 0
        %1565 = vmatprep.subr.bf16.mxu0 0
        %1566 = vmatpush1.bf16.msra.mxu0 0
        %1567 = vmatprep.subr.bf16.mxu0 0
        %1568 = vmatpush1.bf16.msra.mxu0 0
        %1569 = vmatprep.subr.bf16.mxu0 0
        %1570 = vmatpush1.bf16.msra.mxu0 0
        %1571 = vmatprep.subr.bf16.mxu0 0
        %1572 = vmatpush1.bf16.msra.mxu0 0
        %1573 = vmatprep.subr.bf16.mxu0 0
        %1574 = vmatpush1.bf16.msra.mxu0 0
        %1575 = vmatprep.subr.bf16.mxu0 0
        %1576 = vmatpush1.bf16.msra.mxu0 0
        %1577 = vmatprep.subr.bf16.mxu0 0
        %1578 = vmatpush1.bf16.msra.mxu0 0
        %1579 = vmatprep.subr.bf16.mxu0 0
        %1580 = vmatpush1.bf16.msra.mxu0 0
        %1581 = vmatprep.mubr.bf16.mxu0 0
        %1582 = vmatmul.mubr.bf16.gmra.mrb[0].mxu0 %v1493
        %v1583 = vpop.f32.mrb[0].mxu0
        %v1584 = vadd.f32 0.0, %v1583
        %v1585 = vpop.f32.mrb[0].mxu0
        %v1586 = vpop.f32.mrb[0].mxu0
        %v1587 = vadd.f32 0.0, %v1586
        %v1588 = vpop.f32.mrb[0].mxu0
        %1589 = vmatprep.mubr.bf16.mxu0 0
        %1590 = vmatmul.mubr.bf16.gmra.mrb[0].mxu0 %v1496
        %v1591 = vpop.f32.mrb[0].mxu0
        %v1592 = vadd.f32 0.0, %v1591
        %v1593 = vpop.f32.mrb[0].mxu0
        %v1594 = vpop.f32.mrb[0].mxu0
        %v1595 = vadd.f32 0.0, %v1594
        %v1596 = vpop.f32.mrb[0].mxu0
        %1597 = vmatprep.mubr.bf16.mxu0 0
        %1598 = vmatmul.mubr.bf16.gmra.mrb[0].mxu0 %v1499
        %v1599 = vpop.f32.mrb[0].mxu0
        %v1600 = vadd.f32 0.0, %v1599
        %v1601 = vpop.f32.mrb[0].mxu0
        %v1602 = vpop.f32.mrb[0].mxu0
        %v1603 = vadd.f32 0.0, %v1602
        %v1604 = vpop.f32.mrb[0].mxu0
        %1605 = vmatprep.mubr.bf16.mxu0 0
        %1606 = vmatmul.mubr.bf16.gmra.mrb[0].mxu0 %v1502
        %v1607 = vpop.f32.mrb[0].mxu0
        %v1608 = vadd.f32 0.0, %v1607
        %v1609 = vpop.f32.mrb[0].mxu0
        %v1610 = vpop.f32.mrb[0].mxu0
        %v1611 = vadd.f32 0.0, %v1610
        %v1612 = vpop.f32.mrb[0].mxu0
        %1613 = vmatprep.mubr.bf16.mxu0 0
        %1614 = vmatmul.mubr.bf16.gmra.mrb[0].mxu0 %v1505
        %v1615 = vpop.f32.mrb[0].mxu0
        %v1616 = vadd.f32 0.0, %v1615
        %v1617 = vpop.f32.mrb[0].mxu0
        %v1618 = vpop.f32.mrb[0].mxu0
        %v1619 = vadd.f32 0.0, %v1618
        %v1620 = vpop.f32.mrb[0].mxu0
        %1621 = vmatprep.mubr.bf16.mxu0 0
        %1622 = vmatmul.mubr.bf16.gmra.mrb[0].mxu0 %v1508
        %v1623 = vpop.f32.mrb[0].mxu0
        %v1624 = vadd.f32 0.0, %v1623
        %v1625 = vpop.f32.mrb[0].mxu0
        %v1626 = vpop.f32.mrb[0].mxu0
        %v1627 = vadd.f32 0.0, %v1626
        %v1628 = vpop.f32.mrb[0].mxu0
        %1629 = vmatprep.mubr.bf16.mxu0 0
        %1630 = vmatmul.mubr.bf16.gmra.mrb[0].mxu0 %v1511
        %v1631 = vpop.f32.mrb[0].mxu0
        %v1632 = vadd.f32 0.0, %v1631
        %v1633 = vpop.f32.mrb[0].mxu0
        %v1634 = vpop.f32.mrb[0].mxu0
        %v1635 = vadd.f32 0.0, %v1634
        %v1636 = vpop.f32.mrb[0].mxu0
        %1637 = vmatprep.mubr.bf16.mxu0 0
        %1638 = vmatmul.mubr.bf16.gmra.mrb[0].mxu0 %v1514
        %v1639 = vpop.f32.mrb[0].mxu0
        %v1640 = vadd.f32 0.0, %v1639
        %v1641 = vpop.f32.mrb[0].mxu0
        %v1642 = vpop.f32.mrb[0].mxu0
        %v1643 = vadd.f32 0.0, %v1642
        %v1644 = vpop.f32.mrb[0].mxu0
        %1645 = vmatprep.mubr.bf16.mxu0 0
        %1646 = vmatmul.mubr.bf16.gmra.mrb[0].mxu0 %v1517
        %v1647 = vpop.f32.mrb[0].mxu0
        %v1648 = vadd.f32 0.0, %v1647
        %v1649 = vpop.f32.mrb[0].mxu0
        %v1650 = vpop.f32.mrb[0].mxu0
        %v1651 = vadd.f32 0.0, %v1650
        %v1652 = vpop.f32.mrb[0].mxu0
        %1653 = vmatprep.mubr.bf16.mxu0 0
        %1654 = vmatmul.mubr.bf16.gmra.mrb[0].mxu0 %v1520
        %v1655 = vpop.f32.mrb[0].mxu0
        %v1656 = vadd.f32 0.0, %v1655
        %v1657 = vpop.f32.mrb[0].mxu0
        %v1658 = vpop.f32.mrb[0].mxu0
        %v1659 = vadd.f32 0.0, %v1658
        %v1660 = vpop.f32.mrb[0].mxu0
        %1661 = vmatprep.mubr.bf16.mxu0 0
        %1662 = vmatmul.mubr.bf16.gmra.mrb[0].mxu0 %v1523
        %v1663 = vpop.f32.mrb[0].mxu0
        %v1664 = vadd.f32 0.0, %v1663
        %v1665 = vpop.f32.mrb[0].mxu0
        %v1666 = vpop.f32.mrb[0].mxu0
        %v1667 = vadd.f32 0.0, %v1666
        %v1668 = vpop.f32.mrb[0].mxu0
        %1669 = vmatprep.mubr.bf16.mxu0 0
        %1670 = vmatmul.mubr.bf16.gmra.mrb[0].mxu0 %v1526
        %v1671 = vpop.f32.mrb[0].mxu0
        %v1672 = vadd.f32 0.0, %v1671
        %v1673 = vpop.f32.mrb[0].mxu0
        %v1674 = vpop.f32.mrb[0].mxu0
        %v1675 = vadd.f32 0.0, %v1674
        %v1676 = vpop.f32.mrb[0].mxu0
        %1677 = vmatprep.mubr.bf16.mxu0 0
        %1678 = vmatmul.mubr.bf16.gmra.mrb[0].mxu0 %v1529
        %v1679 = vpop.f32.mrb[0].mxu0
        %v1680 = vadd.f32 0.0, %v1679
        %v1681 = vpop.f32.mrb[0].mxu0
        %v1682 = vpop.f32.mrb[0].mxu0
        %v1683 = vadd.f32 0.0, %v1682
        %v1684 = vpop.f32.mrb[0].mxu0
        %1685 = vmatprep.mubr.bf16.mxu0 0
        %1686 = vmatmul.mubr.bf16.gmra.mrb[0].mxu0 %v1532
        %v1687 = vpop.f32.mrb[0].mxu0
        %v1688 = vadd.f32 0.0, %v1687
        %v1689 = vpop.f32.mrb[0].mxu0
        %v1690 = vpop.f32.mrb[0].mxu0
        %v1691 = vadd.f32 0.0, %v1690
        %v1692 = vpop.f32.mrb[0].mxu0
        %1693 = vmatprep.mubr.bf16.mxu0 0
        %1694 = vmatmul.mubr.bf16.gmra.mrb[0].mxu0 %v1535
        %v1695 = vpop.f32.mrb[0].mxu0
        %v1696 = vadd.f32 0.0, %v1695
        %v1697 = vpop.f32.mrb[0].mxu0
        %v1698 = vpop.f32.mrb[0].mxu0
        %v1699 = vadd.f32 0.0, %v1698
        %v1700 = vpop.f32.mrb[0].mxu0
        %1701 = vmatprep.mubr.bf16.mxu0 0
        %1702 = vmatmul.mubr.bf16.gmra.mrb[0].mxu0 %v1538
        %v1703 = vpop.f32.mrb[0].mxu0
        %v1704 = vadd.f32 0.0, %v1703
        %v1705 = vpop.f32.mrb[0].mxu0
        %v1706 = vpop.f32.mrb[0].mxu0
        %v1707 = vadd.f32 0.0, %v1706
        %v1708 = vpop.f32.mrb[0].mxu0
        %1709 = vmatprep.mubr.bf16.mxu0 0
        %1710 = vmatmul.mubr.bf16.gmra.mrb[0].mxu0 %v1541
        %v1711 = vpop.f32.mrb[0].mxu0
        %v1712 = vadd.f32 0.0, %v1711
        %v1713 = vpop.f32.mrb[0].mxu0
        %v1714 = vpop.f32.mrb[0].mxu0
        %v1715 = vadd.f32 0.0, %v1714
        %v1716 = vpop.f32.mrb[0].mxu0
        %1717 = vmatprep.mubr.bf16.mxu0 0
        %1718 = vmatmul.mubr.bf16.gmra.mrb[0].mxu0 %v1544
        %v1719 = vpop.f32.mrb[0].mxu0
        %v1720 = vadd.f32 0.0, %v1719
        %v1721 = vpop.f32.mrb[0].mxu0
        %v1722 = vpop.f32.mrb[0].mxu0
        %v1723 = vadd.f32 0.0, %v1722
        %v1724 = vpop.f32.mrb[0].mxu0
        %1725 = vdwg.mxu0
        %v1726 = vadd.f32 %v1287, %v1584
        %v1727 = vadd.f32 %v1288, %v1587
        %v1728 = vadd.f32 %v1289, %v1592
        %v1729 = vadd.f32 %v1290, %v1595
        %v1730 = vadd.f32 %v1291, %v1600
        %v1731 = vadd.f32 %v1292, %v1603
        %v1732 = vadd.f32 %v1293, %v1608
        %v1733 = vadd.f32 %v1294, %v1611
        %v1734 = vadd.f32 %v1295, %v1616
        %v1735 = vadd.f32 %v1296, %v1619
        %v1736 = vadd.f32 %v1297, %v1624
        %v1737 = vadd.f32 %v1298, %v1627
        %v1738 = vadd.f32 %v1299, %v1632
        %v1739 = vadd.f32 %v1300, %v1635
        %v1740 = vadd.f32 %v1301, %v1640
        %v1741 = vadd.f32 %v1302, %v1643
        %v1742 = vadd.f32 %v1303, %v1648
        %v1743 = vadd.f32 %v1304, %v1651
        %v1744 = vadd.f32 %v1305, %v1656
        %v1745 = vadd.f32 %v1306, %v1659
        %v1746 = vadd.f32 %v1307, %v1664
        %v1747 = vadd.f32 %v1308, %v1667
        %v1748 = vadd.f32 %v1309, %v1672
        %v1749 = vadd.f32 %v1310, %v1675
        %v1750 = vadd.f32 %v1311, %v1680
        %v1751 = vadd.f32 %v1312, %v1683
        %v1752 = vadd.f32 %v1313, %v1688
        %v1753 = vadd.f32 %v1314, %v1691
        %v1754 = vadd.f32 %v1315, %v1696
        %v1755 = vadd.f32 %v1316, %v1699
        %v1756 = vadd.f32 %v1317, %v1704
        %v1757 = vadd.f32 %v1318, %v1707
        %v1758 = vadd.f32 %v1319, %v1712
        %v1759 = vadd.f32 %v1320, %v1715
        %v1760 = vadd.f32 %v1321, %v1720
        %v1761 = vadd.f32 %v1322, %v1723
        %v1762 = vld [vmem:[%s269 + $0x98] sm:$0x3]
        %s1763 = scalar_lea.vmem %s273, 8
        %v1764 = vld [vmem:[%s1763] sm:$0x3]
        %v1766 = vunpack.c.l.b16 %v1762
        %v1767 = vpack.c.b16 %v1766, %v1766
        %vm1768 = vsmask.f32 6400
        %v1770 = vshrl.u32 %v1436, 16
        %v1772 = vrot.slane %v1770, 1
        %v1773 = vshll.u32 %v1436, 16
        %v1775 = vrot.slane %v1773, 2
        %v1776 = vor.u32 %v1772, %v1775
        %v1778 = vshrl.u32 %v1437, 16
        %v1780 = vrot.slane %v1778, 1
        %v1781 = vshll.u32 %v1437, 16
        %v1783 = vrot.slane %v1781, 2
        %v1784 = vor.u32 %v1780, %v1783
        %v1785 = vsel %vm1768, %v1776, %v1784
        %v1787 = vshrl.u32 %v1438, 16
        %v1789 = vrot.slane %v1787, 1
        %v1790 = vshll.u32 %v1438, 16
        %v1792 = vrot.slane %v1790, 2
        %v1793 = vor.u32 %v1789, %v1792
        %v1794 = vsel %vm1768, %v1784, %v1793
        %v1796 = vshrl.u32 %v1439, 16
        %v1798 = vrot.slane %v1796, 1
        %v1799 = vshll.u32 %v1439, 16
        %v1801 = vrot.slane %v1799, 2
        %v1802 = vor.u32 %v1798, %v1801
        %v1803 = vsel %vm1768, %v1793, %v1802
        %v1805 = vshrl.u32 %v1440, 16
        %v1807 = vrot.slane %v1805, 1
        %v1808 = vshll.u32 %v1440, 16
        %v1810 = vrot.slane %v1808, 2
        %v1811 = vor.u32 %v1807, %v1810
        %v1812 = vsel %vm1768, %v1802, %v1811
        %v1814 = vshrl.u32 %v1441, 16
        %v1816 = vrot.slane %v1814, 1
        %v1817 = vshll.u32 %v1441, 16
        %v1819 = vrot.slane %v1817, 2
        %v1820 = vor.u32 %v1816, %v1819
        %v1821 = vsel %vm1768, %v1811, %v1820
        %v1823 = vshrl.u32 %v1442, 16
        %v1825 = vrot.slane %v1823, 1
        %v1826 = vshll.u32 %v1442, 16
        %v1828 = vrot.slane %v1826, 2
        %v1829 = vor.u32 %v1825, %v1828
        %v1830 = vsel %vm1768, %v1820, %v1829
        %v1832 = vshrl.u32 %v1443, 16
        %v1834 = vrot.slane %v1832, 1
        %v1835 = vshll.u32 %v1443, 16
        %v1837 = vrot.slane %v1835, 2
        %v1838 = vor.u32 %v1834, %v1837
        %v1839 = vsel %vm1768, %v1829, %v1838
        %v1841 = vshrl.u32 %v1444, 16
        %v1843 = vrot.slane %v1841, 1
        %v1844 = vshll.u32 %v1444, 16
        %v1846 = vrot.slane %v1844, 2
        %v1847 = vor.u32 %v1843, %v1846
        %v1848 = vsel %vm1768, %v1838, %v1847
        %v1850 = vshrl.u32 %v1445, 16
        %v1852 = vrot.slane %v1850, 1
        %v1853 = vshll.u32 %v1445, 16
        %v1855 = vrot.slane %v1853, 2
        %v1856 = vor.u32 %v1852, %v1855
        %v1857 = vsel %vm1768, %v1847, %v1856
        %v1859 = vshrl.u32 %v1446, 16
        %v1861 = vrot.slane %v1859, 1
        %v1862 = vshll.u32 %v1446, 16
        %v1864 = vrot.slane %v1862, 2
        %v1865 = vor.u32 %v1861, %v1864
        %v1866 = vsel %vm1768, %v1856, %v1865
        %v1868 = vshrl.u32 %v1447, 16
        %v1870 = vrot.slane %v1868, 1
        %v1871 = vshll.u32 %v1447, 16
        %v1873 = vrot.slane %v1871, 2
        %v1874 = vor.u32 %v1870, %v1873
        %v1875 = vsel %vm1768, %v1865, %v1874
        %v1877 = vshrl.u32 %v1448, 16
        %v1879 = vrot.slane %v1877, 1
        %v1880 = vshll.u32 %v1448, 16
        %v1882 = vrot.slane %v1880, 2
        %v1883 = vor.u32 %v1879, %v1882
        %v1884 = vsel %vm1768, %v1874, %v1883
        %v1886 = vshrl.u32 %v1449, 16
        %v1888 = vrot.slane %v1886, 1
        %v1889 = vshll.u32 %v1449, 16
        %v1891 = vrot.slane %v1889, 2
        %v1892 = vor.u32 %v1888, %v1891
        %v1893 = vsel %vm1768, %v1883, %v1892
        %v1895 = vshrl.u32 %v1450, 16
        %v1897 = vrot.slane %v1895, 1
        %v1898 = vshll.u32 %v1450, 16
        %v1900 = vrot.slane %v1898, 2
        %v1901 = vor.u32 %v1897, %v1900
        %v1902 = vsel %vm1768, %v1892, %v1901
        %v1904 = vshrl.u32 %v1451, 16
        %v1906 = vrot.slane %v1904, 1
        %v1907 = vshll.u32 %v1451, 16
        %v1909 = vrot.slane %v1907, 2
        %v1910 = vor.u32 %v1906, %v1909
        %v1911 = vsel %vm1768, %v1901, %v1910
        %v1913 = vshrl.u32 %v1452, 16
        %v1915 = vrot.slane %v1913, 1
        %v1916 = vshll.u32 %v1452, 16
        %v1918 = vrot.slane %v1916, 2
        %v1919 = vor.u32 %v1915, %v1918
        %v1920 = vsel %vm1768, %v1910, %v1919
        %v1922 = vshrl.u32 %v1453, 16
        %v1924 = vrot.slane %v1922, 1
        %v1925 = vshll.u32 %v1453, 16
        %v1927 = vrot.slane %v1925, 2
        %v1928 = vor.u32 %v1924, %v1927
        %v1929 = vsel %vm1768, %v1919, %v1928
        %v1931 = vshrl.u32 %v1767, 16
        %v1933 = vrot.slane %v1931, 1
        %v1934 = vshll.u32 %v1767, 16
        %v1936 = vrot.slane %v1934, 2
        %v1937 = vor.u32 %v1933, %v1936
        %v1938 = vsel %vm1768, %v1928, %v1937
        %v1940 = vsel %vm557, %v1785, 0
        %v1943 = vsel %vm557, %v1794, 0
        %v1946 = vsel %vm557, %v1803, 0
        %v1949 = vsel %vm557, %v1812, 0
        %v1952 = vsel %vm557, %v1821, 0
        %v1955 = vsel %vm557, %v1830, 0
        %v1958 = vsel %vm557, %v1839, 0
        %v1961 = vsel %vm557, %v1848, 0
        %v1964 = vsel %vm557, %v1857, 0
        %v1967 = vsel %vm557, %v1866, 0
        %v1970 = vsel %vm557, %v1875, 0
        %v1973 = vsel %vm557, %v1884, 0
        %v1976 = vsel %vm557, %v1893, 0
        %v1979 = vsel %vm557, %v1902, 0
        %v1982 = vsel %vm557, %v1911, 0
        %v1985 = vsel %vm557, %v1920, 0
        %v1988 = vsel %vm557, %v1929, 0
        %v1991 = vsel %vm557, %v1938, 0
        %v1994 = vsel %vm612, %v1764, 0
        %1996 = vmatprep.subr.bf16.mxu0 0
        %1997 = vmatpush1.bf16.msra.mxu0 %v1994
        %1998 = vmatprep.subr.bf16.mxu0 0
        %1999 = vmatpush1.bf16.msra.mxu0 0
        %2000 = vmatprep.subr.bf16.mxu0 0
        %2001 = vmatpush1.bf16.msra.mxu0 0
        %2002 = vmatprep.subr.bf16.mxu0 0
        %2003 = vmatpush1.bf16.msra.mxu0 0
        %2004 = vmatprep.subr.bf16.mxu0 0
        %2005 = vmatpush1.bf16.msra.mxu0 0
        %2006 = vmatprep.subr.bf16.mxu0 0
        %2007 = vmatpush1.bf16.msra.mxu0 0
        %2008 = vmatprep.subr.bf16.mxu0 0
        %2009 = vmatpush1.bf16.msra.mxu0 0
        %2010 = vmatprep.subr.bf16.mxu0 0
        %2011 = vmatpush1.bf16.msra.mxu0 0
        %2012 = vmatprep.subr.bf16.mxu0 0
        %2013 = vmatpush1.bf16.msra.mxu0 0
        %2014 = vmatprep.subr.bf16.mxu0 0
        %2015 = vmatpush1.bf16.msra.mxu0 0
        %2016 = vmatprep.subr.bf16.mxu0 0
        %2017 = vmatpush1.bf16.msra.mxu0 0
        %2018 = vmatprep.subr.bf16.mxu0 0
        %2019 = vmatpush1.bf16.msra.mxu0 0
        %2020 = vmatprep.subr.bf16.mxu0 0
        %2021 = vmatpush1.bf16.msra.mxu0 0
        %2022 = vmatprep.subr.bf16.mxu0 0
        %2023 = vmatpush1.bf16.msra.mxu0 0
        %2024 = vmatprep.subr.bf16.mxu0 0
        %2025 = vmatpush1.bf16.msra.mxu0 0
        %2026 = vmatprep.subr.bf16.mxu0 0
        %2027 = vmatpush1.bf16.msra.mxu0 0
        %2028 = vmatprep.mubr.bf16.mxu0 0
        %2029 = vmatmul.mubr.bf16.gmra.mrb[0].mxu0 %v1940
        %v2030 = vpop.f32.mrb[0].mxu0
        %v2031 = vadd.f32 0.0, %v2030
        %v2032 = vpop.f32.mrb[0].mxu0
        %v2033 = vpop.f32.mrb[0].mxu0
        %v2034 = vadd.f32 0.0, %v2033
        %v2035 = vpop.f32.mrb[0].mxu0
        %2036 = vmatprep.mubr.bf16.mxu0 0
        %2037 = vmatmul.mubr.bf16.gmra.mrb[0].mxu0 %v1943
        %v2038 = vpop.f32.mrb[0].mxu0
        %v2039 = vadd.f32 0.0, %v2038
        %v2040 = vpop.f32.mrb[0].mxu0
        %v2041 = vpop.f32.mrb[0].mxu0
        %v2042 = vadd.f32 0.0, %v2041
        %v2043 = vpop.f32.mrb[0].mxu0
        %2044 = vmatprep.mubr.bf16.mxu0 0
        %2045 = vmatmul.mubr.bf16.gmra.mrb[0].mxu0 %v1946
        %v2046 = vpop.f32.mrb[0].mxu0
        %v2047 = vadd.f32 0.0, %v2046
        %v2048 = vpop.f32.mrb[0].mxu0
        %v2049 = vpop.f32.mrb[0].mxu0
        %v2050 = vadd.f32 0.0, %v2049
        %v2051 = vpop.f32.mrb[0].mxu0
        %2052 = vmatprep.mubr.bf16.mxu0 0
        %2053 = vmatmul.mubr.bf16.gmra.mrb[0].mxu0 %v1949
        %v2054 = vpop.f32.mrb[0].mxu0
        %v2055 = vadd.f32 0.0, %v2054
        %v2056 = vpop.f32.mrb[0].mxu0
        %v2057 = vpop.f32.mrb[0].mxu0
        %v2058 = vadd.f32 0.0, %v2057
        %v2059 = vpop.f32.mrb[0].mxu0
        %2060 = vmatprep.mubr.bf16.mxu0 0
        %2061 = vmatmul.mubr.bf16.gmra.mrb[0].mxu0 %v1952
        %v2062 = vpop.f32.mrb[0].mxu0
        %v2063 = vadd.f32 0.0, %v2062
        %v2064 = vpop.f32.mrb[0].mxu0
        %v2065 = vpop.f32.mrb[0].mxu0
        %v2066 = vadd.f32 0.0, %v2065
        %v2067 = vpop.f32.mrb[0].mxu0
        %2068 = vmatprep.mubr.bf16.mxu0 0
        %2069 = vmatmul.mubr.bf16.gmra.mrb[0].mxu0 %v1955
        %v2070 = vpop.f32.mrb[0].mxu0
        %v2071 = vadd.f32 0.0, %v2070
        %v2072 = vpop.f32.mrb[0].mxu0
        %v2073 = vpop.f32.mrb[0].mxu0
        %v2074 = vadd.f32 0.0, %v2073
        %v2075 = vpop.f32.mrb[0].mxu0
        %2076 = vmatprep.mubr.bf16.mxu0 0
        %2077 = vmatmul.mubr.bf16.gmra.mrb[0].mxu0 %v1958
        %v2078 = vpop.f32.mrb[0].mxu0
        %v2079 = vadd.f32 0.0, %v2078
        %v2080 = vpop.f32.mrb[0].mxu0
        %v2081 = vpop.f32.mrb[0].mxu0
        %v2082 = vadd.f32 0.0, %v2081
        %v2083 = vpop.f32.mrb[0].mxu0
        %2084 = vmatprep.mubr.bf16.mxu0 0
        %2085 = vmatmul.mubr.bf16.gmra.mrb[0].mxu0 %v1961
        %v2086 = vpop.f32.mrb[0].mxu0
        %v2087 = vadd.f32 0.0, %v2086
        %v2088 = vpop.f32.mrb[0].mxu0
        %v2089 = vpop.f32.mrb[0].mxu0
        %v2090 = vadd.f32 0.0, %v2089
        %v2091 = vpop.f32.mrb[0].mxu0
        %2092 = vmatprep.mubr.bf16.mxu0 0
        %2093 = vmatmul.mubr.bf16.gmra.mrb[0].mxu0 %v1964
        %v2094 = vpop.f32.mrb[0].mxu0
        %v2095 = vadd.f32 0.0, %v2094
        %v2096 = vpop.f32.mrb[0].mxu0
        %v2097 = vpop.f32.mrb[0].mxu0
        %v2098 = vadd.f32 0.0, %v2097
        %v2099 = vpop.f32.mrb[0].mxu0
        %2100 = vmatprep.mubr.bf16.mxu0 0
        %2101 = vmatmul.mubr.bf16.gmra.mrb[0].mxu0 %v1967
        %v2102 = vpop.f32.mrb[0].mxu0
        %v2103 = vadd.f32 0.0, %v2102
        %v2104 = vpop.f32.mrb[0].mxu0
        %v2105 = vpop.f32.mrb[0].mxu0
        %v2106 = vadd.f32 0.0, %v2105
        %v2107 = vpop.f32.mrb[0].mxu0
        %2108 = vmatprep.mubr.bf16.mxu0 0
        %2109 = vmatmul.mubr.bf16.gmra.mrb[0].mxu0 %v1970
        %v2110 = vpop.f32.mrb[0].mxu0
        %v2111 = vadd.f32 0.0, %v2110
        %v2112 = vpop.f32.mrb[0].mxu0
        %v2113 = vpop.f32.mrb[0].mxu0
        %v2114 = vadd.f32 0.0, %v2113
        %v2115 = vpop.f32.mrb[0].mxu0
        %2116 = vmatprep.mubr.bf16.mxu0 0
        %2117 = vmatmul.mubr.bf16.gmra.mrb[0].mxu0 %v1973
        %v2118 = vpop.f32.mrb[0].mxu0
        %v2119 = vadd.f32 0.0, %v2118
        %v2120 = vpop.f32.mrb[0].mxu0
        %v2121 = vpop.f32.mrb[0].mxu0
        %v2122 = vadd.f32 0.0, %v2121
        %v2123 = vpop.f32.mrb[0].mxu0
        %2124 = vmatprep.mubr.bf16.mxu0 0
        %2125 = vmatmul.mubr.bf16.gmra.mrb[0].mxu0 %v1976
        %v2126 = vpop.f32.mrb[0].mxu0
        %v2127 = vadd.f32 0.0, %v2126
        %v2128 = vpop.f32.mrb[0].mxu0
        %v2129 = vpop.f32.mrb[0].mxu0
        %v2130 = vadd.f32 0.0, %v2129
        %v2131 = vpop.f32.mrb[0].mxu0
        %2132 = vmatprep.mubr.bf16.mxu0 0
        %2133 = vmatmul.mubr.bf16.gmra.mrb[0].mxu0 %v1979
        %v2134 = vpop.f32.mrb[0].mxu0
        %v2135 = vadd.f32 0.0, %v2134
        %v2136 = vpop.f32.mrb[0].mxu0
        %v2137 = vpop.f32.mrb[0].mxu0
        %v2138 = vadd.f32 0.0, %v2137
        %v2139 = vpop.f32.mrb[0].mxu0
        %2140 = vmatprep.mubr.bf16.mxu0 0
        %2141 = vmatmul.mubr.bf16.gmra.mrb[0].mxu0 %v1982
        %v2142 = vpop.f32.mrb[0].mxu0
        %v2143 = vadd.f32 0.0, %v2142
        %v2144 = vpop.f32.mrb[0].mxu0
        %v2145 = vpop.f32.mrb[0].mxu0
        %v2146 = vadd.f32 0.0, %v2145
        %v2147 = vpop.f32.mrb[0].mxu0
        %2148 = vmatprep.mubr.bf16.mxu0 0
        %2149 = vmatmul.mubr.bf16.gmra.mrb[0].mxu0 %v1985
        %v2150 = vpop.f32.mrb[0].mxu0
        %v2151 = vadd.f32 0.0, %v2150
        %v2152 = vpop.f32.mrb[0].mxu0
        %v2153 = vpop.f32.mrb[0].mxu0
        %v2154 = vadd.f32 0.0, %v2153
        %v2155 = vpop.f32.mrb[0].mxu0
        %2156 = vmatprep.mubr.bf16.mxu0 0
        %2157 = vmatmul.mubr.bf16.gmra.mrb[0].mxu0 %v1988
        %v2158 = vpop.f32.mrb[0].mxu0
        %v2159 = vadd.f32 0.0, %v2158
        %v2160 = vpop.f32.mrb[0].mxu0
        %v2161 = vpop.f32.mrb[0].mxu0
        %v2162 = vadd.f32 0.0, %v2161
        %v2163 = vpop.f32.mrb[0].mxu0
        %2164 = vmatprep.mubr.bf16.mxu0 0
        %2165 = vmatmul.mubr.bf16.gmra.mrb[0].mxu0 %v1991
        %v2166 = vpop.f32.mrb[0].mxu0
        %v2167 = vadd.f32 0.0, %v2166
        %v2168 = vpop.f32.mrb[0].mxu0
        %v2169 = vpop.f32.mrb[0].mxu0
        %v2170 = vadd.f32 0.0, %v2169
        %v2171 = vpop.f32.mrb[0].mxu0
        %2172 = vdwg.mxu0
        %v2173 = vadd.f32 %v1726, %v2031
        %v2174 = vadd.f32 %v1727, %v2034
        %v2175 = vadd.f32 %v1728, %v2039
        %v2176 = vadd.f32 %v1729, %v2042
        %v2177 = vadd.f32 %v1730, %v2047
        %v2178 = vadd.f32 %v1731, %v2050
        %v2179 = vadd.f32 %v1732, %v2055
        %v2180 = vadd.f32 %v1733, %v2058
        %v2181 = vadd.f32 %v1734, %v2063
        %v2182 = vadd.f32 %v1735, %v2066
        %v2183 = vadd.f32 %v1736, %v2071
        %v2184 = vadd.f32 %v1737, %v2074
        %v2185 = vadd.f32 %v1738, %v2079
        %v2186 = vadd.f32 %v1739, %v2082
        %v2187 = vadd.f32 %v1740, %v2087
        %v2188 = vadd.f32 %v1741, %v2090
        %v2189 = vadd.f32 %v1742, %v2095
        %v2190 = vadd.f32 %v1743, %v2098
        %v2191 = vadd.f32 %v1744, %v2103
        %v2192 = vadd.f32 %v1745, %v2106
        %v2193 = vadd.f32 %v1746, %v2111
        %v2194 = vadd.f32 %v1747, %v2114
        %v2195 = vadd.f32 %v1748, %v2119
        %v2196 = vadd.f32 %v1749, %v2122
        %v2197 = vadd.f32 %v1750, %v2127
        %v2198 = vadd.f32 %v1751, %v2130
        %v2199 = vadd.f32 %v1752, %v2135
        %v2200 = vadd.f32 %v1753, %v2138
        %v2201 = vadd.f32 %v1754, %v2143
        %v2202 = vadd.f32 %v1755, %v2146
        %v2203 = vadd.f32 %v1756, %v2151
        %v2204 = vadd.f32 %v1757, %v2154
        %v2205 = vadd.f32 %v1758, %v2159
        %v2206 = vadd.f32 %v1759, %v2162
        %v2207 = vadd.f32 %v1760, %v2167
        %v2208 = vadd.f32 %v1761, %v2170
        %v2209 = vld [vmem:[%s269 + $0x8] sm:$0xc]
        %s2210 = scalar_lea.vmem %s273, 10
        %v2211 = vld [vmem:[%s2210] sm:$0x3]
        %v2213 = vunpack.c.l.b16 %v2209
        %v2214 = vpack.c.b16 %v1400, %v2213
        %vm2215 = vcmask 1045504
        %v2216 = vrot.slane %v2214, 2
        %v2217 = vrot.slane %v1437, 2
        %v2218 = vsel %vm2215, %v2216, %v2217
        %v2219 = vrot.slane %v1438, 2
        %v2220 = vsel %vm2215, %v2217, %v2219
        %v2221 = vrot.slane %v1439, 2
        %v2222 = vsel %vm2215, %v2219, %v2221
        %v2223 = vrot.slane %v1440, 2
        %v2224 = vsel %vm2215, %v2221, %v2223
        %v2225 = vrot.slane %v1441, 2
        %v2226 = vsel %vm2215, %v2223, %v2225
        %v2227 = vrot.slane %v1442, 2
        %v2228 = vsel %vm2215, %v2225, %v2227
        %v2229 = vrot.slane %v1443, 2
        %v2230 = vsel %vm2215, %v2227, %v2229
        %v2231 = vrot.slane %v1444, 2
        %v2232 = vsel %vm2215, %v2229, %v2231
        %v2233 = vrot.slane %v1445, 2
        %v2234 = vsel %vm2215, %v2231, %v2233
        %v2235 = vrot.slane %v1446, 2
        %v2236 = vsel %vm2215, %v2233, %v2235
        %v2237 = vrot.slane %v1447, 2
        %v2238 = vsel %vm2215, %v2235, %v2237
        %v2239 = vrot.slane %v1448, 2
        %v2240 = vsel %vm2215, %v2237, %v2239
        %v2241 = vrot.slane %v1449, 2
        %v2242 = vsel %vm2215, %v2239, %v2241
        %v2243 = vrot.slane %v1450, 2
        %v2244 = vsel %vm2215, %v2241, %v2243
        %v2245 = vrot.slane %v1451, 2
        %v2246 = vsel %vm2215, %v2243, %v2245
        %v2247 = vrot.slane %v1452, 2
        %v2248 = vsel %vm2215, %v2245, %v2247
        %v2249 = vrot.slane %v1453, 2
        %v2250 = vsel %vm2215, %v2247, %v2249
        %v2251 = vrot.slane %v1767, 2
        %v2252 = vsel %vm2215, %v2249, %v2251
        %v2254 = vsel %vm557, %v2218, 0
        %v2257 = vsel %vm557, %v2220, 0
        %v2260 = vsel %vm557, %v2222, 0
        %v2263 = vsel %vm557, %v2224, 0
        %v2266 = vsel %vm557, %v2226, 0
        %v2269 = vsel %vm557, %v2228, 0
        %v2272 = vsel %vm557, %v2230, 0
        %v2275 = vsel %vm557, %v2232, 0
        %v2278 = vsel %vm557, %v2234, 0
        %v2281 = vsel %vm557, %v2236, 0
        %v2284 = vsel %vm557, %v2238, 0
        %v2287 = vsel %vm557, %v2240, 0
        %v2290 = vsel %vm557, %v2242, 0
        %v2293 = vsel %vm557, %v2244, 0
        %v2296 = vsel %vm557, %v2246, 0
        %v2299 = vsel %vm557, %v2248, 0
        %v2302 = vsel %vm557, %v2250, 0
        %v2305 = vsel %vm557, %v2252, 0
        %v2308 = vsel %vm612, %v2211, 0
        %2310 = vmatprep.subr.bf16.mxu0 0
        %2311 = vmatpush1.bf16.msra.mxu0 %v2308
        %2312 = vmatprep.subr.bf16.mxu0 0
        %2313 = vmatpush1.bf16.msra.mxu0 0
        %2314 = vmatprep.subr.bf16.mxu0 0
        %2315 = vmatpush1.bf16.msra.mxu0 0
        %2316 = vmatprep.subr.bf16.mxu0 0
        %2317 = vmatpush1.bf16.msra.mxu0 0
        %2318 = vmatprep.subr.bf16.mxu0 0
        %2319 = vmatpush1.bf16.msra.mxu0 0
        %2320 = vmatprep.subr.bf16.mxu0 0
        %2321 = vmatpush1.bf16.msra.mxu0 0
        %2322 = vmatprep.subr.bf16.mxu0 0
        %2323 = vmatpush1.bf16.msra.mxu0 0
        %2324 = vmatprep.subr.bf16.mxu0 0
        %2325 = vmatpush1.bf16.msra.mxu0 0
        %2326 = vmatprep.subr.bf16.mxu0 0
        %2327 = vmatpush1.bf16.msra.mxu0 0
        %2328 = vmatprep.subr.bf16.mxu0 0
        %2329 = vmatpush1.bf16.msra.mxu0 0
        %2330 = vmatprep.subr.bf16.mxu0 0
        %2331 = vmatpush1.bf16.msra.mxu0 0
        %2332 = vmatprep.subr.bf16.mxu0 0
        %2333 = vmatpush1.bf16.msra.mxu0 0
        %2334 = vmatprep.subr.bf16.mxu0 0
        %2335 = vmatpush1.bf16.msra.mxu0 0
        %2336 = vmatprep.subr.bf16.mxu0 0
        %2337 = vmatpush1.bf16.msra.mxu0 0
        %2338 = vmatprep.subr.bf16.mxu0 0
        %2339 = vmatpush1.bf16.msra.mxu0 0
        %2340 = vmatprep.subr.bf16.mxu0 0
        %2341 = vmatpush1.bf16.msra.mxu0 0
        %2342 = vmatprep.mubr.bf16.mxu0 0
        %2343 = vmatmul.mubr.bf16.gmra.mrb[0].mxu0 %v2254
        %v2344 = vpop.f32.mrb[0].mxu0
        %v2345 = vadd.f32 0.0, %v2344
        %v2346 = vpop.f32.mrb[0].mxu0
        %v2347 = vpop.f32.mrb[0].mxu0
        %v2348 = vadd.f32 0.0, %v2347
        %v2349 = vpop.f32.mrb[0].mxu0
        %2350 = vmatprep.mubr.bf16.mxu0 0
        %2351 = vmatmul.mubr.bf16.gmra.mrb[0].mxu0 %v2257
        %v2352 = vpop.f32.mrb[0].mxu0
        %v2353 = vadd.f32 0.0, %v2352
        %v2354 = vpop.f32.mrb[0].mxu0
        %v2355 = vpop.f32.mrb[0].mxu0
        %v2356 = vadd.f32 0.0, %v2355
        %v2357 = vpop.f32.mrb[0].mxu0
        %2358 = vmatprep.mubr.bf16.mxu0 0
        %2359 = vmatmul.mubr.bf16.gmra.mrb[0].mxu0 %v2260
        %v2360 = vpop.f32.mrb[0].mxu0
        %v2361 = vadd.f32 0.0, %v2360
        %v2362 = vpop.f32.mrb[0].mxu0
        %v2363 = vpop.f32.mrb[0].mxu0
        %v2364 = vadd.f32 0.0, %v2363
        %v2365 = vpop.f32.mrb[0].mxu0
        %2366 = vmatprep.mubr.bf16.mxu0 0
        %2367 = vmatmul.mubr.bf16.gmra.mrb[0].mxu0 %v2263
        %v2368 = vpop.f32.mrb[0].mxu0
        %v2369 = vadd.f32 0.0, %v2368
        %v2370 = vpop.f32.mrb[0].mxu0
        %v2371 = vpop.f32.mrb[0].mxu0
        %v2372 = vadd.f32 0.0, %v2371
        %v2373 = vpop.f32.mrb[0].mxu0
        %2374 = vmatprep.mubr.bf16.mxu0 0
        %2375 = vmatmul.mubr.bf16.gmra.mrb[0].mxu0 %v2266
        %v2376 = vpop.f32.mrb[0].mxu0
        %v2377 = vadd.f32 0.0, %v2376
        %v2378 = vpop.f32.mrb[0].mxu0
        %v2379 = vpop.f32.mrb[0].mxu0
        %v2380 = vadd.f32 0.0, %v2379
        %v2381 = vpop.f32.mrb[0].mxu0
        %2382 = vmatprep.mubr.bf16.mxu0 0
        %2383 = vmatmul.mubr.bf16.gmra.mrb[0].mxu0 %v2269
        %v2384 = vpop.f32.mrb[0].mxu0
        %v2385 = vadd.f32 0.0, %v2384
        %v2386 = vpop.f32.mrb[0].mxu0
        %v2387 = vpop.f32.mrb[0].mxu0
        %v2388 = vadd.f32 0.0, %v2387
        %v2389 = vpop.f32.mrb[0].mxu0
        %2390 = vmatprep.mubr.bf16.mxu0 0
        %2391 = vmatmul.mubr.bf16.gmra.mrb[0].mxu0 %v2272
        %v2392 = vpop.f32.mrb[0].mxu0
        %v2393 = vadd.f32 0.0, %v2392
        %v2394 = vpop.f32.mrb[0].mxu0
        %v2395 = vpop.f32.mrb[0].mxu0
        %v2396 = vadd.f32 0.0, %v2395
        %v2397 = vpop.f32.mrb[0].mxu0
        %2398 = vmatprep.mubr.bf16.mxu0 0
        %2399 = vmatmul.mubr.bf16.gmra.mrb[0].mxu0 %v2275
        %v2400 = vpop.f32.mrb[0].mxu0
        %v2401 = vadd.f32 0.0, %v2400
        %v2402 = vpop.f32.mrb[0].mxu0
        %v2403 = vpop.f32.mrb[0].mxu0
        %v2404 = vadd.f32 0.0, %v2403
        %v2405 = vpop.f32.mrb[0].mxu0
        %2406 = vmatprep.mubr.bf16.mxu0 0
        %2407 = vmatmul.mubr.bf16.gmra.mrb[0].mxu0 %v2278
        %v2408 = vpop.f32.mrb[0].mxu0
        %v2409 = vadd.f32 0.0, %v2408
        %v2410 = vpop.f32.mrb[0].mxu0
        %v2411 = vpop.f32.mrb[0].mxu0
        %v2412 = vadd.f32 0.0, %v2411
        %v2413 = vpop.f32.mrb[0].mxu0
        %2414 = vmatprep.mubr.bf16.mxu0 0
        %2415 = vmatmul.mubr.bf16.gmra.mrb[0].mxu0 %v2281
        %v2416 = vpop.f32.mrb[0].mxu0
        %v2417 = vadd.f32 0.0, %v2416
        %v2418 = vpop.f32.mrb[0].mxu0
        %v2419 = vpop.f32.mrb[0].mxu0
        %v2420 = vadd.f32 0.0, %v2419
        %v2421 = vpop.f32.mrb[0].mxu0
        %2422 = vmatprep.mubr.bf16.mxu0 0
        %2423 = vmatmul.mubr.bf16.gmra.mrb[0].mxu0 %v2284
        %v2424 = vpop.f32.mrb[0].mxu0
        %v2425 = vadd.f32 0.0, %v2424
        %v2426 = vpop.f32.mrb[0].mxu0
        %v2427 = vpop.f32.mrb[0].mxu0
        %v2428 = vadd.f32 0.0, %v2427
        %v2429 = vpop.f32.mrb[0].mxu0
        %2430 = vmatprep.mubr.bf16.mxu0 0
        %2431 = vmatmul.mubr.bf16.gmra.mrb[0].mxu0 %v2287
        %v2432 = vpop.f32.mrb[0].mxu0
        %v2433 = vadd.f32 0.0, %v2432
        %v2434 = vpop.f32.mrb[0].mxu0
        %v2435 = vpop.f32.mrb[0].mxu0
        %v2436 = vadd.f32 0.0, %v2435
        %v2437 = vpop.f32.mrb[0].mxu0
        %2438 = vmatprep.mubr.bf16.mxu0 0
        %2439 = vmatmul.mubr.bf16.gmra.mrb[0].mxu0 %v2290
        %v2440 = vpop.f32.mrb[0].mxu0
        %v2441 = vadd.f32 0.0, %v2440
        %v2442 = vpop.f32.mrb[0].mxu0
        %v2443 = vpop.f32.mrb[0].mxu0
        %v2444 = vadd.f32 0.0, %v2443
        %v2445 = vpop.f32.mrb[0].mxu0
        %2446 = vmatprep.mubr.bf16.mxu0 0
        %2447 = vmatmul.mubr.bf16.gmra.mrb[0].mxu0 %v2293
        %v2448 = vpop.f32.mrb[0].mxu0
        %v2449 = vadd.f32 0.0, %v2448
        %v2450 = vpop.f32.mrb[0].mxu0
        %v2451 = vpop.f32.mrb[0].mxu0
        %v2452 = vadd.f32 0.0, %v2451
        %v2453 = vpop.f32.mrb[0].mxu0
        %2454 = vmatprep.mubr.bf16.mxu0 0
        %2455 = vmatmul.mubr.bf16.gmra.mrb[0].mxu0 %v2296
        %v2456 = vpop.f32.mrb[0].mxu0
        %v2457 = vadd.f32 0.0, %v2456
        %v2458 = vpop.f32.mrb[0].mxu0
        %v2459 = vpop.f32.mrb[0].mxu0
        %v2460 = vadd.f32 0.0, %v2459
        %v2461 = vpop.f32.mrb[0].mxu0
        %2462 = vmatprep.mubr.bf16.mxu0 0
        %2463 = vmatmul.mubr.bf16.gmra.mrb[0].mxu0 %v2299
        %v2464 = vpop.f32.mrb[0].mxu0
        %v2465 = vadd.f32 0.0, %v2464
        %v2466 = vpop.f32.mrb[0].mxu0
        %v2467 = vpop.f32.mrb[0].mxu0
        %v2468 = vadd.f32 0.0, %v2467
        %v2469 = vpop.f32.mrb[0].mxu0
        %2470 = vmatprep.mubr.bf16.mxu0 0
        %2471 = vmatmul.mubr.bf16.gmra.mrb[0].mxu0 %v2302
        %v2472 = vpop.f32.mrb[0].mxu0
        %v2473 = vadd.f32 0.0, %v2472
        %v2474 = vpop.f32.mrb[0].mxu0
        %v2475 = vpop.f32.mrb[0].mxu0
        %v2476 = vadd.f32 0.0, %v2475
        %v2477 = vpop.f32.mrb[0].mxu0
        %2478 = vmatprep.mubr.bf16.mxu0 0
        %2479 = vmatmul.mubr.bf16.gmra.mrb[0].mxu0 %v2305
        %v2480 = vpop.f32.mrb[0].mxu0
        %v2481 = vadd.f32 0.0, %v2480
        %v2482 = vpop.f32.mrb[0].mxu0
        %v2483 = vpop.f32.mrb[0].mxu0
        %v2484 = vadd.f32 0.0, %v2483
        %v2485 = vpop.f32.mrb[0].mxu0
        %2486 = vdwg.mxu0
        %v2487 = vadd.f32 %v2173, %v2345
        %v2488 = vadd.f32 %v2174, %v2348
        %v2489 = vadd.f32 %v2175, %v2353
        %v2490 = vadd.f32 %v2176, %v2356
        %v2491 = vadd.f32 %v2177, %v2361
        %v2492 = vadd.f32 %v2178, %v2364
        %v2493 = vadd.f32 %v2179, %v2369
        %v2494 = vadd.f32 %v2180, %v2372
        %v2495 = vadd.f32 %v2181, %v2377
        %v2496 = vadd.f32 %v2182, %v2380
        %v2497 = vadd.f32 %v2183, %v2385
        %v2498 = vadd.f32 %v2184, %v2388
        %v2499 = vadd.f32 %v2185, %v2393
        %v2500 = vadd.f32 %v2186, %v2396
        %v2501 = vadd.f32 %v2187, %v2401
        %v2502 = vadd.f32 %v2188, %v2404
        %v2503 = vadd.f32 %v2189, %v2409
        %v2504 = vadd.f32 %v2190, %v2412
        %v2505 = vadd.f32 %v2191, %v2417
        %v2506 = vadd.f32 %v2192, %v2420
        %v2507 = vadd.f32 %v2193, %v2425
        %v2508 = vadd.f32 %v2194, %v2428
        %v2509 = vadd.f32 %v2195, %v2433
        %v2510 = vadd.f32 %v2196, %v2436
        %v2511 = vadd.f32 %v2197, %v2441
        %v2512 = vadd.f32 %v2198, %v2444
        %v2513 = vadd.f32 %v2199, %v2449
        %v2514 = vadd.f32 %v2200, %v2452
        %v2515 = vadd.f32 %v2201, %v2457
        %v2516 = vadd.f32 %v2202, %v2460
        %v2517 = vadd.f32 %v2203, %v2465
        %v2518 = vadd.f32 %v2204, %v2468
        %v2519 = vadd.f32 %v2205, %v2473
        %v2520 = vadd.f32 %v2206, %v2476
        %v2521 = vadd.f32 %v2207, %v2481
        %v2522 = vadd.f32 %v2208, %v2484
        %v2523 = vld [vmem:[%s269 + $0x10] sm:$0xc]
        %v2524 = vld [vmem:[%s269 + $0x14] sm:$0xf]
        %v2525 = vld [vmem:[%s269 + $0x18] sm:$0xf]
        %v2526 = vld [vmem:[%s269 + $0x1c] sm:$0xf]
        %v2527 = vld [vmem:[%s269 + $0x20] sm:$0xf]
        %v2528 = vld [vmem:[%s269 + $0x24] sm:$0xf]
        %v2529 = vld [vmem:[%s269 + $0x28] sm:$0xf]
        %v2530 = vld [vmem:[%s269 + $0x2c] sm:$0xf]
        %v2531 = vld [vmem:[%s269 + $0x30] sm:$0xf]
        %v2532 = vld [vmem:[%s269 + $0x34] sm:$0xf]
        %v2533 = vld [vmem:[%s269 + $0x38] sm:$0xf]
        %v2534 = vld [vmem:[%s269 + $0x3c] sm:$0xf]
        %v2535 = vld [vmem:[%s269 + $0x40] sm:$0xf]
        %v2536 = vld [vmem:[%s269 + $0x44] sm:$0xf]
        %v2537 = vld [vmem:[%s269 + $0x48] sm:$0xf]
        %v2538 = vld [vmem:[%s269 + $0x4c] sm:$0xf]
        %v2539 = vld [vmem:[%s269 + $0x50] sm:$0xf]
        %v2540 = vld [vmem:[%s269 + $0x54] sm:$0xf]
        %v2541 = vld [vmem:[%s269 + $0x58] sm:$0xf]
        %v2542 = vld [vmem:[%s269 + $0x5c] sm:$0xf]
        %v2543 = vld [vmem:[%s269 + $0x60] sm:$0xf]
        %v2544 = vld [vmem:[%s269 + $0x64] sm:$0xf]
        %v2545 = vld [vmem:[%s269 + $0x68] sm:$0xf]
        %v2546 = vld [vmem:[%s269 + $0x6c] sm:$0xf]
        %v2547 = vld [vmem:[%s269 + $0x70] sm:$0xf]
        %v2548 = vld [vmem:[%s269 + $0x74] sm:$0xf]
        %v2549 = vld [vmem:[%s269 + $0x78] sm:$0xf]
        %v2550 = vld [vmem:[%s269 + $0x7c] sm:$0xf]
        %v2551 = vld [vmem:[%s269 + $0x80] sm:$0xf]
        %v2552 = vld [vmem:[%s269 + $0x84] sm:$0xf]
        %v2553 = vld [vmem:[%s269 + $0x88] sm:$0xf]
        %v2554 = vld [vmem:[%s269 + $0x8c] sm:$0xf]
        %v2555 = vld [vmem:[%s269 + $0x90] sm:$0xf]
        %v2556 = vld [vmem:[%s269 + $0x94] sm:$0xf]
        %v2557 = vld [vmem:[%s269 + $0x98] sm:$0xf]
        %v2558 = vld [vmem:[%s269 + $0x9c] sm:$0xf]
        %v2559 = vld [vmem:[%s269 + $0xa0] sm:$0x3]
        %s2560 = scalar_lea.vmem %s273, 12
        %v2561 = vld [vmem:[%s2560] sm:$0x3]
        %v2599 = vunpack.c.l.b16 %v2523
        %v2600 = vunpack.c.l.b16 %v2524
        %v2601 = vunpack.c.l.b16 %v2525
        %v2602 = vunpack.c.l.b16 %v2526
        %v2603 = vunpack.c.l.b16 %v2527
        %v2604 = vunpack.c.l.b16 %v2528
        %v2605 = vunpack.c.l.b16 %v2529
        %v2606 = vunpack.c.l.b16 %v2530
        %v2607 = vunpack.c.l.b16 %v2531
        %v2608 = vunpack.c.l.b16 %v2532
        %v2609 = vunpack.c.l.b16 %v2533
        %v2610 = vunpack.c.l.b16 %v2534
        %v2611 = vunpack.c.l.b16 %v2535
        %v2612 = vunpack.c.l.b16 %v2536
        %v2613 = vunpack.c.l.b16 %v2537
        %v2614 = vunpack.c.l.b16 %v2538
        %v2615 = vunpack.c.l.b16 %v2539
        %v2616 = vunpack.c.l.b16 %v2540
        %v2617 = vunpack.c.l.b16 %v2541
        %v2618 = vunpack.c.l.b16 %v2542
        %v2619 = vunpack.c.l.b16 %v2543
        %v2620 = vunpack.c.l.b16 %v2544
        %v2621 = vunpack.c.l.b16 %v2545
        %v2622 = vunpack.c.l.b16 %v2546
        %v2623 = vunpack.c.l.b16 %v2547
        %v2624 = vunpack.c.l.b16 %v2548
        %v2625 = vunpack.c.l.b16 %v2549
        %v2626 = vunpack.c.l.b16 %v2550
        %v2627 = vunpack.c.l.b16 %v2551
        %v2628 = vunpack.c.l.b16 %v2552
        %v2629 = vunpack.c.l.b16 %v2553
        %v2630 = vunpack.c.l.b16 %v2554
        %v2631 = vunpack.c.l.b16 %v2555
        %v2632 = vunpack.c.l.b16 %v2556
        %v2633 = vunpack.c.l.b16 %v2557
        %v2634 = vunpack.c.l.b16 %v2558
        %v2635 = vunpack.c.l.b16 %v2559
        %v2636 = vpack.c.b16 %v2600, %v2599
        %v2637 = vpack.c.b16 %v2602, %v2601
        %v2638 = vpack.c.b16 %v2604, %v2603
        %v2639 = vpack.c.b16 %v2606, %v2605
        %v2640 = vpack.c.b16 %v2608, %v2607
        %v2641 = vpack.c.b16 %v2610, %v2609
        %v2642 = vpack.c.b16 %v2612, %v2611
        %v2643 = vpack.c.b16 %v2614, %v2613
        %v2644 = vpack.c.b16 %v2616, %v2615
        %v2645 = vpack.c.b16 %v2618, %v2617
        %v2646 = vpack.c.b16 %v2620, %v2619
        %v2647 = vpack.c.b16 %v2622, %v2621
        %v2648 = vpack.c.b16 %v2624, %v2623
        %v2649 = vpack.c.b16 %v2626, %v2625
        %v2650 = vpack.c.b16 %v2628, %v2627
        %v2651 = vpack.c.b16 %v2630, %v2629
        %v2652 = vpack.c.b16 %v2632, %v2631
        %v2653 = vpack.c.b16 %v2634, %v2633
        %v2654 = vpack.c.b16 %v2635, %v2635
        %v2655 = vrot.slane %v2636, 2
        %v2656 = vrot.slane %v2637, 2
        %v2657 = vsel %vm2215, %v2655, %v2656
        %v2658 = vrot.slane %v2638, 2
        %v2659 = vsel %vm2215, %v2656, %v2658
        %v2660 = vrot.slane %v2639, 2
        %v2661 = vsel %vm2215, %v2658, %v2660
        %v2662 = vrot.slane %v2640, 2
        %v2663 = vsel %vm2215, %v2660, %v2662
        %v2664 = vrot.slane %v2641, 2
        %v2665 = vsel %vm2215, %v2662, %v2664
        %v2666 = vrot.slane %v2642, 2
        %v2667 = vsel %vm2215, %v2664, %v2666
        %v2668 = vrot.slane %v2643, 2
        %v2669 = vsel %vm2215, %v2666, %v2668
        %v2670 = vrot.slane %v2644, 2
        %v2671 = vsel %vm2215, %v2668, %v2670
        %v2672 = vrot.slane %v2645, 2
        %v2673 = vsel %vm2215, %v2670, %v2672
        %v2674 = vrot.slane %v2646, 2
        %v2675 = vsel %vm2215, %v2672, %v2674
        %v2676 = vrot.slane %v2647, 2
        %v2677 = vsel %vm2215, %v2674, %v2676
        %v2678 = vrot.slane %v2648, 2
        %v2679 = vsel %vm2215, %v2676, %v2678
        %v2680 = vrot.slane %v2649, 2
        %v2681 = vsel %vm2215, %v2678, %v2680
        %v2682 = vrot.slane %v2650, 2
        %v2683 = vsel %vm2215, %v2680, %v2682
        %v2684 = vrot.slane %v2651, 2
        %v2685 = vsel %vm2215, %v2682, %v2684
        %v2686 = vrot.slane %v2652, 2
        %v2687 = vsel %vm2215, %v2684, %v2686
        %v2688 = vrot.slane %v2653, 2
        %v2689 = vsel %vm2215, %v2686, %v2688
        %v2690 = vrot.slane %v2654, 2
        %v2691 = vsel %vm2215, %v2688, %v2690
        %v2693 = vsel %vm557, %v2657, 0
        %v2696 = vsel %vm557, %v2659, 0
        %v2699 = vsel %vm557, %v2661, 0
        %v2702 = vsel %vm557, %v2663, 0
        %v2705 = vsel %vm557, %v2665, 0
        %v2708 = vsel %vm557, %v2667, 0
        %v2711 = vsel %vm557, %v2669, 0
        %v2714 = vsel %vm557, %v2671, 0
        %v2717 = vsel %vm557, %v2673, 0
        %v2720 = vsel %vm557, %v2675, 0
        %v2723 = vsel %vm557, %v2677, 0
        %v2726 = vsel %vm557, %v2679, 0
        %v2729 = vsel %vm557, %v2681, 0
        %v2732 = vsel %vm557, %v2683, 0
        %v2735 = vsel %vm557, %v2685, 0
        %v2738 = vsel %vm557, %v2687, 0
        %v2741 = vsel %vm557, %v2689, 0
        %v2744 = vsel %vm557, %v2691, 0
        %v2747 = vsel %vm612, %v2561, 0
        %2749 = vmatprep.subr.bf16.mxu0 0
        %2750 = vmatpush1.bf16.msra.mxu0 %v2747
        %2751 = vmatprep.subr.bf16.mxu0 0
        %2752 = vmatpush1.bf16.msra.mxu0 0
        %2753 = vmatprep.subr.bf16.mxu0 0
        %2754 = vmatpush1.bf16.msra.mxu0 0
        %2755 = vmatprep.subr.bf16.mxu0 0
        %2756 = vmatpush1.bf16.msra.mxu0 0
        %2757 = vmatprep.subr.bf16.mxu0 0
        %2758 = vmatpush1.bf16.msra.mxu0 0
        %2759 = vmatprep.subr.bf16.mxu0 0
        %2760 = vmatpush1.bf16.msra.mxu0 0
        %2761 = vmatprep.subr.bf16.mxu0 0
        %2762 = vmatpush1.bf16.msra.mxu0 0
        %2763 = vmatprep.subr.bf16.mxu0 0
        %2764 = vmatpush1.bf16.msra.mxu0 0
        %2765 = vmatprep.subr.bf16.mxu0 0
        %2766 = vmatpush1.bf16.msra.mxu0 0
        %2767 = vmatprep.subr.bf16.mxu0 0
        %2768 = vmatpush1.bf16.msra.mxu0 0
        %2769 = vmatprep.subr.bf16.mxu0 0
        %2770 = vmatpush1.bf16.msra.mxu0 0
        %2771 = vmatprep.subr.bf16.mxu0 0
        %2772 = vmatpush1.bf16.msra.mxu0 0
        %2773 = vmatprep.subr.bf16.mxu0 0
        %2774 = vmatpush1.bf16.msra.mxu0 0
        %2775 = vmatprep.subr.bf16.mxu0 0
        %2776 = vmatpush1.bf16.msra.mxu0 0
        %2777 = vmatprep.subr.bf16.mxu0 0
        %2778 = vmatpush1.bf16.msra.mxu0 0
        %2779 = vmatprep.subr.bf16.mxu0 0
        %2780 = vmatpush1.bf16.msra.mxu0 0
        %2781 = vmatprep.mubr.bf16.mxu0 0
        %2782 = vmatmul.mubr.bf16.gmra.mrb[0].mxu0 %v2693
        %v2783 = vpop.f32.mrb[0].mxu0
        %v2784 = vadd.f32 0.0, %v2783
        %v2785 = vpop.f32.mrb[0].mxu0
        %v2786 = vpop.f32.mrb[0].mxu0
        %v2787 = vadd.f32 0.0, %v2786
        %v2788 = vpop.f32.mrb[0].mxu0
        %2789 = vmatprep.mubr.bf16.mxu0 0
        %2790 = vmatmul.mubr.bf16.gmra.mrb[0].mxu0 %v2696
        %v2791 = vpop.f32.mrb[0].mxu0
        %v2792 = vadd.f32 0.0, %v2791
        %v2793 = vpop.f32.mrb[0].mxu0
        %v2794 = vpop.f32.mrb[0].mxu0
        %v2795 = vadd.f32 0.0, %v2794
        %v2796 = vpop.f32.mrb[0].mxu0
        %2797 = vmatprep.mubr.bf16.mxu0 0
        %2798 = vmatmul.mubr.bf16.gmra.mrb[0].mxu0 %v2699
        %v2799 = vpop.f32.mrb[0].mxu0
        %v2800 = vadd.f32 0.0, %v2799
        %v2801 = vpop.f32.mrb[0].mxu0
        %v2802 = vpop.f32.mrb[0].mxu0
        %v2803 = vadd.f32 0.0, %v2802
        %v2804 = vpop.f32.mrb[0].mxu0
        %2805 = vmatprep.mubr.bf16.mxu0 0
        %2806 = vmatmul.mubr.bf16.gmra.mrb[0].mxu0 %v2702
        %v2807 = vpop.f32.mrb[0].mxu0
        %v2808 = vadd.f32 0.0, %v2807
        %v2809 = vpop.f32.mrb[0].mxu0
        %v2810 = vpop.f32.mrb[0].mxu0
        %v2811 = vadd.f32 0.0, %v2810
        %v2812 = vpop.f32.mrb[0].mxu0
        %2813 = vmatprep.mubr.bf16.mxu0 0
        %2814 = vmatmul.mubr.bf16.gmra.mrb[0].mxu0 %v2705
        %v2815 = vpop.f32.mrb[0].mxu0
        %v2816 = vadd.f32 0.0, %v2815
        %v2817 = vpop.f32.mrb[0].mxu0
        %v2818 = vpop.f32.mrb[0].mxu0
        %v2819 = vadd.f32 0.0, %v2818
        %v2820 = vpop.f32.mrb[0].mxu0
        %2821 = vmatprep.mubr.bf16.mxu0 0
        %2822 = vmatmul.mubr.bf16.gmra.mrb[0].mxu0 %v2708
        %v2823 = vpop.f32.mrb[0].mxu0
        %v2824 = vadd.f32 0.0, %v2823
        %v2825 = vpop.f32.mrb[0].mxu0
        %v2826 = vpop.f32.mrb[0].mxu0
        %v2827 = vadd.f32 0.0, %v2826
        %v2828 = vpop.f32.mrb[0].mxu0
        %2829 = vmatprep.mubr.bf16.mxu0 0
        %2830 = vmatmul.mubr.bf16.gmra.mrb[0].mxu0 %v2711
        %v2831 = vpop.f32.mrb[0].mxu0
        %v2832 = vadd.f32 0.0, %v2831
        %v2833 = vpop.f32.mrb[0].mxu0
        %v2834 = vpop.f32.mrb[0].mxu0
        %v2835 = vadd.f32 0.0, %v2834
        %v2836 = vpop.f32.mrb[0].mxu0
        %2837 = vmatprep.mubr.bf16.mxu0 0
        %2838 = vmatmul.mubr.bf16.gmra.mrb[0].mxu0 %v2714
        %v2839 = vpop.f32.mrb[0].mxu0
        %v2840 = vadd.f32 0.0, %v2839
        %v2841 = vpop.f32.mrb[0].mxu0
        %v2842 = vpop.f32.mrb[0].mxu0
        %v2843 = vadd.f32 0.0, %v2842
        %v2844 = vpop.f32.mrb[0].mxu0
        %2845 = vmatprep.mubr.bf16.mxu0 0
        %2846 = vmatmul.mubr.bf16.gmra.mrb[0].mxu0 %v2717
        %v2847 = vpop.f32.mrb[0].mxu0
        %v2848 = vadd.f32 0.0, %v2847
        %v2849 = vpop.f32.mrb[0].mxu0
        %v2850 = vpop.f32.mrb[0].mxu0
        %v2851 = vadd.f32 0.0, %v2850
        %v2852 = vpop.f32.mrb[0].mxu0
        %2853 = vmatprep.mubr.bf16.mxu0 0
        %2854 = vmatmul.mubr.bf16.gmra.mrb[0].mxu0 %v2720
        %v2855 = vpop.f32.mrb[0].mxu0
        %v2856 = vadd.f32 0.0, %v2855
        %v2857 = vpop.f32.mrb[0].mxu0
        %v2858 = vpop.f32.mrb[0].mxu0
        %v2859 = vadd.f32 0.0, %v2858
        %v2860 = vpop.f32.mrb[0].mxu0
        %2861 = vmatprep.mubr.bf16.mxu0 0
        %2862 = vmatmul.mubr.bf16.gmra.mrb[0].mxu0 %v2723
        %v2863 = vpop.f32.mrb[0].mxu0
        %v2864 = vadd.f32 0.0, %v2863
        %v2865 = vpop.f32.mrb[0].mxu0
        %v2866 = vpop.f32.mrb[0].mxu0
        %v2867 = vadd.f32 0.0, %v2866
        %v2868 = vpop.f32.mrb[0].mxu0
        %2869 = vmatprep.mubr.bf16.mxu0 0
        %2870 = vmatmul.mubr.bf16.gmra.mrb[0].mxu0 %v2726
        %v2871 = vpop.f32.mrb[0].mxu0
        %v2872 = vadd.f32 0.0, %v2871
        %v2873 = vpop.f32.mrb[0].mxu0
        %v2874 = vpop.f32.mrb[0].mxu0
        %v2875 = vadd.f32 0.0, %v2874
        %v2876 = vpop.f32.mrb[0].mxu0
        %2877 = vmatprep.mubr.bf16.mxu0 0
        %2878 = vmatmul.mubr.bf16.gmra.mrb[0].mxu0 %v2729
        %v2879 = vpop.f32.mrb[0].mxu0
        %v2880 = vadd.f32 0.0, %v2879
        %v2881 = vpop.f32.mrb[0].mxu0
        %v2882 = vpop.f32.mrb[0].mxu0
        %v2883 = vadd.f32 0.0, %v2882
        %v2884 = vpop.f32.mrb[0].mxu0
        %2885 = vmatprep.mubr.bf16.mxu0 0
        %2886 = vmatmul.mubr.bf16.gmra.mrb[0].mxu0 %v2732
        %v2887 = vpop.f32.mrb[0].mxu0
        %v2888 = vadd.f32 0.0, %v2887
        %v2889 = vpop.f32.mrb[0].mxu0
        %v2890 = vpop.f32.mrb[0].mxu0
        %v2891 = vadd.f32 0.0, %v2890
        %v2892 = vpop.f32.mrb[0].mxu0
        %2893 = vmatprep.mubr.bf16.mxu0 0
        %2894 = vmatmul.mubr.bf16.gmra.mrb[0].mxu0 %v2735
        %v2895 = vpop.f32.mrb[0].mxu0
        %v2896 = vadd.f32 0.0, %v2895
        %v2897 = vpop.f32.mrb[0].mxu0
        %v2898 = vpop.f32.mrb[0].mxu0
        %v2899 = vadd.f32 0.0, %v2898
        %v2900 = vpop.f32.mrb[0].mxu0
        %2901 = vmatprep.mubr.bf16.mxu0 0
        %2902 = vmatmul.mubr.bf16.gmra.mrb[0].mxu0 %v2738
        %v2903 = vpop.f32.mrb[0].mxu0
        %v2904 = vadd.f32 0.0, %v2903
        %v2905 = vpop.f32.mrb[0].mxu0
        %v2906 = vpop.f32.mrb[0].mxu0
        %v2907 = vadd.f32 0.0, %v2906
        %v2908 = vpop.f32.mrb[0].mxu0
        %2909 = vmatprep.mubr.bf16.mxu0 0
        %2910 = vmatmul.mubr.bf16.gmra.mrb[0].mxu0 %v2741
        %v2911 = vpop.f32.mrb[0].mxu0
        %v2912 = vadd.f32 0.0, %v2911
        %v2913 = vpop.f32.mrb[0].mxu0
        %v2914 = vpop.f32.mrb[0].mxu0
        %v2915 = vadd.f32 0.0, %v2914
        %v2916 = vpop.f32.mrb[0].mxu0
        %2917 = vmatprep.mubr.bf16.mxu0 0
        %2918 = vmatmul.mubr.bf16.gmra.mrb[0].mxu0 %v2744
        %v2919 = vpop.f32.mrb[0].mxu0
        %v2920 = vadd.f32 0.0, %v2919
        %v2921 = vpop.f32.mrb[0].mxu0
        %v2922 = vpop.f32.mrb[0].mxu0
        %v2923 = vadd.f32 0.0, %v2922
        %v2924 = vpop.f32.mrb[0].mxu0
        %2925 = vdwg.mxu0
        %v2926 = vadd.f32 %v2487, %v2784
        %v2927 = vadd.f32 %v2488, %v2787
        %v2928 = vadd.f32 %v2489, %v2792
        %v2929 = vadd.f32 %v2490, %v2795
        %v2930 = vadd.f32 %v2491, %v2800
        %v2931 = vadd.f32 %v2492, %v2803
        %v2932 = vadd.f32 %v2493, %v2808
        %v2933 = vadd.f32 %v2494, %v2811
        %v2934 = vadd.f32 %v2495, %v2816
        %v2935 = vadd.f32 %v2496, %v2819
        %v2936 = vadd.f32 %v2497, %v2824
        %v2937 = vadd.f32 %v2498, %v2827
        %v2938 = vadd.f32 %v2499, %v2832
        %v2939 = vadd.f32 %v2500, %v2835
        %v2940 = vadd.f32 %v2501, %v2840
        %v2941 = vadd.f32 %v2502, %v2843
        %v2942 = vadd.f32 %v2503, %v2848
        %v2943 = vadd.f32 %v2504, %v2851
        %v2944 = vadd.f32 %v2505, %v2856
        %v2945 = vadd.f32 %v2506, %v2859
        %v2946 = vadd.f32 %v2507, %v2864
        %v2947 = vadd.f32 %v2508, %v2867
        %v2948 = vadd.f32 %v2509, %v2872
        %v2949 = vadd.f32 %v2510, %v2875
        %v2950 = vadd.f32 %v2511, %v2880
        %v2951 = vadd.f32 %v2512, %v2883
        %v2952 = vadd.f32 %v2513, %v2888
        %v2953 = vadd.f32 %v2514, %v2891
        %v2954 = vadd.f32 %v2515, %v2896
        %v2955 = vadd.f32 %v2516, %v2899
        %v2956 = vadd.f32 %v2517, %v2904
        %v2957 = vadd.f32 %v2518, %v2907
        %v2958 = vadd.f32 %v2519, %v2912
        %v2959 = vadd.f32 %v2520, %v2915
        %v2960 = vadd.f32 %v2521, %v2920
        %v2961 = vadd.f32 %v2522, %v2923
        %v2962 = vld [vmem:[%s269 + $0xa0] sm:$0x7]
        %s2963 = scalar_lea.vmem %s273, 14
        %v2964 = vld [vmem:[%s2963] sm:$0x3]
        %v2966 = vunpack.c.l.b16 %v2962
        %v2967 = vpack.c.b16 %v2966, %v2966
        %vm2968 = vsmask.f32 5376
        %v2970 = vshrl.u32 %v2636, 16
        %v2972 = vrot.slane %v2970, 2
        %v2973 = vshll.u32 %v2636, 16
        %v2975 = vrot.slane %v2973, 3
        %v2976 = vor.u32 %v2972, %v2975
        %v2978 = vshrl.u32 %v2637, 16
        %v2980 = vrot.slane %v2978, 2
        %v2981 = vshll.u32 %v2637, 16
        %v2983 = vrot.slane %v2981, 3
        %v2984 = vor.u32 %v2980, %v2983
        %v2985 = vsel %vm2968, %v2976, %v2984
        %v2987 = vshrl.u32 %v2638, 16
        %v2989 = vrot.slane %v2987, 2
        %v2990 = vshll.u32 %v2638, 16
        %v2992 = vrot.slane %v2990, 3
        %v2993 = vor.u32 %v2989, %v2992
        %v2994 = vsel %vm2968, %v2984, %v2993
        %v2996 = vshrl.u32 %v2639, 16
        %v2998 = vrot.slane %v2996, 2
        %v2999 = vshll.u32 %v2639, 16
        %v3001 = vrot.slane %v2999, 3
        %v3002 = vor.u32 %v2998, %v3001
        %v3003 = vsel %vm2968, %v2993, %v3002
        %v3005 = vshrl.u32 %v2640, 16
        %v3007 = vrot.slane %v3005, 2
        %v3008 = vshll.u32 %v2640, 16
        %v3010 = vrot.slane %v3008, 3
        %v3011 = vor.u32 %v3007, %v3010
        %v3012 = vsel %vm2968, %v3002, %v3011
        %v3014 = vshrl.u32 %v2641, 16
        %v3016 = vrot.slane %v3014, 2
        %v3017 = vshll.u32 %v2641, 16
        %v3019 = vrot.slane %v3017, 3
        %v3020 = vor.u32 %v3016, %v3019
        %v3021 = vsel %vm2968, %v3011, %v3020
        %v3023 = vshrl.u32 %v2642, 16
        %v3025 = vrot.slane %v3023, 2
        %v3026 = vshll.u32 %v2642, 16
        %v3028 = vrot.slane %v3026, 3
        %v3029 = vor.u32 %v3025, %v3028
        %v3030 = vsel %vm2968, %v3020, %v3029
        %v3032 = vshrl.u32 %v2643, 16
        %v3034 = vrot.slane %v3032, 2
        %v3035 = vshll.u32 %v2643, 16
        %v3037 = vrot.slane %v3035, 3
        %v3038 = vor.u32 %v3034, %v3037
        %v3039 = vsel %vm2968, %v3029, %v3038
        %v3041 = vshrl.u32 %v2644, 16
        %v3043 = vrot.slane %v3041, 2
        %v3044 = vshll.u32 %v2644, 16
        %v3046 = vrot.slane %v3044, 3
        %v3047 = vor.u32 %v3043, %v3046
        %v3048 = vsel %vm2968, %v3038, %v3047
        %v3050 = vshrl.u32 %v2645, 16
        %v3052 = vrot.slane %v3050, 2
        %v3053 = vshll.u32 %v2645, 16
        %v3055 = vrot.slane %v3053, 3
        %v3056 = vor.u32 %v3052, %v3055
        %v3057 = vsel %vm2968, %v3047, %v3056
        %v3059 = vshrl.u32 %v2646, 16
        %v3061 = vrot.slane %v3059, 2
        %v3062 = vshll.u32 %v2646, 16
        %v3064 = vrot.slane %v3062, 3
        %v3065 = vor.u32 %v3061, %v3064
        %v3066 = vsel %vm2968, %v3056, %v3065
        %v3068 = vshrl.u32 %v2647, 16
        %v3070 = vrot.slane %v3068, 2
        %v3071 = vshll.u32 %v2647, 16
        %v3073 = vrot.slane %v3071, 3
        %v3074 = vor.u32 %v3070, %v3073
        %v3075 = vsel %vm2968, %v3065, %v3074
        %v3077 = vshrl.u32 %v2648, 16
        %v3079 = vrot.slane %v3077, 2
        %v3080 = vshll.u32 %v2648, 16
        %v3082 = vrot.slane %v3080, 3
        %v3083 = vor.u32 %v3079, %v3082
        %v3084 = vsel %vm2968, %v3074, %v3083
        %v3086 = vshrl.u32 %v2649, 16
        %v3088 = vrot.slane %v3086, 2
        %v3089 = vshll.u32 %v2649, 16
        %v3091 = vrot.slane %v3089, 3
        %v3092 = vor.u32 %v3088, %v3091
        %v3093 = vsel %vm2968, %v3083, %v3092
        %v3095 = vshrl.u32 %v2650, 16
        %v3097 = vrot.slane %v3095, 2
        %v3098 = vshll.u32 %v2650, 16
        %v3100 = vrot.slane %v3098, 3
        %v3101 = vor.u32 %v3097, %v3100
        %v3102 = vsel %vm2968, %v3092, %v3101
        %v3104 = vshrl.u32 %v2651, 16
        %v3106 = vrot.slane %v3104, 2
        %v3107 = vshll.u32 %v2651, 16
        %v3109 = vrot.slane %v3107, 3
        %v3110 = vor.u32 %v3106, %v3109
        %v3111 = vsel %vm2968, %v3101, %v3110
        %v3113 = vshrl.u32 %v2652, 16
        %v3115 = vrot.slane %v3113, 2
        %v3116 = vshll.u32 %v2652, 16
        %v3118 = vrot.slane %v3116, 3
        %v3119 = vor.u32 %v3115, %v3118
        %v3120 = vsel %vm2968, %v3110, %v3119
        %v3122 = vshrl.u32 %v2653, 16
        %v3124 = vrot.slane %v3122, 2
        %v3125 = vshll.u32 %v2653, 16
        %v3127 = vrot.slane %v3125, 3
        %v3128 = vor.u32 %v3124, %v3127
        %v3129 = vsel %vm2968, %v3119, %v3128
        %v3131 = vshrl.u32 %v2967, 16
        %v3133 = vrot.slane %v3131, 2
        %v3134 = vshll.u32 %v2967, 16
        %v3136 = vrot.slane %v3134, 3
        %v3137 = vor.u32 %v3133, %v3136
        %v3138 = vsel %vm2968, %v3128, %v3137
        %v3140 = vsel %vm557, %v2985, 0
        %v3143 = vsel %vm557, %v2994, 0
        %v3146 = vsel %vm557, %v3003, 0
        %v3149 = vsel %vm557, %v3012, 0
        %v3152 = vsel %vm557, %v3021, 0
        %v3155 = vsel %vm557, %v3030, 0
        %v3158 = vsel %vm557, %v3039, 0
        %v3161 = vsel %vm557, %v3048, 0
        %v3164 = vsel %vm557, %v3057, 0
        %v3167 = vsel %vm557, %v3066, 0
        %v3170 = vsel %vm557, %v3075, 0
        %v3173 = vsel %vm557, %v3084, 0
        %v3176 = vsel %vm557, %v3093, 0
        %v3179 = vsel %vm557, %v3102, 0
        %v3182 = vsel %vm557, %v3111, 0
        %v3185 = vsel %vm557, %v3120, 0
        %v3188 = vsel %vm557, %v3129, 0
        %v3191 = vsel %vm557, %v3138, 0
        %v3194 = vsel %vm612, %v2964, 0
        %3196 = vmatprep.subr.bf16.mxu0 0
        %3197 = vmatpush1.bf16.msra.mxu0 %v3194
        %3198 = vmatprep.subr.bf16.mxu0 0
        %3199 = vmatpush1.bf16.msra.mxu0 0
        %3200 = vmatprep.subr.bf16.mxu0 0
        %3201 = vmatpush1.bf16.msra.mxu0 0
        %3202 = vmatprep.subr.bf16.mxu0 0
        %3203 = vmatpush1.bf16.msra.mxu0 0
        %3204 = vmatprep.subr.bf16.mxu0 0
        %3205 = vmatpush1.bf16.msra.mxu0 0
        %3206 = vmatprep.subr.bf16.mxu0 0
        %3207 = vmatpush1.bf16.msra.mxu0 0
        %3208 = vmatprep.subr.bf16.mxu0 0
        %3209 = vmatpush1.bf16.msra.mxu0 0
        %3210 = vmatprep.subr.bf16.mxu0 0
        %3211 = vmatpush1.bf16.msra.mxu0 0
        %3212 = vmatprep.subr.bf16.mxu0 0
        %3213 = vmatpush1.bf16.msra.mxu0 0
        %3214 = vmatprep.subr.bf16.mxu0 0
        %3215 = vmatpush1.bf16.msra.mxu0 0
        %3216 = vmatprep.subr.bf16.mxu0 0
        %3217 = vmatpush1.bf16.msra.mxu0 0
        %3218 = vmatprep.subr.bf16.mxu0 0
        %3219 = vmatpush1.bf16.msra.mxu0 0
        %3220 = vmatprep.subr.bf16.mxu0 0
        %3221 = vmatpush1.bf16.msra.mxu0 0
        %3222 = vmatprep.subr.bf16.mxu0 0
        %3223 = vmatpush1.bf16.msra.mxu0 0
        %3224 = vmatprep.subr.bf16.mxu0 0
        %3225 = vmatpush1.bf16.msra.mxu0 0
        %3226 = vmatprep.subr.bf16.mxu0 0
        %3227 = vmatpush1.bf16.msra.mxu0 0
        %3228 = vmatprep.mubr.bf16.mxu0 0
        %3229 = vmatmul.mubr.bf16.gmra.mrb[0].mxu0 %v3140
        %v3230 = vpop.f32.mrb[0].mxu0
        %v3231 = vadd.f32 0.0, %v3230
        %v3232 = vpop.f32.mrb[0].mxu0
        %v3233 = vpop.f32.mrb[0].mxu0
        %v3234 = vadd.f32 0.0, %v3233
        %v3235 = vpop.f32.mrb[0].mxu0
        %3236 = vmatprep.mubr.bf16.mxu0 0
        %3237 = vmatmul.mubr.bf16.gmra.mrb[0].mxu0 %v3143
        %v3238 = vpop.f32.mrb[0].mxu0
        %v3239 = vadd.f32 0.0, %v3238
        %v3240 = vpop.f32.mrb[0].mxu0
        %v3241 = vpop.f32.mrb[0].mxu0
        %v3242 = vadd.f32 0.0, %v3241
        %v3243 = vpop.f32.mrb[0].mxu0
        %3244 = vmatprep.mubr.bf16.mxu0 0
        %3245 = vmatmul.mubr.bf16.gmra.mrb[0].mxu0 %v3146
        %v3246 = vpop.f32.mrb[0].mxu0
        %v3247 = vadd.f32 0.0, %v3246
        %v3248 = vpop.f32.mrb[0].mxu0
        %v3249 = vpop.f32.mrb[0].mxu0
        %v3250 = vadd.f32 0.0, %v3249
        %v3251 = vpop.f32.mrb[0].mxu0
        %3252 = vmatprep.mubr.bf16.mxu0 0
        %3253 = vmatmul.mubr.bf16.gmra.mrb[0].mxu0 %v3149
        %v3254 = vpop.f32.mrb[0].mxu0
        %v3255 = vadd.f32 0.0, %v3254
        %v3256 = vpop.f32.mrb[0].mxu0
        %v3257 = vpop.f32.mrb[0].mxu0
        %v3258 = vadd.f32 0.0, %v3257
        %v3259 = vpop.f32.mrb[0].mxu0
        %3260 = vmatprep.mubr.bf16.mxu0 0
        %3261 = vmatmul.mubr.bf16.gmra.mrb[0].mxu0 %v3152
        %v3262 = vpop.f32.mrb[0].mxu0
        %v3263 = vadd.f32 0.0, %v3262
        %v3264 = vpop.f32.mrb[0].mxu0
        %v3265 = vpop.f32.mrb[0].mxu0
        %v3266 = vadd.f32 0.0, %v3265
        %v3267 = vpop.f32.mrb[0].mxu0
        %3268 = vmatprep.mubr.bf16.mxu0 0
        %3269 = vmatmul.mubr.bf16.gmra.mrb[0].mxu0 %v3155
        %v3270 = vpop.f32.mrb[0].mxu0
        %v3271 = vadd.f32 0.0, %v3270
        %v3272 = vpop.f32.mrb[0].mxu0
        %v3273 = vpop.f32.mrb[0].mxu0
        %v3274 = vadd.f32 0.0, %v3273
        %v3275 = vpop.f32.mrb[0].mxu0
        %3276 = vmatprep.mubr.bf16.mxu0 0
        %3277 = vmatmul.mubr.bf16.gmra.mrb[0].mxu0 %v3158
        %v3278 = vpop.f32.mrb[0].mxu0
        %v3279 = vadd.f32 0.0, %v3278
        %v3280 = vpop.f32.mrb[0].mxu0
        %v3281 = vpop.f32.mrb[0].mxu0
        %v3282 = vadd.f32 0.0, %v3281
        %v3283 = vpop.f32.mrb[0].mxu0
        %3284 = vmatprep.mubr.bf16.mxu0 0
        %3285 = vmatmul.mubr.bf16.gmra.mrb[0].mxu0 %v3161
        %v3286 = vpop.f32.mrb[0].mxu0
        %v3287 = vadd.f32 0.0, %v3286
        %v3288 = vpop.f32.mrb[0].mxu0
        %v3289 = vpop.f32.mrb[0].mxu0
        %v3290 = vadd.f32 0.0, %v3289
        %v3291 = vpop.f32.mrb[0].mxu0
        %3292 = vmatprep.mubr.bf16.mxu0 0
        %3293 = vmatmul.mubr.bf16.gmra.mrb[0].mxu0 %v3164
        %v3294 = vpop.f32.mrb[0].mxu0
        %v3295 = vadd.f32 0.0, %v3294
        %v3296 = vpop.f32.mrb[0].mxu0
        %v3297 = vpop.f32.mrb[0].mxu0
        %v3298 = vadd.f32 0.0, %v3297
        %v3299 = vpop.f32.mrb[0].mxu0
        %3300 = vmatprep.mubr.bf16.mxu0 0
        %3301 = vmatmul.mubr.bf16.gmra.mrb[0].mxu0 %v3167
        %v3302 = vpop.f32.mrb[0].mxu0
        %v3303 = vadd.f32 0.0, %v3302
        %v3304 = vpop.f32.mrb[0].mxu0
        %v3305 = vpop.f32.mrb[0].mxu0
        %v3306 = vadd.f32 0.0, %v3305
        %v3307 = vpop.f32.mrb[0].mxu0
        %3308 = vmatprep.mubr.bf16.mxu0 0
        %3309 = vmatmul.mubr.bf16.gmra.mrb[0].mxu0 %v3170
        %v3310 = vpop.f32.mrb[0].mxu0
        %v3311 = vadd.f32 0.0, %v3310
        %v3312 = vpop.f32.mrb[0].mxu0
        %v3313 = vpop.f32.mrb[0].mxu0
        %v3314 = vadd.f32 0.0, %v3313
        %v3315 = vpop.f32.mrb[0].mxu0
        %3316 = vmatprep.mubr.bf16.mxu0 0
        %3317 = vmatmul.mubr.bf16.gmra.mrb[0].mxu0 %v3173
        %v3318 = vpop.f32.mrb[0].mxu0
        %v3319 = vadd.f32 0.0, %v3318
        %v3320 = vpop.f32.mrb[0].mxu0
        %v3321 = vpop.f32.mrb[0].mxu0
        %v3322 = vadd.f32 0.0, %v3321
        %v3323 = vpop.f32.mrb[0].mxu0
        %3324 = vmatprep.mubr.bf16.mxu0 0
        %3325 = vmatmul.mubr.bf16.gmra.mrb[0].mxu0 %v3176
        %v3326 = vpop.f32.mrb[0].mxu0
        %v3327 = vadd.f32 0.0, %v3326
        %v3328 = vpop.f32.mrb[0].mxu0
        %v3329 = vpop.f32.mrb[0].mxu0
        %v3330 = vadd.f32 0.0, %v3329
        %v3331 = vpop.f32.mrb[0].mxu0
        %3332 = vmatprep.mubr.bf16.mxu0 0
        %3333 = vmatmul.mubr.bf16.gmra.mrb[0].mxu0 %v3179
        %v3334 = vpop.f32.mrb[0].mxu0
        %v3335 = vadd.f32 0.0, %v3334
        %v3336 = vpop.f32.mrb[0].mxu0
        %v3337 = vpop.f32.mrb[0].mxu0
        %v3338 = vadd.f32 0.0, %v3337
        %v3339 = vpop.f32.mrb[0].mxu0
        %3340 = vmatprep.mubr.bf16.mxu0 0
        %3341 = vmatmul.mubr.bf16.gmra.mrb[0].mxu0 %v3182
        %v3342 = vpop.f32.mrb[0].mxu0
        %v3343 = vadd.f32 0.0, %v3342
        %v3344 = vpop.f32.mrb[0].mxu0
        %v3345 = vpop.f32.mrb[0].mxu0
        %v3346 = vadd.f32 0.0, %v3345
        %v3347 = vpop.f32.mrb[0].mxu0
        %3348 = vmatprep.mubr.bf16.mxu0 0
        %3349 = vmatmul.mubr.bf16.gmra.mrb[0].mxu0 %v3185
        %v3350 = vpop.f32.mrb[0].mxu0
        %v3351 = vadd.f32 0.0, %v3350
        %v3352 = vpop.f32.mrb[0].mxu0
        %v3353 = vpop.f32.mrb[0].mxu0
        %v3354 = vadd.f32 0.0, %v3353
        %v3355 = vpop.f32.mrb[0].mxu0
        %3356 = vmatprep.mubr.bf16.mxu0 0
        %3357 = vmatmul.mubr.bf16.gmra.mrb[0].mxu0 %v3188
        %v3358 = vpop.f32.mrb[0].mxu0
        %v3359 = vadd.f32 0.0, %v3358
        %v3360 = vpop.f32.mrb[0].mxu0
        %v3361 = vpop.f32.mrb[0].mxu0
        %v3362 = vadd.f32 0.0, %v3361
        %v3363 = vpop.f32.mrb[0].mxu0
        %3364 = vmatprep.mubr.bf16.mxu0 0
        %3365 = vmatmul.mubr.bf16.gmra.mrb[0].mxu0 %v3191
        %v3366 = vpop.f32.mrb[0].mxu0
        %v3367 = vadd.f32 0.0, %v3366
        %v3368 = vpop.f32.mrb[0].mxu0
        %v3369 = vpop.f32.mrb[0].mxu0
        %v3370 = vadd.f32 0.0, %v3369
        %v3371 = vpop.f32.mrb[0].mxu0
        %3372 = vdwg.mxu0
        %v3373 = vadd.f32 %v2926, %v3231
        %v3374 = vadd.f32 %v2927, %v3234
        %v3375 = vadd.f32 %v2928, %v3239
        %v3376 = vadd.f32 %v2929, %v3242
        %v3377 = vadd.f32 %v2930, %v3247
        %v3378 = vadd.f32 %v2931, %v3250
        %v3379 = vadd.f32 %v2932, %v3255
        %v3380 = vadd.f32 %v2933, %v3258
        %v3381 = vadd.f32 %v2934, %v3263
        %v3382 = vadd.f32 %v2935, %v3266
        %v3383 = vadd.f32 %v2936, %v3271
        %v3384 = vadd.f32 %v2937, %v3274
        %v3385 = vadd.f32 %v2938, %v3279
        %v3386 = vadd.f32 %v2939, %v3282
        %v3387 = vadd.f32 %v2940, %v3287
        %v3388 = vadd.f32 %v2941, %v3290
        %v3389 = vadd.f32 %v2942, %v3295
        %v3390 = vadd.f32 %v2943, %v3298
        %v3391 = vadd.f32 %v2944, %v3303
        %v3392 = vadd.f32 %v2945, %v3306
        %v3393 = vadd.f32 %v2946, %v3311
        %v3394 = vadd.f32 %v2947, %v3314
        %v3395 = vadd.f32 %v2948, %v3319
        %v3396 = vadd.f32 %v2949, %v3322
        %v3397 = vadd.f32 %v2950, %v3327
        %v3398 = vadd.f32 %v2951, %v3330
        %v3399 = vadd.f32 %v2952, %v3335
        %v3400 = vadd.f32 %v2953, %v3338
        %v3401 = vadd.f32 %v2954, %v3343
        %v3402 = vadd.f32 %v2955, %v3346
        %v3403 = vadd.f32 %v2956, %v3351
        %v3404 = vadd.f32 %v2957, %v3354
        %v3405 = vadd.f32 %v2958, %v3359
        %v3406 = vadd.f32 %v2959, %v3362
        %v3407 = vadd.f32 %v2960, %v3367
        %v3408 = vadd.f32 %v2961, %v3370
        %v3409 = vld [vmem:[%s269 + $0x10] sm:$0x8]
        %s3410 = scalar_lea.vmem %s273, 16
        %v3411 = vld [vmem:[%s3410] sm:$0x3]
        %v3413 = vunpack.c.l.b16 %v3409
        %v3414 = vpack.c.b16 %v2600, %v3413
        %vm3415 = vcmask 1044480
        %v3416 = vrot.slane %v3414, 3
        %v3417 = vrot.slane %v2637, 3
        %v3418 = vsel %vm3415, %v3416, %v3417
        %v3419 = vrot.slane %v2638, 3
        %v3420 = vsel %vm3415, %v3417, %v3419
        %v3421 = vrot.slane %v2639, 3
        %v3422 = vsel %vm3415, %v3419, %v3421
        %v3423 = vrot.slane %v2640, 3
        %v3424 = vsel %vm3415, %v3421, %v3423
        %v3425 = vrot.slane %v2641, 3
        %v3426 = vsel %vm3415, %v3423, %v3425
        %v3427 = vrot.slane %v2642, 3
        %v3428 = vsel %vm3415, %v3425, %v3427
        %v3429 = vrot.slane %v2643, 3
        %v3430 = vsel %vm3415, %v3427, %v3429
        %v3431 = vrot.slane %v2644, 3
        %v3432 = vsel %vm3415, %v3429, %v3431
        %v3433 = vrot.slane %v2645, 3
        %v3434 = vsel %vm3415, %v3431, %v3433
        %v3435 = vrot.slane %v2646, 3
        %v3436 = vsel %vm3415, %v3433, %v3435
        %v3437 = vrot.slane %v2647, 3
        %v3438 = vsel %vm3415, %v3435, %v3437
        %v3439 = vrot.slane %v2648, 3
        %v3440 = vsel %vm3415, %v3437, %v3439
        %v3441 = vrot.slane %v2649, 3
        %v3442 = vsel %vm3415, %v3439, %v3441
        %v3443 = vrot.slane %v2650, 3
        %v3444 = vsel %vm3415, %v3441, %v3443
        %v3445 = vrot.slane %v2651, 3
        %v3446 = vsel %vm3415, %v3443, %v3445
        %v3447 = vrot.slane %v2652, 3
        %v3448 = vsel %vm3415, %v3445, %v3447
        %v3449 = vrot.slane %v2653, 3
        %v3450 = vsel %vm3415, %v3447, %v3449
        %v3451 = vrot.slane %v2967, 3
        %v3452 = vsel %vm3415, %v3449, %v3451
        %v3454 = vsel %vm557, %v3418, 0
        %v3457 = vsel %vm557, %v3420, 0
        %v3460 = vsel %vm557, %v3422, 0
        %v3463 = vsel %vm557, %v3424, 0
        %v3466 = vsel %vm557, %v3426, 0
        %v3469 = vsel %vm557, %v3428, 0
        %v3472 = vsel %vm557, %v3430, 0
        %v3475 = vsel %vm557, %v3432, 0
        %v3478 = vsel %vm557, %v3434, 0
        %v3481 = vsel %vm557, %v3436, 0
        %v3484 = vsel %vm557, %v3438, 0
        %v3487 = vsel %vm557, %v3440, 0
        %v3490 = vsel %vm557, %v3442, 0
        %v3493 = vsel %vm557, %v3444, 0
        %v3496 = vsel %vm557, %v3446, 0
        %v3499 = vsel %vm557, %v3448, 0
        %v3502 = vsel %vm557, %v3450, 0
        %v3505 = vsel %vm557, %v3452, 0
        %v3508 = vsel %vm612, %v3411, 0
        %3510 = vmatprep.subr.bf16.mxu0 0
        %3511 = vmatpush1.bf16.msra.mxu0 %v3508
        %3512 = vmatprep.subr.bf16.mxu0 0
        %3513 = vmatpush1.bf16.msra.mxu0 0
        %3514 = vmatprep.subr.bf16.mxu0 0
        %3515 = vmatpush1.bf16.msra.mxu0 0
        %3516 = vmatprep.subr.bf16.mxu0 0
        %3517 = vmatpush1.bf16.msra.mxu0 0
        %3518 = vmatprep.subr.bf16.mxu0 0
        %3519 = vmatpush1.bf16.msra.mxu0 0
        %3520 = vmatprep.subr.bf16.mxu0 0
        %3521 = vmatpush1.bf16.msra.mxu0 0
        %3522 = vmatprep.subr.bf16.mxu0 0
        %3523 = vmatpush1.bf16.msra.mxu0 0
        %3524 = vmatprep.subr.bf16.mxu0 0
        %3525 = vmatpush1.bf16.msra.mxu0 0
        %3526 = vmatprep.subr.bf16.mxu0 0
        %3527 = vmatpush1.bf16.msra.mxu0 0
        %3528 = vmatprep.subr.bf16.mxu0 0
        %3529 = vmatpush1.bf16.msra.mxu0 0
        %3530 = vmatprep.subr.bf16.mxu0 0
        %3531 = vmatpush1.bf16.msra.mxu0 0
        %3532 = vmatprep.subr.bf16.mxu0 0
        %3533 = vmatpush1.bf16.msra.mxu0 0
        %3534 = vmatprep.subr.bf16.mxu0 0
        %3535 = vmatpush1.bf16.msra.mxu0 0
        %3536 = vmatprep.subr.bf16.mxu0 0
        %3537 = vmatpush1.bf16.msra.mxu0 0
        %3538 = vmatprep.subr.bf16.mxu0 0
        %3539 = vmatpush1.bf16.msra.mxu0 0
        %3540 = vmatprep.subr.bf16.mxu0 0
        %3541 = vmatpush1.bf16.msra.mxu0 0
        %3542 = vmatprep.mubr.bf16.mxu0 0
        %3543 = vmatmul.mubr.bf16.gmra.mrb[0].mxu0 %v3454
        %v3544 = vpop.f32.mrb[0].mxu0
        %v3545 = vadd.f32 0.0, %v3544
        %v3546 = vpop.f32.mrb[0].mxu0
        %v3547 = vpop.f32.mrb[0].mxu0
        %v3548 = vadd.f32 0.0, %v3547
        %v3549 = vpop.f32.mrb[0].mxu0
        %3550 = vmatprep.mubr.bf16.mxu0 0
        %3551 = vmatmul.mubr.bf16.gmra.mrb[0].mxu0 %v3457
        %v3552 = vpop.f32.mrb[0].mxu0
        %v3553 = vadd.f32 0.0, %v3552
        %v3554 = vpop.f32.mrb[0].mxu0
        %v3555 = vpop.f32.mrb[0].mxu0
        %v3556 = vadd.f32 0.0, %v3555
        %v3557 = vpop.f32.mrb[0].mxu0
        %3558 = vmatprep.mubr.bf16.mxu0 0
        %3559 = vmatmul.mubr.bf16.gmra.mrb[0].mxu0 %v3460
        %v3560 = vpop.f32.mrb[0].mxu0
        %v3561 = vadd.f32 0.0, %v3560
        %v3562 = vpop.f32.mrb[0].mxu0
        %v3563 = vpop.f32.mrb[0].mxu0
        %v3564 = vadd.f32 0.0, %v3563
        %v3565 = vpop.f32.mrb[0].mxu0
        %3566 = vmatprep.mubr.bf16.mxu0 0
        %3567 = vmatmul.mubr.bf16.gmra.mrb[0].mxu0 %v3463
        %v3568 = vpop.f32.mrb[0].mxu0
        %v3569 = vadd.f32 0.0, %v3568
        %v3570 = vpop.f32.mrb[0].mxu0
        %v3571 = vpop.f32.mrb[0].mxu0
        %v3572 = vadd.f32 0.0, %v3571
        %v3573 = vpop.f32.mrb[0].mxu0
        %3574 = vmatprep.mubr.bf16.mxu0 0
        %3575 = vmatmul.mubr.bf16.gmra.mrb[0].mxu0 %v3466
        %v3576 = vpop.f32.mrb[0].mxu0
        %v3577 = vadd.f32 0.0, %v3576
        %v3578 = vpop.f32.mrb[0].mxu0
        %v3579 = vpop.f32.mrb[0].mxu0
        %v3580 = vadd.f32 0.0, %v3579
        %v3581 = vpop.f32.mrb[0].mxu0
        %3582 = vmatprep.mubr.bf16.mxu0 0
        %3583 = vmatmul.mubr.bf16.gmra.mrb[0].mxu0 %v3469
        %v3584 = vpop.f32.mrb[0].mxu0
        %v3585 = vadd.f32 0.0, %v3584
        %v3586 = vpop.f32.mrb[0].mxu0
        %v3587 = vpop.f32.mrb[0].mxu0
        %v3588 = vadd.f32 0.0, %v3587
        %v3589 = vpop.f32.mrb[0].mxu0
        %3590 = vmatprep.mubr.bf16.mxu0 0
        %3591 = vmatmul.mubr.bf16.gmra.mrb[0].mxu0 %v3472
        %v3592 = vpop.f32.mrb[0].mxu0
        %v3593 = vadd.f32 0.0, %v3592
        %v3594 = vpop.f32.mrb[0].mxu0
        %v3595 = vpop.f32.mrb[0].mxu0
        %v3596 = vadd.f32 0.0, %v3595
        %v3597 = vpop.f32.mrb[0].mxu0
        %3598 = vmatprep.mubr.bf16.mxu0 0
        %3599 = vmatmul.mubr.bf16.gmra.mrb[0].mxu0 %v3475
        %v3600 = vpop.f32.mrb[0].mxu0
        %v3601 = vadd.f32 0.0, %v3600
        %v3602 = vpop.f32.mrb[0].mxu0
        %v3603 = vpop.f32.mrb[0].mxu0
        %v3604 = vadd.f32 0.0, %v3603
        %v3605 = vpop.f32.mrb[0].mxu0
        %3606 = vmatprep.mubr.bf16.mxu0 0
        %3607 = vmatmul.mubr.bf16.gmra.mrb[0].mxu0 %v3478
        %v3608 = vpop.f32.mrb[0].mxu0
        %v3609 = vadd.f32 0.0, %v3608
        %v3610 = vpop.f32.mrb[0].mxu0
        %v3611 = vpop.f32.mrb[0].mxu0
        %v3612 = vadd.f32 0.0, %v3611
        %v3613 = vpop.f32.mrb[0].mxu0
        %3614 = vmatprep.mubr.bf16.mxu0 0
        %3615 = vmatmul.mubr.bf16.gmra.mrb[0].mxu0 %v3481
        %v3616 = vpop.f32.mrb[0].mxu0
        %v3617 = vadd.f32 0.0, %v3616
        %v3618 = vpop.f32.mrb[0].mxu0
        %v3619 = vpop.f32.mrb[0].mxu0
        %v3620 = vadd.f32 0.0, %v3619
        %v3621 = vpop.f32.mrb[0].mxu0
        %3622 = vmatprep.mubr.bf16.mxu0 0
        %3623 = vmatmul.mubr.bf16.gmra.mrb[0].mxu0 %v3484
        %v3624 = vpop.f32.mrb[0].mxu0
        %v3625 = vadd.f32 0.0, %v3624
        %v3626 = vpop.f32.mrb[0].mxu0
        %v3627 = vpop.f32.mrb[0].mxu0
        %v3628 = vadd.f32 0.0, %v3627
        %v3629 = vpop.f32.mrb[0].mxu0
        %3630 = vmatprep.mubr.bf16.mxu0 0
        %3631 = vmatmul.mubr.bf16.gmra.mrb[0].mxu0 %v3487
        %v3632 = vpop.f32.mrb[0].mxu0
        %v3633 = vadd.f32 0.0, %v3632
        %v3634 = vpop.f32.mrb[0].mxu0
        %v3635 = vpop.f32.mrb[0].mxu0
        %v3636 = vadd.f32 0.0, %v3635
        %v3637 = vpop.f32.mrb[0].mxu0
        %3638 = vmatprep.mubr.bf16.mxu0 0
        %3639 = vmatmul.mubr.bf16.gmra.mrb[0].mxu0 %v3490
        %v3640 = vpop.f32.mrb[0].mxu0
        %v3641 = vadd.f32 0.0, %v3640
        %v3642 = vpop.f32.mrb[0].mxu0
        %v3643 = vpop.f32.mrb[0].mxu0
        %v3644 = vadd.f32 0.0, %v3643
        %v3645 = vpop.f32.mrb[0].mxu0
        %3646 = vmatprep.mubr.bf16.mxu0 0
        %3647 = vmatmul.mubr.bf16.gmra.mrb[0].mxu0 %v3493
        %v3648 = vpop.f32.mrb[0].mxu0
        %v3649 = vadd.f32 0.0, %v3648
        %v3650 = vpop.f32.mrb[0].mxu0
        %v3651 = vpop.f32.mrb[0].mxu0
        %v3652 = vadd.f32 0.0, %v3651
        %v3653 = vpop.f32.mrb[0].mxu0
        %3654 = vmatprep.mubr.bf16.mxu0 0
        %3655 = vmatmul.mubr.bf16.gmra.mrb[0].mxu0 %v3496
        %v3656 = vpop.f32.mrb[0].mxu0
        %v3657 = vadd.f32 0.0, %v3656
        %v3658 = vpop.f32.mrb[0].mxu0
        %v3659 = vpop.f32.mrb[0].mxu0
        %v3660 = vadd.f32 0.0, %v3659
        %v3661 = vpop.f32.mrb[0].mxu0
        %3662 = vmatprep.mubr.bf16.mxu0 0
        %3663 = vmatmul.mubr.bf16.gmra.mrb[0].mxu0 %v3499
        %v3664 = vpop.f32.mrb[0].mxu0
        %v3665 = vadd.f32 0.0, %v3664
        %v3666 = vpop.f32.mrb[0].mxu0
        %v3667 = vpop.f32.mrb[0].mxu0
        %v3668 = vadd.f32 0.0, %v3667
        %v3669 = vpop.f32.mrb[0].mxu0
        %3670 = vmatprep.mubr.bf16.mxu0 0
        %3671 = vmatmul.mubr.bf16.gmra.mrb[0].mxu0 %v3502
        %v3672 = vpop.f32.mrb[0].mxu0
        %v3673 = vadd.f32 0.0, %v3672
        %v3674 = vpop.f32.mrb[0].mxu0
        %v3675 = vpop.f32.mrb[0].mxu0
        %v3676 = vadd.f32 0.0, %v3675
        %v3677 = vpop.f32.mrb[0].mxu0
        %3678 = vmatprep.mubr.bf16.mxu0 0
        %3679 = vmatmul.mubr.bf16.gmra.mrb[0].mxu0 %v3505
        %v3680 = vpop.f32.mrb[0].mxu0
        %v3681 = vadd.f32 0.0, %v3680
        %v3682 = vpop.f32.mrb[0].mxu0
        %v3683 = vpop.f32.mrb[0].mxu0
        %v3684 = vadd.f32 0.0, %v3683
        %v3685 = vpop.f32.mrb[0].mxu0
        %3686 = vdwg.mxu0
        %v3687 = vadd.f32 %v3373, %v3545
        %v3688 = vadd.f32 %v3374, %v3548
        %v3689 = vadd.f32 %v3375, %v3553
        %v3690 = vadd.f32 %v3376, %v3556
        %v3691 = vadd.f32 %v3377, %v3561
        %v3692 = vadd.f32 %v3378, %v3564
        %v3693 = vadd.f32 %v3379, %v3569
        %v3694 = vadd.f32 %v3380, %v3572
        %v3695 = vadd.f32 %v3381, %v3577
        %v3696 = vadd.f32 %v3382, %v3580
        %v3697 = vadd.f32 %v3383, %v3585
        %v3698 = vadd.f32 %v3384, %v3588
        %v3699 = vadd.f32 %v3385, %v3593
        %v3700 = vadd.f32 %v3386, %v3596
        %v3701 = vadd.f32 %v3387, %v3601
        %v3702 = vadd.f32 %v3388, %v3604
        %v3703 = vadd.f32 %v3389, %v3609
        %v3704 = vadd.f32 %v3390, %v3612
        %v3705 = vadd.f32 %v3391, %v3617
        %v3706 = vadd.f32 %v3392, %v3620
        %v3707 = vadd.f32 %v3393, %v3625
        %v3708 = vadd.f32 %v3394, %v3628
        %v3709 = vadd.f32 %v3395, %v3633
        %v3710 = vadd.f32 %v3396, %v3636
        %v3711 = vadd.f32 %v3397, %v3641
        %v3712 = vadd.f32 %v3398, %v3644
        %v3713 = vadd.f32 %v3399, %v3649
        %v3714 = vadd.f32 %v3400, %v3652
        %v3715 = vadd.f32 %v3401, %v3657
        %v3716 = vadd.f32 %v3402, %v3660
        %v3717 = vadd.f32 %v3403, %v3665
        %v3718 = vadd.f32 %v3404, %v3668
        %v3719 = vadd.f32 %v3405, %v3673
        %v3720 = vadd.f32 %v3406, %v3676
        %v3721 = vadd.f32 %v3407, %v3681
        %v3722 = vadd.f32 %v3408, %v3684
        %v3723 = vld [vmem:[%s2] sm:$0xff]
        %v3724 = vld [vmem:[%s2 + $0x8] sm:$0xff]
        %v3725 = vld [vmem:[%s2 + $0x10] sm:$0xff]
        %v3726 = vld [vmem:[%s2 + $0x18] sm:$0xff]
        %v3727 = vld [vmem:[%s2 + $0x20] sm:$0xff]
        %v3728 = vld [vmem:[%s2 + $0x28] sm:$0xff]
        %v3729 = vld [vmem:[%s2 + $0x30] sm:$0xff]
        %v3730 = vld [vmem:[%s2 + $0x38] sm:$0xff]
        %v3731 = vld [vmem:[%s2 + $0x40] sm:$0xff]
        %v3732 = vld [vmem:[%s2 + $0x48] sm:$0xff]
        %v3733 = vld [vmem:[%s2 + $0x50] sm:$0xff]
        %v3734 = vld [vmem:[%s2 + $0x58] sm:$0xff]
        %v3735 = vld [vmem:[%s2 + $0x60] sm:$0xff]
        %v3736 = vld [vmem:[%s2 + $0x68] sm:$0xff]
        %v3737 = vld [vmem:[%s2 + $0x70] sm:$0xff]
        %v3738 = vld [vmem:[%s2 + $0x78] sm:$0xff]
        %v3739 = vld [vmem:[%s2 + $0x80] sm:$0xff]
        %v3740 = vld [vmem:[%s2 + $0x88] sm:$0xff]
        %v3741 = vld [vmem:[%s2 + $0x90] sm:$0xff]
        %v3742 = vld [vmem:[%s2 + $0x98] sm:$0xff]
        %v3743 = vld [vmem:[%s2 + $0xa0] sm:$0xff]
        %v3744 = vld [vmem:[%s2 + $0xa8] sm:$0xff]
        %v3745 = vld [vmem:[%s2 + $0xb0] sm:$0xff]
        %v3746 = vld [vmem:[%s2 + $0xb8] sm:$0xff]
        %v3747 = vld [vmem:[%s2 + $0xc0] sm:$0xff]
        %v3748 = vld [vmem:[%s2 + $0xc8] sm:$0xff]
        %v3749 = vld [vmem:[%s2 + $0xd0] sm:$0xff]
        %v3750 = vld [vmem:[%s2 + $0xd8] sm:$0xff]
        %v3751 = vld [vmem:[%s2 + $0xe0] sm:$0xff]
        %v3752 = vld [vmem:[%s2 + $0xe8] sm:$0xff]
        %v3753 = vld [vmem:[%s2 + $0xf0] sm:$0xff]
        %v3754 = vld [vmem:[%s2 + $0xf8] sm:$0xff]
        %v3755 = vld [vmem:[%s2 + $0x100] sm:$0xff]
        %v3756 = vld [vmem:[%s2 + $0x108] sm:$0xff]
        %v3757 = vld [vmem:[%s2 + $0x110] sm:$0xff]
        %v3758 = vld [vmem:[%s2 + $0x118] sm:$0xff]
        %3760 = vset.pattern.permute.xlu0 0
        %3761 = vperm.xlu0 %3760, %v3723
        %v3762 = vpop.permute.xlu0 %3761
        %3765 = vset.pattern.permute.xlu0 0
        %3766 = vperm.xlu0 %3765, %v3724
        %v3767 = vpop.permute.xlu0 %3766
        %3770 = vset.pattern.permute.xlu0 0
        %3771 = vperm.xlu0 %3770, %v3725
        %v3772 = vpop.permute.xlu0 %3771
        %3775 = vset.pattern.permute.xlu0 0
        %3776 = vperm.xlu0 %3775, %v3726
        %v3777 = vpop.permute.xlu0 %3776
        %3780 = vset.pattern.permute.xlu0 0
        %3781 = vperm.xlu0 %3780, %v3727
        %v3782 = vpop.permute.xlu0 %3781
        %3785 = vset.pattern.permute.xlu0 0
        %3786 = vperm.xlu0 %3785, %v3728
        %v3787 = vpop.permute.xlu0 %3786
        %3790 = vset.pattern.permute.xlu0 0
        %3791 = vperm.xlu0 %3790, %v3729
        %v3792 = vpop.permute.xlu0 %3791
        %3795 = vset.pattern.permute.xlu0 0
        %3796 = vperm.xlu0 %3795, %v3730
        %v3797 = vpop.permute.xlu0 %3796
        %3800 = vset.pattern.permute.xlu0 0
        %3801 = vperm.xlu0 %3800, %v3731
        %v3802 = vpop.permute.xlu0 %3801
        %3805 = vset.pattern.permute.xlu0 0
        %3806 = vperm.xlu0 %3805, %v3732
        %v3807 = vpop.permute.xlu0 %3806
        %3810 = vset.pattern.permute.xlu0 0
        %3811 = vperm.xlu0 %3810, %v3733
        %v3812 = vpop.permute.xlu0 %3811
        %3815 = vset.pattern.permute.xlu0 0
        %3816 = vperm.xlu0 %3815, %v3734
        %v3817 = vpop.permute.xlu0 %3816
        %3820 = vset.pattern.permute.xlu0 0
        %3821 = vperm.xlu0 %3820, %v3735
        %v3822 = vpop.permute.xlu0 %3821
        %3825 = vset.pattern.permute.xlu0 0
        %3826 = vperm.xlu0 %3825, %v3736
        %v3827 = vpop.permute.xlu0 %3826
        %3830 = vset.pattern.permute.xlu0 0
        %3831 = vperm.xlu0 %3830, %v3737
        %v3832 = vpop.permute.xlu0 %3831
        %3835 = vset.pattern.permute.xlu0 0
        %3836 = vperm.xlu0 %3835, %v3738
        %v3837 = vpop.permute.xlu0 %3836
        %3840 = vset.pattern.permute.xlu0 0
        %3841 = vperm.xlu0 %3840, %v3739
        %v3842 = vpop.permute.xlu0 %3841
        %3845 = vset.pattern.permute.xlu0 0
        %3846 = vperm.xlu0 %3845, %v3740
        %v3847 = vpop.permute.xlu0 %3846
        %3850 = vset.pattern.permute.xlu0 0
        %3851 = vperm.xlu0 %3850, %v3741
        %v3852 = vpop.permute.xlu0 %3851
        %3855 = vset.pattern.permute.xlu0 0
        %3856 = vperm.xlu0 %3855, %v3742
        %v3857 = vpop.permute.xlu0 %3856
        %3860 = vset.pattern.permute.xlu0 0
        %3861 = vperm.xlu0 %3860, %v3743
        %v3862 = vpop.permute.xlu0 %3861
        %3865 = vset.pattern.permute.xlu0 0
        %3866 = vperm.xlu0 %3865, %v3744
        %v3867 = vpop.permute.xlu0 %3866
        %3870 = vset.pattern.permute.xlu0 0
        %3871 = vperm.xlu0 %3870, %v3745
        %v3872 = vpop.permute.xlu0 %3871
        %3875 = vset.pattern.permute.xlu0 0
        %3876 = vperm.xlu0 %3875, %v3746
        %v3877 = vpop.permute.xlu0 %3876
        %3880 = vset.pattern.permute.xlu0 0
        %3881 = vperm.xlu0 %3880, %v3747
        %v3882 = vpop.permute.xlu0 %3881
        %3885 = vset.pattern.permute.xlu0 0
        %3886 = vperm.xlu0 %3885, %v3748
        %v3887 = vpop.permute.xlu0 %3886
        %3890 = vset.pattern.permute.xlu0 0
        %3891 = vperm.xlu0 %3890, %v3749
        %v3892 = vpop.permute.xlu0 %3891
        %3895 = vset.pattern.permute.xlu0 0
        %3896 = vperm.xlu0 %3895, %v3750
        %v3897 = vpop.permute.xlu0 %3896
        %3900 = vset.pattern.permute.xlu0 0
        %3901 = vperm.xlu0 %3900, %v3751
        %v3902 = vpop.permute.xlu0 %3901
        %3905 = vset.pattern.permute.xlu0 0
        %3906 = vperm.xlu0 %3905, %v3752
        %v3907 = vpop.permute.xlu0 %3906
        %3910 = vset.pattern.permute.xlu0 0
        %3911 = vperm.xlu0 %3910, %v3753
        %v3912 = vpop.permute.xlu0 %3911
        %3915 = vset.pattern.permute.xlu0 0
        %3916 = vperm.xlu0 %3915, %v3754
        %v3917 = vpop.permute.xlu0 %3916
        %3920 = vset.pattern.permute.xlu0 0
        %3921 = vperm.xlu0 %3920, %v3755
        %v3922 = vpop.permute.xlu0 %3921
        %3925 = vset.pattern.permute.xlu0 0
        %3926 = vperm.xlu0 %3925, %v3756
        %v3927 = vpop.permute.xlu0 %3926
        %3930 = vset.pattern.permute.xlu0 0
        %3931 = vperm.xlu0 %3930, %v3757
        %v3932 = vpop.permute.xlu0 %3931
        %3935 = vset.pattern.permute.xlu0 0
        %3936 = vperm.xlu0 %3935, %v3758
        %v3937 = vpop.permute.xlu0 %3936
        %v3939 = vmul.f32 %v3687, %v3762
        %v3940 = vmul.f32 %v3688, %v3767
        %v3941 = vmul.f32 %v3689, %v3772
        %v3942 = vmul.f32 %v3690, %v3777
        %v3943 = vmul.f32 %v3691, %v3782
        %v3944 = vmul.f32 %v3692, %v3787
        %v3945 = vmul.f32 %v3693, %v3792
        %v3946 = vmul.f32 %v3694, %v3797
        %v3947 = vmul.f32 %v3695, %v3802
        %v3948 = vmul.f32 %v3696, %v3807
        %v3949 = vmul.f32 %v3697, %v3812
        %v3950 = vmul.f32 %v3698, %v3817
        %v3951 = vmul.f32 %v3699, %v3822
        %v3952 = vmul.f32 %v3700, %v3827
        %v3953 = vmul.f32 %v3701, %v3832
        %v3954 = vmul.f32 %v3702, %v3837
        %v3955 = vmul.f32 %v3703, %v3842
        %v3956 = vmul.f32 %v3704, %v3847
        %v3957 = vmul.f32 %v3705, %v3852
        %v3958 = vmul.f32 %v3706, %v3857
        %v3959 = vmul.f32 %v3707, %v3862
        %v3960 = vmul.f32 %v3708, %v3867
        %v3961 = vmul.f32 %v3709, %v3872
        %v3962 = vmul.f32 %v3710, %v3877
        %v3963 = vmul.f32 %v3711, %v3882
        %v3964 = vmul.f32 %v3712, %v3887
        %v3965 = vmul.f32 %v3713, %v3892
        %v3966 = vmul.f32 %v3714, %v3897
        %v3967 = vmul.f32 %v3715, %v3902
        %v3968 = vmul.f32 %v3716, %v3907
        %v3969 = vmul.f32 %v3717, %v3912
        %v3970 = vmul.f32 %v3718, %v3917
        %v3971 = vmul.f32 %v3719, %v3922
        %v3972 = vmul.f32 %v3720, %v3927
        %v3973 = vmul.f32 %v3721, %v3932
        %v3974 = vmul.f32 %v3722, %v3937
        %v3975 = vadd.f32 %v3939, %v3940
        %v3976 = vadd.f32 %v3975, %v3941
        %v3977 = vadd.f32 %v3976, %v3942
        %v3978 = vadd.f32 %v3977, %v3943
        %v3979 = vadd.f32 %v3978, %v3944
        %v3980 = vadd.f32 %v3979, %v3945
        %v3981 = vadd.f32 %v3980, %v3946
        %v3982 = vadd.f32 %v3981, %v3947
        %v3983 = vadd.f32 %v3982, %v3948
        %v3984 = vadd.f32 %v3983, %v3949
        %v3985 = vadd.f32 %v3984, %v3950
        %v3986 = vadd.f32 %v3985, %v3951
        %v3987 = vadd.f32 %v3986, %v3952
        %v3988 = vadd.f32 %v3987, %v3953
        %v3989 = vadd.f32 %v3988, %v3954
        %v3990 = vadd.f32 %v3989, %v3955
        %v3991 = vadd.f32 %v3990, %v3956
        %v3992 = vadd.f32 %v3991, %v3957
        %v3993 = vadd.f32 %v3992, %v3958
        %v3994 = vadd.f32 %v3993, %v3959
        %v3995 = vadd.f32 %v3994, %v3960
        %v3996 = vadd.f32 %v3995, %v3961
        %v3997 = vadd.f32 %v3996, %v3962
        %v3998 = vadd.f32 %v3997, %v3963
        %v3999 = vadd.f32 %v3998, %v3964
        %v4000 = vadd.f32 %v3999, %v3965
        %v4001 = vadd.f32 %v4000, %v3966
        %v4002 = vadd.f32 %v4001, %v3967
        %v4003 = vadd.f32 %v4002, %v3968
        %v4004 = vadd.f32 %v4003, %v3969
        %v4005 = vadd.f32 %v4004, %v3970
        %v4006 = vadd.f32 %v4005, %v3971
        %v4007 = vadd.f32 %v4006, %v3972
        %v4008 = vadd.f32 %v4007, %v3973
        %v4009 = vadd.f32 %v4008, %v3974
        %v4010 = vrot.slane %v4009, 4
        %v4011 = vadd.f32 %v4009, %v4010
        %v4012 = vrot.slane %v4011, 2
        %v4013 = vadd.f32 %v4011, %v4012
        %v4014 = vrot.slane %v4013, 1
        %v4015 = vadd.f32 %v4013, %v4014
        %4016 = vst [vmem:[%s258] sm:$0x1] %v4015
        %v4017 = vmul.f32 %v3939, %v3939
        %v4018 = vmul.f32 %v3940, %v3940
        %v4019 = vmul.f32 %v3941, %v3941
        %v4020 = vmul.f32 %v3942, %v3942
        %v4021 = vmul.f32 %v3943, %v3943
        %v4022 = vmul.f32 %v3944, %v3944
        %v4023 = vmul.f32 %v3945, %v3945
        %v4024 = vmul.f32 %v3946, %v3946
        %v4025 = vmul.f32 %v3947, %v3947
        %v4026 = vmul.f32 %v3948, %v3948
        %v4027 = vmul.f32 %v3949, %v3949
        %v4028 = vmul.f32 %v3950, %v3950
        %v4029 = vmul.f32 %v3951, %v3951
        %v4030 = vmul.f32 %v3952, %v3952
        %v4031 = vmul.f32 %v3953, %v3953
        %v4032 = vmul.f32 %v3954, %v3954
        %v4033 = vmul.f32 %v3955, %v3955
        %v4034 = vmul.f32 %v3956, %v3956
        %v4035 = vmul.f32 %v3957, %v3957
        %v4036 = vmul.f32 %v3958, %v3958
        %v4037 = vmul.f32 %v3959, %v3959
        %v4038 = vmul.f32 %v3960, %v3960
        %v4039 = vmul.f32 %v3961, %v3961
        %v4040 = vmul.f32 %v3962, %v3962
        %v4041 = vmul.f32 %v3963, %v3963
        %v4042 = vmul.f32 %v3964, %v3964
        %v4043 = vmul.f32 %v3965, %v3965
        %v4044 = vmul.f32 %v3966, %v3966
        %v4045 = vmul.f32 %v3967, %v3967
        %v4046 = vmul.f32 %v3968, %v3968
        %v4047 = vmul.f32 %v3969, %v3969
        %v4048 = vmul.f32 %v3970, %v3970
        %v4049 = vmul.f32 %v3971, %v3971
        %v4050 = vmul.f32 %v3972, %v3972
        %v4051 = vmul.f32 %v3973, %v3973
        %v4052 = vmul.f32 %v3974, %v3974
        %v4053 = vadd.f32 %v4017, %v4018
        %v4054 = vadd.f32 %v4053, %v4019
        %v4055 = vadd.f32 %v4054, %v4020
        %v4056 = vadd.f32 %v4055, %v4021
        %v4057 = vadd.f32 %v4056, %v4022
        %v4058 = vadd.f32 %v4057, %v4023
        %v4059 = vadd.f32 %v4058, %v4024
        %v4060 = vadd.f32 %v4059, %v4025
        %v4061 = vadd.f32 %v4060, %v4026
        %v4062 = vadd.f32 %v4061, %v4027
        %v4063 = vadd.f32 %v4062, %v4028
        %v4064 = vadd.f32 %v4063, %v4029
        %v4065 = vadd.f32 %v4064, %v4030
        %v4066 = vadd.f32 %v4065, %v4031
        %v4067 = vadd.f32 %v4066, %v4032
        %v4068 = vadd.f32 %v4067, %v4033
        %v4069 = vadd.f32 %v4068, %v4034
        %v4070 = vadd.f32 %v4069, %v4035
        %v4071 = vadd.f32 %v4070, %v4036
        %v4072 = vadd.f32 %v4071, %v4037
        %v4073 = vadd.f32 %v4072, %v4038
        %v4074 = vadd.f32 %v4073, %v4039
        %v4075 = vadd.f32 %v4074, %v4040
        %v4076 = vadd.f32 %v4075, %v4041
        %v4077 = vadd.f32 %v4076, %v4042
        %v4078 = vadd.f32 %v4077, %v4043
        %v4079 = vadd.f32 %v4078, %v4044
        %v4080 = vadd.f32 %v4079, %v4045
        %v4081 = vadd.f32 %v4080, %v4046
        %v4082 = vadd.f32 %v4081, %v4047
        %v4083 = vadd.f32 %v4082, %v4048
        %v4084 = vadd.f32 %v4083, %v4049
        %v4085 = vadd.f32 %v4084, %v4050
        %v4086 = vadd.f32 %v4085, %v4051
        %v4087 = vadd.f32 %v4086, %v4052
        %v4088 = vrot.slane %v4087, 4
        %v4089 = vadd.f32 %v4087, %v4088
        %v4090 = vrot.slane %v4089, 2
        %v4091 = vadd.f32 %v4089, %v4090
        %v4092 = vrot.slane %v4091, 1
        %v4093 = vadd.f32 %v4091, %v4092
        %4094 = vst [vmem:[%s264] sm:$0x1] %v4093
        %v4095 = vpack.c.bf16 %v3940, %v3939
        %v4096 = vpack.c.bf16 %v3942, %v3941
        %v4097 = vpack.c.bf16 %v3944, %v3943
        %v4098 = vpack.c.bf16 %v3946, %v3945
        %v4099 = vpack.c.bf16 %v3948, %v3947
        %v4100 = vpack.c.bf16 %v3950, %v3949
        %v4101 = vpack.c.bf16 %v3952, %v3951
        %v4102 = vpack.c.bf16 %v3954, %v3953
        %v4103 = vpack.c.bf16 %v3956, %v3955
        %v4104 = vpack.c.bf16 %v3958, %v3957
        %v4105 = vpack.c.bf16 %v3960, %v3959
        %v4106 = vpack.c.bf16 %v3962, %v3961
        %v4107 = vpack.c.bf16 %v3964, %v3963
        %v4108 = vpack.c.bf16 %v3966, %v3965
        %v4109 = vpack.c.bf16 %v3968, %v3967
        %v4110 = vpack.c.bf16 %v3970, %v3969
        %v4111 = vpack.c.bf16 %v3972, %v3971
        %v4112 = vpack.c.bf16 %v3974, %v3973
        %v4131 = vunpack.c.l.b16 %v4095
        %v4132 = vunpack.c.h.b16 %v4095
        %v4133 = vunpack.c.l.b16 %v4096
        %v4134 = vunpack.c.h.b16 %v4096
        %v4135 = vunpack.c.l.b16 %v4097
        %v4136 = vunpack.c.h.b16 %v4097
        %v4137 = vunpack.c.l.b16 %v4098
        %v4138 = vunpack.c.h.b16 %v4098
        %v4139 = vunpack.c.l.b16 %v4099
        %v4140 = vunpack.c.h.b16 %v4099
        %v4141 = vunpack.c.l.b16 %v4100
        %v4142 = vunpack.c.h.b16 %v4100
        %v4143 = vunpack.c.l.b16 %v4101
        %v4144 = vunpack.c.h.b16 %v4101
        %v4145 = vunpack.c.l.b16 %v4102
        %v4146 = vunpack.c.h.b16 %v4102
        %v4147 = vunpack.c.l.b16 %v4103
        %v4148 = vunpack.c.h.b16 %v4103
        %v4149 = vunpack.c.l.b16 %v4104
        %v4150 = vunpack.c.h.b16 %v4104
        %v4151 = vunpack.c.l.b16 %v4105
        %v4152 = vunpack.c.h.b16 %v4105
        %v4153 = vunpack.c.l.b16 %v4106
        %v4154 = vunpack.c.h.b16 %v4106
        %v4155 = vunpack.c.l.b16 %v4107
        %v4156 = vunpack.c.h.b16 %v4107
        %v4157 = vunpack.c.l.b16 %v4108
        %v4158 = vunpack.c.h.b16 %v4108
        %v4159 = vunpack.c.l.b16 %v4109
        %v4160 = vunpack.c.h.b16 %v4109
        %v4161 = vunpack.c.l.b16 %v4110
        %v4162 = vunpack.c.h.b16 %v4110
        %v4163 = vunpack.c.l.b16 %v4111
        %v4164 = vunpack.c.h.b16 %v4111
        %v4165 = vunpack.c.l.b16 %v4112
        %v4166 = vunpack.c.h.b16 %v4112
        %v4167 = vpack.c.b16 %v4131, %v4131
        %v4168 = vpack.c.b16 %v4132, %v4132
        %v4169 = vpack.c.b16 %v4133, %v4133
        %v4170 = vpack.c.b16 %v4134, %v4134
        %v4171 = vpack.c.b16 %v4135, %v4135
        %v4172 = vpack.c.b16 %v4136, %v4136
        %v4173 = vpack.c.b16 %v4137, %v4137
        %v4174 = vpack.c.b16 %v4138, %v4138
        %v4175 = vpack.c.b16 %v4139, %v4139
        %v4176 = vpack.c.b16 %v4140, %v4140
        %v4177 = vpack.c.b16 %v4141, %v4141
        %v4178 = vpack.c.b16 %v4142, %v4142
        %v4179 = vpack.c.b16 %v4143, %v4143
        %v4180 = vpack.c.b16 %v4144, %v4144
        %v4181 = vpack.c.b16 %v4145, %v4145
        %v4182 = vpack.c.b16 %v4146, %v4146
        %v4183 = vpack.c.b16 %v4147, %v4147
        %v4184 = vpack.c.b16 %v4148, %v4148
        %v4185 = vpack.c.b16 %v4149, %v4149
        %v4186 = vpack.c.b16 %v4150, %v4150
        %v4187 = vpack.c.b16 %v4151, %v4151
        %v4188 = vpack.c.b16 %v4152, %v4152
        %v4189 = vpack.c.b16 %v4153, %v4153
        %v4190 = vpack.c.b16 %v4154, %v4154
        %v4191 = vpack.c.b16 %v4155, %v4155
        %v4192 = vpack.c.b16 %v4156, %v4156
        %v4193 = vpack.c.b16 %v4157, %v4157
        %v4194 = vpack.c.b16 %v4158, %v4158
        %v4195 = vpack.c.b16 %v4159, %v4159
        %v4196 = vpack.c.b16 %v4160, %v4160
        %v4197 = vpack.c.b16 %v4161, %v4161
        %v4198 = vpack.c.b16 %v4162, %v4162
        %v4199 = vpack.c.b16 %v4163, %v4163
        %v4200 = vpack.c.b16 %v4164, %v4164
        %v4201 = vpack.c.b16 %v4165, %v4165
        %v4202 = vpack.c.b16 %v4166, %v4166
        %4239 = vst [vmem:[%s252] sm:$0xf] %v4167
        %4240 = vst [vmem:[%s252 + $0x4] sm:$0xf] %v4168
        %4241 = vst [vmem:[%s252 + $0x8] sm:$0xf] %v4169
        %4242 = vst [vmem:[%s252 + $0xc] sm:$0xf] %v4170
        %4243 = vst [vmem:[%s252 + $0x10] sm:$0xf] %v4171
        %4244 = vst [vmem:[%s252 + $0x14] sm:$0xf] %v4172
        %4245 = vst [vmem:[%s252 + $0x18] sm:$0xf] %v4173
        %4246 = vst [vmem:[%s252 + $0x1c] sm:$0xf] %v4174
        %4247 = vst [vmem:[%s252 + $0x20] sm:$0xf] %v4175
        %4248 = vst [vmem:[%s252 + $0x24] sm:$0xf] %v4176
        %4249 = vst [vmem:[%s252 + $0x28] sm:$0xf] %v4177
        %4250 = vst [vmem:[%s252 + $0x2c] sm:$0xf] %v4178
        %4251 = vst [vmem:[%s252 + $0x30] sm:$0xf] %v4179
        %4252 = vst [vmem:[%s252 + $0x34] sm:$0xf] %v4180
        %4253 = vst [vmem:[%s252 + $0x38] sm:$0xf] %v4181
        %4254 = vst [vmem:[%s252 + $0x3c] sm:$0xf] %v4182
        %4255 = vst [vmem:[%s252 + $0x40] sm:$0xf] %v4183
        %4256 = vst [vmem:[%s252 + $0x44] sm:$0xf] %v4184
        %4257 = vst [vmem:[%s252 + $0x48] sm:$0xf] %v4185
        %4258 = vst [vmem:[%s252 + $0x4c] sm:$0xf] %v4186
        %4259 = vst [vmem:[%s252 + $0x50] sm:$0xf] %v4187
        %4260 = vst [vmem:[%s252 + $0x54] sm:$0xf] %v4188
        %4261 = vst [vmem:[%s252 + $0x58] sm:$0xf] %v4189
        %4262 = vst [vmem:[%s252 + $0x5c] sm:$0xf] %v4190
        %4263 = vst [vmem:[%s252 + $0x60] sm:$0xf] %v4191
        %4264 = vst [vmem:[%s252 + $0x64] sm:$0xf] %v4192
        %4265 = vst [vmem:[%s252 + $0x68] sm:$0xf] %v4193
        %4266 = vst [vmem:[%s252 + $0x6c] sm:$0xf] %v4194
        %4267 = vst [vmem:[%s252 + $0x70] sm:$0xf] %v4195
        %4268 = vst [vmem:[%s252 + $0x74] sm:$0xf] %v4196
        %4269 = vst [vmem:[%s252 + $0x78] sm:$0xf] %v4197
        %4270 = vst [vmem:[%s252 + $0x7c] sm:$0xf] %v4198
        %4271 = vst [vmem:[%s252 + $0x80] sm:$0xf] %v4199
        %4272 = vst [vmem:[%s252 + $0x84] sm:$0xf] %v4200
        %4273 = vst [vmem:[%s252 + $0x88] sm:$0xf] %v4201
        %4274 = vst [vmem:[%s252 + $0x8c] sm:$0xf] %v4202
        %s4275 = sand.u32 %s118, 1
        %s4276 = scalar_lea.sflag [#allocation3], %s4275
        %s4277 = sand.u32 %s118, 1
        %s4278 = smul.addr %s4277, 144
        %s4279 = scalar_lea.vmem [#allocation2], %s4278
        %s4280 = sand.u32 %s23, 1
        %s4281 = scalar_lea.sflag [#allocation5], %s4280
        %s4282 = sand.u32 %s146, 1
        %s4283 = scalar_lea.vmem [#allocation4], %s4282
        %s4284 = sand.u32 %s23, 1
        %s4285 = scalar_lea.sflag [#allocation5], %s4284
        %s4286 = sand.u32 %s174, 1
        %s4287 = scalar_lea.vmem [#allocation6], %s4286
        // Predicated region
        $region33: #{tpu_custom_call.1} parent=31 // pred_check
          %p4288 = pneg %p128
        $region34: #{tpu_custom_call.1} parent=31 // pred_check_branch
          %4290 = sbr.rel (%p4288) target = $region36
        $region35: #{tpu_custom_call.1} parent=31 // pred_region
          %s4292 = ssub.s32 2304, 2304
          %4293 = vsyncadd %s4276, %s4292
          %s4294 = smul.addr %s27, 36
          %s4295 = sadd.s32 %s28, %s4294
          %s4296 = smul.addr %s4295, 64
          %s4297 = scalar_lea.hbm %s3, %s4296
          %s4298 = sshll.u32 %s4279, 4
          %s4299 = int_to_ptr.vmem [resolvable:$true] %s4298
          %4304 = dma.vmem_to_hbm [thread:$0]  %s4299, 2304, %s4297, %s4276, 64, 64, 4
        $region36: #{tpu_custom_call.1} parent=31 // pred_fallthru
          _
        // Predicated region
        $region37: #{tpu_custom_call.1} parent=31 // pred_check
          %p4305 = pneg %p156
        $region38: #{tpu_custom_call.1} parent=31 // pred_check_branch
          %4307 = sbr.rel (%p4305) target = $region40
        $region39: #{tpu_custom_call.1} parent=31 // pred_region
          %s4309 = ssub.s32 16, 16
          %4310 = vsyncadd %s4281, %s4309
          %s4311 = sadd.s32 %s28, %s27
          %s4312 = smul.addr %s4311, 16
          %s4313 = scalar_lea.hbm %s4, %s4312
          %s4315 = sshll.u32 %s4283, 4
          %s4316 = int_to_ptr.vmem [resolvable:$true] %s4315
          %4318 = dma.vmem_to_hbm [thread:$0]  %s4316, 16, %s4313, %s4281
        $region40: #{tpu_custom_call.1} parent=31 // pred_fallthru
          _
        // Predicated region
        $region41: #{tpu_custom_call.1} parent=31 // pred_check
          %p4319 = pneg %p184
        $region42: #{tpu_custom_call.1} parent=31 // pred_check_branch
          %4321 = sbr.rel (%p4319) target = $region44
        $region43: #{tpu_custom_call.1} parent=31 // pred_region
          %s4323 = ssub.s32 16, 16
          %4324 = vsyncadd %s4285, %s4323
          %s4325 = sadd.s32 %s28, %s27
          %s4326 = smul.addr %s4325, 16
          %s4327 = scalar_lea.hbm %s5, %s4326
          %s4329 = sshll.u32 %s4287, 4
          %s4330 = int_to_ptr.vmem [resolvable:$true] %s4329
          %4332 = dma.vmem_to_hbm [thread:$0]  %s4330, 16, %s4327, %s4285
        $region44: #{tpu_custom_call.1} parent=31 // pred_fallthru
          _
      $region32: #{tpu_custom_call.1} parent=5 // pred_fallthru
        _
      %p4333 = scmp.le.s32.totalorder 2, %s18
      // Predicated region
      $region45: #{tpu_custom_call.1} parent=5 // pred_check
        %p4334 = pneg %p4333
      $region46: #{tpu_custom_call.1} parent=5 // pred_check_branch
        %4336 = sbr.rel (%p4334) target = $region48
      $region47: #{tpu_custom_call.1} parent=5 // pred_region
        %s4337 = ssub.s32 %s18, 2
        // Predicated region
        $region49: #{tpu_custom_call.1} parent=47 // pred_check
          %p4338 = pneg %p134
        $region50: #{tpu_custom_call.1} parent=47 // pred_check_branch
          %4340 = sbr.rel (%p4338) target = $region52
        $region51: #{tpu_custom_call.1} parent=47 // pred_region
          %s4341 = sand.u32 %s119, 1
          %s4342 = scalar_lea.sflag [#allocation3], %s4341
          %s4343 = sand.u32 %s119, 1
          %s4344 = smul.addr %s4343, 144
          %s4345 = scalar_lea.vmem [#allocation2], %s4344
          %4346 = dma.done %s4342, 2304
        $region52: #{tpu_custom_call.1} parent=47 // pred_fallthru
          _
        // Predicated region
        $region53: #{tpu_custom_call.1} parent=47 // pred_check
          %p4347 = pneg %p162
        $region54: #{tpu_custom_call.1} parent=47 // pred_check_branch
          %4349 = sbr.rel (%p4347) target = $region56
        $region55: #{tpu_custom_call.1} parent=47 // pred_region
          %s4350 = sand.u32 %s24, 1
          %s4351 = scalar_lea.sflag [#allocation5], %s4350
          %s4352 = sand.u32 %s147, 1
          %s4353 = scalar_lea.vmem [#allocation4], %s4352
          %4354 = dma.done %s4351, 16
        $region56: #{tpu_custom_call.1} parent=47 // pred_fallthru
          _
        // Predicated region
        $region57: #{tpu_custom_call.1} parent=47 // pred_check
          %p4355 = pneg %p190
        $region58: #{tpu_custom_call.1} parent=47 // pred_check_branch
          %4357 = sbr.rel (%p4355) target = $region60
        $region59: #{tpu_custom_call.1} parent=47 // pred_region
          %s4358 = sand.u32 %s24, 1
          %s4359 = scalar_lea.sflag [#allocation5], %s4358
          %s4360 = sand.u32 %s175, 1
          %s4361 = scalar_lea.vmem [#allocation6], %s4360
          %4362 = dma.done %s4359, 16
        $region60: #{tpu_custom_call.1} parent=47 // pred_fallthru
          _
      $region48: #{tpu_custom_call.1} parent=5 // pred_fallthru
        _
    $region6: #{tpu_custom_call.1} parent=1 // loop_footer
      %s22 = sadd.s32 1, %s18
    $region7: #{tpu_custom_call.1} parent=1 // loop_footer_branch
      %17 = sbr.rel target = $region3
    $region8: #{tpu_custom_call.1} parent=1 // loop_exit
      _
    %4363 = vsyncpa [#allocation3], 1
    %s4364 = scalar_lea.sflag [#allocation3], 1
    %4365 = vsyncpa %s4364, 1
    %4366 = vsyncpa [#allocation5], 1
    %s4367 = scalar_lea.sflag [#allocation5], 1
    %4368 = vsyncpa %s4367, 1

</llo_original>
